<compile_context>
chip_gen: v7x
topology: tpu7x:2x2x1
jax: 0.10.0
libtpu: 0.0.40
codegen_flags: <defaults>
</compile_context>

<pallas_src>
import functools
import math

import jax
import jax.numpy as jnp
from jax.experimental import pallas as pl
from jax.experimental.pallas import tpu as pltpu


# ---------------------- kernel 1: embed / seed ------------------------------
# x0[b, 0]   = cls_token                      (row 0 of seq_pad is zeros,
# x0[b, 1:]  = seq[b] @ w_in + b_in + pe       row 0 of pecls is cls - b_in)

def _embed_kernel(seq_ref, w_in_ref, b_in_ref, pecls_ref, x0_ref, *, bb):
    T, E = pecls_ref.shape
    for b in range(bb):
        proj = jnp.dot(seq_ref[b].astype(jnp.bfloat16), w_in_ref[...],
                       preferred_element_type=jnp.float32)
        x0_ref[pl.ds(b * T, T), :] = proj + b_in_ref[...] + pecls_ref[...]


# ---------------------- kernel 2: fused encoder stack ------------------------

def _encoder_kernel(x0_ref, wqkv_ref, bqkv_ref, wo_ref, bo_ref,
                    w1_ref, b1_ref, w2_ref, b2_ref,
                    ln1g_ref, ln1b_ref, ln2g_ref, ln2b_ref,
                    out_ref, x_sc, *, bb, n_heads, eps):
    layer = pl.program_id(1)
    n_layers = pl.num_programs(1)
    M, E = x_sc.shape                       # M = bb * T
    T = M // bb
    Dh = E // n_heads
    bf16 = jnp.bfloat16

    # Seed the resident activation once per batch block.
    @pl.when(layer == 0)
    def _():
        x_sc[...] = x0_ref[...]

    x = x_sc[...]                           # (M, E) f32, residual stream

    # ---- self-attention: one fat QKV matmul over the whole batch block ------
    # (1/sqrt(Dh) is already folded into the Q columns of wqkv / bqkv)
    qkv = jnp.dot(x.astype(bf16), wqkv_ref[0],
                  preferred_element_type=jnp.float32) + bqkv_ref[0]   # (M, 3E)

    attn_rows = []
    for b in range(bb):                     # small per-batch loop: (T,T) scores
        r0 = b * T
        heads = []
        for h in range(n_heads):
            qh = qkv[r0:r0 + T, h * Dh:(h + 1) * Dh]
            kh = qkv[r0:r0 + T, E + h * Dh:E + (h + 1) * Dh]
            vh = qkv[r0:r0 + T, 2 * E + h * Dh:2 * E + (h + 1) * Dh]
            s = jax.lax.dot_general(qh.astype(bf16), kh.astype(bf16),
                                    (((1,), (1,)), ((), ())),
                                    preferred_element_type=jnp.float32)
            m = jnp.max(s, axis=-1, keepdims=True)
            p = jnp.exp(s - m)
            p = p / jnp.sum(p, axis=-1, keepdims=True)          # exact recip
            heads.append(jnp.dot(p.astype(bf16), vh.astype(bf16),
                                 preferred_element_type=jnp.float32))
        attn_rows.append(jnp.concatenate(heads, axis=-1))        # (T, E)
    attn = jnp.concatenate(attn_rows, axis=0)                    # (M, E), regs
    a = jnp.dot(attn.astype(bf16), wo_ref[0],
                preferred_element_type=jnp.float32) + bo_ref[0]

    # ---- residual add + LayerNorm (var = E[y^2] - mu^2: independent reduces) -
    def _ln(y, g, b):
        mu = jnp.mean(y, axis=-1, keepdims=True)
        var = jnp.mean(y * y, axis=-1, keepdims=True) - mu * mu
        return (y - mu) * jax.lax.rsqrt(var + eps) * g + b

    x1 = _ln(x + a, ln1g_ref[0], ln1b_ref[0])

    # ---- feed-forward (ReLU) on the fat (M, *) dim ---------------------------
    h = jnp.dot(x1.astype(bf16), w1_ref[0],
                preferred_element_type=jnp.float32) + b1_ref[0]
    h = jnp.maximum(h, 0.0)
    f = jnp.dot(h.astype(bf16), w2_ref[0],
                preferred_element_type=jnp.float32) + b2_ref[0]

    x2 = _ln(x1 + f, ln2g_ref[0], ln2b_ref[0])
    x_sc[...] = x2                                              # stays in VMEM

    # ---- emit the BB CLS rows once, after the last layer ---------------------
    # (out block index must stay constant across the layer axis: resident out)
    @pl.when(layer == n_layers - 1)
    def _():
        cls = jnp.concatenate([x2[b * T:b * T + 1, :] for b in range(bb)],
                              axis=0)                           # (bb, E)
        out_ref[0] = cls

    # TODO(synk): dropout layers (p=0.1) are inference-mode identity here.


# --------------------------- parameters / glue -------------------------------

def sinusoidal_pe(max_len, d_model):
    pos = jnp.arange(max_len, dtype=jnp.float32)[:, None]
    div = jnp.exp(jnp.arange(0, d_model, 2, dtype=jnp.float32)
                  * (-math.log(10000.0) / d_model))
    pe = jnp.zeros((max_len, d_model), dtype=jnp.float32)
    pe = pe.at[:, 0::2].set(jnp.sin(pos * div))
    pe = pe.at[:, 1::2].set(jnp.cos(pos * div))
    return pe


def init_params(key, input_dim, embed_dim, n_layers, n_heads, max_len=1000):
    ff_dim = embed_dim * 4
    std = 0.02
    E, F, L = embed_dim, ff_dim, n_layers
    keys = jax.random.split(key, 12)

    def w(k, shape):      # matmul weights stored bf16 (MXU-native)
        return (std * jax.random.normal(k, shape, dtype=jnp.float32)
                ).astype(jnp.bfloat16)

    def b(k, shape):      # biases / LN params stay f32
        return std * jax.random.normal(k, shape, dtype=jnp.float32)

    return {
        "w_in": w(keys[0], (input_dim, E)),
        "b_in": b(keys[1], (E,)),
        "cls_token": b(keys[2], (1, 1, E)),
        "pe": sinusoidal_pe(max_len, E),
        "wqkv": w(keys[3], (L, E, 3 * E)),
        "bqkv": b(keys[4], (L, 1, 3 * E)),
        "wo": w(keys[5], (L, E, E)),
        "bo": b(keys[6], (L, 1, E)),
        "w1": w(keys[7], (L, E, F)),
        "b1": b(keys[8], (L, 1, F)),
        "w2": w(keys[9], (L, F, E)),
        "b2": b(keys[10], (L, 1, E)),
        "ln1_g": jnp.ones((L, 1, E), jnp.float32),
        "ln1_b": b(keys[11], (L, 1, E)),
        "ln2_g": jnp.ones((L, 1, E), jnp.float32),
        "ln2_b": jnp.zeros((L, 1, E), jnp.float32),
    }


def prepare_kernel_params(params, n_heads, seq_len):
    """One-time transform of module params into kernel-ready form:
    bf16 matmul weights, 1/sqrt(Dh) folded into Q columns, combined pe+cls table."""
    E = params["w_in"].shape[1]
    Dh = E // n_heads
    scale = 1.0 / math.sqrt(Dh)
    qscale = jnp.concatenate([jnp.full((E,), scale, jnp.float32),
                              jnp.ones((2 * E,), jnp.float32)])
    pecls = jnp.concatenate(
        [params["cls_token"].reshape(1, E) - params["b_in"].reshape(1, E),
         params["pe"][:seq_len]], axis=0).astype(jnp.float32)        # (T, E)
    return {
        "w_in": params["w_in"].astype(jnp.bfloat16),
        "b_in": params["b_in"].reshape(1, E).astype(jnp.float32),
        "pecls": pecls,
        "wqkv": (params["wqkv"].astype(jnp.float32) * qscale).astype(jnp.bfloat16),
        "bqkv": params["bqkv"].astype(jnp.float32) * qscale,
        "wo": params["wo"].astype(jnp.bfloat16),
        "bo": params["bo"].astype(jnp.float32),
        "w1": params["w1"].astype(jnp.bfloat16),
        "b1": params["b1"].astype(jnp.float32),
        "w2": params["w2"].astype(jnp.bfloat16),
        "b2": params["b2"].astype(jnp.float32),
        "ln1_g": params["ln1_g"], "ln1_b": params["ln1_b"],
        "ln2_g": params["ln2_g"], "ln2_b": params["ln2_b"],
    }


def _vmem_limit_bytes():
    try:
        cap = int(pltpu.get_tpu_info().vmem_capacity_bytes)
        return min((cap * 3) // 4, 100 * 1024 * 1024)
    except Exception:
        return None


def base_encoder_forward(seq, kp, n_heads, block_b=8):
    B, S, In = seq.shape
    E = kp["w_in"].shape[1]
    F = kp["w1"].shape[2]
    L = kp["wqkv"].shape[0]
    T = S + 1
    eps = 1e-5

    BB = min(block_b, B)
    while B % BB:
        BB -= 1

    vmem_limit = _vmem_limit_bytes()

    # --- stage 1: embed + PE + CLS prepend -> (B*T, E) activation in HBM -----
    seq_pad = jnp.pad(seq, ((0, 0), (1, 0), (0, 0)))            # row 0 = zeros
    x0 = pl.pallas_call(
        functools.partial(_embed_kernel, bb=BB),
        out_shape=jax.ShapeDtypeStruct((B * T, E), jnp.float32),
        grid=(B // BB,),
        in_specs=[
            pl.BlockSpec((BB, T, In), lambda i: (i, 0, 0)),
            pl.BlockSpec((In, E), lambda i: (0, 0)),
            pl.BlockSpec((1, E), lambda i: (0, 0)),
            pl.BlockSpec((T, E), lambda i: (0, 0)),
        ],
        out_specs=pl.BlockSpec((BB * T, E), lambda i: (i, 0)),
        compiler_params=pltpu.CompilerParams(
            dimension_semantics=("parallel",)),
    )(seq_pad, kp["w_in"], kp["b_in"], kp["pecls"])

    # --- stage 2: fused n_layers transformer stack ----------------------------
    kernel = functools.partial(_encoder_kernel, bb=BB, n_heads=n_heads, eps=eps)
    lw = lambda i, l: (l, 0, 0)   # per-layer weight blocks (pipeline next layer)

    out = pl.pallas_call(
        kernel,
        out_shape=jax.ShapeDtypeStruct((B // BB, BB, E), jnp.float32),
        grid=(B // BB, L),
        in_specs=[
            pl.BlockSpec((BB * T, E), lambda i, l: (i, 0)),     # embedded acts
            pl.BlockSpec((1, E, 3 * E), lw),                    # wqkv (bf16)
            pl.BlockSpec((1, 1, 3 * E), lw),                    # bqkv
            pl.BlockSpec((1, E, E), lw),                        # wo   (bf16)
            pl.BlockSpec((1, 1, E), lw),                        # bo
            pl.BlockSpec((1, E, F), lw),                        # w1   (bf16)
            pl.BlockSpec((1, 1, F), lw),                        # b1
            pl.BlockSpec((1, F, E), lw),                        # w2   (bf16)
            pl.BlockSpec((1, 1, E), lw),                        # b2
            pl.BlockSpec((1, 1, E), lw),                        # ln1_g
            pl.BlockSpec((1, 1, E), lw),                        # ln1_b
            pl.BlockSpec((1, 1, E), lw),                        # ln2_g
            pl.BlockSpec((1, 1, E), lw),                        # ln2_b
        ],
        out_specs=pl.BlockSpec((1, BB, E), lambda i, l: (i, 0, 0)),
        scratch_shapes=[pltpu.VMEM((BB * T, E), jnp.float32)],  # resident acts
        compiler_params=pltpu.CompilerParams(
            dimension_semantics=("parallel", "arbitrary"),
            vmem_limit_bytes=vmem_limit),
    )(x0, kp["wqkv"], kp["bqkv"], kp["wo"], kp["bo"],
      kp["w1"], kp["b1"], kp["w2"], kp["b2"],
      kp["ln1_g"], kp["ln1_b"], kp["ln2_g"], kp["ln2_b"])

    return out.reshape(B, E)                                    # (B, E) cls_out


# --------------------------- pure-JAX reference -------------------------------

def _ln_ref(y, g, b, eps=1e-5):
    mu = jnp.mean(y, axis=-1, keepdims=True)
    var = jnp.mean(jnp.square(y - mu), axis=-1, keepdims=True)
    return (y - mu) * jax.lax.rsqrt(var + eps) * g + b


def base_encoder_reference(seq, params, n_heads):
    B, S, _ = seq.shape
    E = params["w_in"].shape[1]
    Dh = E // n_heads
    f32 = lambda a: a.astype(jnp.float32)
    x = seq @ f32(params["w_in"]) + params["b_in"] + params["pe"][:S]
    cls = jnp.broadcast_to(params["cls_token"], (B, 1, E))
    x = jnp.concatenate([cls, x], axis=1)
    T = S + 1
    for l in range(params["wqkv"].shape[0]):
        qkv = x @ f32(params["wqkv"][l]) + params["bqkv"][l]
        q, k, v = qkv[..., :E], qkv[..., E:2 * E], qkv[..., 2 * E:]
        q = q.reshape(B, T, n_heads, Dh).transpose(0, 2, 1, 3)
        k = k.reshape(B, T, n_heads, Dh).transpose(0, 2, 1, 3)
        v = v.reshape(B, T, n_heads, Dh).transpose(0, 2, 1, 3)
        s = jnp.einsum("bhtd,bhsd->bhts", q, k) / math.sqrt(Dh)
        p = jax.nn.softmax(s, axis=-1)
        a = jnp.einsum("bhts,bhsd->bhtd", p, v).transpose(0, 2, 1, 3).reshape(B, T, E)
        a = a @ f32(params["wo"][l]) + params["bo"][l]
        x = _ln_ref(x + a, params["ln1_g"][l], params["ln1_b"][l])
        h = jax.nn.relu(x @ f32(params["w1"][l]) + params["b1"][l])
        f = h @ f32(params["w2"][l]) + params["b2"][l]
        x = _ln_ref(x + f, params["ln2_g"][l], params["ln2_b"][l])
    return x[:, 0, :]


# ------------------------------- main ----------------------------------------

if __name__ == "__main__":
    B, S, input_dim = 8, 7, 16        # T = S + 1 = 8 tokens after CLS
    embed_dim, n_layers, n_heads = 32, 2, 4
    block_b = 4                        # 2 batch blocks -> both v7x TCs busy

    key = jax.random.PRNGKey(0)
    k_param, k_data = jax.random.split(key)
    params = init_params(k_param, input_dim, embed_dim, n_layers, n_heads)
    kparams = prepare_kernel_params(params, n_heads, S)   # one-time transform
    seq = jax.random.normal(k_data, (B, S, input_dim), dtype=jnp.float32)

    fwd = jax.jit(functools.partial(base_encoder_forward,
                                    n_heads=n_heads, block_b=block_b))
    out = fwd(seq, kparams)
    jax.block_until_ready(out)
    assert out.shape == (B, embed_dim)

    ref = base_encoder_reference(seq, params, n_heads)
    jax.block_until_ready(ref)
    assert bool(jnp.all(jnp.isfinite(out)))
    # bf16 matmul operands (f32 accumulate) perturb low-order bits only
    assert bool(jnp.allclose(out, ref, atol=2e-2, rtol=2e-2)), \
        f"max abs err {float(jnp.max(jnp.abs(out - ref)))}"

    print("KERNEL_OK")
</pallas_src>

<mosaic_0001>
module attributes {stable_mosaic.version = 11 : i64} {
  func.func @_embed_kernel(%arg0: i32, %arg1: memref<4x8x16xf32, #tpu.memory_space<vmem>>, %arg2: memref<16x32xbf16, #tpu.memory_space<vmem>>, %arg3: memref<1x32xf32, #tpu.memory_space<vmem>>, %arg4: memref<8x32xf32, #tpu.memory_space<vmem>>, %arg5: memref<32x32xf32, #tpu.memory_space<vmem>>) attributes {dimension_semantics = [#tpu.dimension_semantics<parallel>], iteration_bounds = array<i64: 2>, scalar_prefetch = 0 : i64, scratch_operands = 0 : i64, tpu.core_type = #tpu.core_type<tc>, window_params = [{transform_indices = @transform_0, window_bounds = array<i64: 4, 8, 16>}, {pipeline_mode = #tpu.pipeline_mode<synchronous>, transform_indices = @transform_1, window_bounds = array<i64: 16, 32>}, {pipeline_mode = #tpu.pipeline_mode<synchronous>, transform_indices = @transform_2, window_bounds = array<i64: 1, 32>}, {pipeline_mode = #tpu.pipeline_mode<synchronous>, transform_indices = @transform_3, window_bounds = array<i64: 8, 32>}, {transform_indices = @transform_4, window_bounds = array<i64: 32, 32>}]} {
    %c0 = arith.constant 0 : index
    %c0_0 = arith.constant 0 : index
    %c0_1 = arith.constant 0 : index
    %0 = vector.load %arg1[%c0, %c0_0, %c0_1] : memref<4x8x16xf32, #tpu.memory_space<vmem>>, vector<1x8x16xf32>
    %1 = vector.shape_cast %0 : vector<1x8x16xf32> to vector<8x16xf32>
    %2 = arith.truncf %1 : vector<8x16xf32> to vector<8x16xbf16>
    %c0_2 = arith.constant 0 : index
    %c0_3 = arith.constant 0 : index
    %3 = vector.load %arg2[%c0_2, %c0_3] : memref<16x32xbf16, #tpu.memory_space<vmem>>, vector<16x32xbf16>
    %cst = arith.constant dense<0.000000e+00> : vector<8x32xf32>
    %4 = tpu.matmul %2, %3, %cst {dimension_numbers = #tpu.dot_dimension_numbers<[1], [0], [0], [1], [0, 0, 1, 1], [], []>} : vector<8x16xbf16>, vector<16x32xbf16>, vector<8x32xf32> -> vector<8x32xf32>
    %c0_4 = arith.constant 0 : index
    %c0_5 = arith.constant 0 : index
    %5 = vector.load %arg3[%c0_4, %c0_5] : memref<1x32xf32, #tpu.memory_space<vmem>>, vector<1x32xf32>
    %6 = vector.broadcast %5 : vector<1x32xf32> to vector<8x32xf32>
    %7 = arith.addf %4, %6 : vector<8x32xf32>
    %c0_6 = arith.constant 0 : index
    %c0_7 = arith.constant 0 : index
    %8 = vector.load %arg4[%c0_6, %c0_7] : memref<8x32xf32, #tpu.memory_space<vmem>>, vector<8x32xf32>
    %9 = arith.addf %7, %8 : vector<8x32xf32>
    %c0_8 = arith.constant 0 : index
    %c0_9 = arith.constant 0 : index
    %10 = vector.load %arg5[%c0_8, %c0_9] : memref<32x32xf32, #tpu.memory_space<vmem>>, vector<8x32xf32>
    tpu.vector_store %arg5[%c0_8, %c0_9], %9 {strides = array<i32>} : memref<32x32xf32, #tpu.memory_space<vmem>>, vector<8x32xf32>,
    %c1 = arith.constant 1 : index
    %c0_10 = arith.constant 0 : index
    %c0_11 = arith.constant 0 : index
    %11 = vector.load %arg1[%c1, %c0_10, %c0_11] : memref<4x8x16xf32, #tpu.memory_space<vmem>>, vector<1x8x16xf32>
    %12 = vector.shape_cast %11 : vector<1x8x16xf32> to vector<8x16xf32>
    %13 = arith.truncf %12 : vector<8x16xf32> to vector<8x16xbf16>
    %c0_12 = arith.constant 0 : index
    %c0_13 = arith.constant 0 : index
    %14 = vector.load %arg2[%c0_12, %c0_13] : memref<16x32xbf16, #tpu.memory_space<vmem>>, vector<16x32xbf16>
    %cst_14 = arith.constant dense<0.000000e+00> : vector<8x32xf32>
    %15 = tpu.matmul %13, %14, %cst_14 {dimension_numbers = #tpu.dot_dimension_numbers<[1], [0], [0], [1], [0, 0, 1, 1], [], []>} : vector<8x16xbf16>, vector<16x32xbf16>, vector<8x32xf32> -> vector<8x32xf32>
    %c0_15 = arith.constant 0 : index
    %c0_16 = arith.constant 0 : index
    %16 = vector.load %arg3[%c0_15, %c0_16] : memref<1x32xf32, #tpu.memory_space<vmem>>, vector<1x32xf32>
    %17 = vector.broadcast %16 : vector<1x32xf32> to vector<8x32xf32>
    %18 = arith.addf %15, %17 : vector<8x32xf32>
    %c0_17 = arith.constant 0 : index
    %c0_18 = arith.constant 0 : index
    %19 = vector.load %arg4[%c0_17, %c0_18] : memref<8x32xf32, #tpu.memory_space<vmem>>, vector<8x32xf32>
    %20 = arith.addf %18, %19 : vector<8x32xf32>
    %c8 = arith.constant 8 : index
    %c0_19 = arith.constant 0 : index
    %21 = vector.load %arg5[%c8, %c0_19] : memref<32x32xf32, #tpu.memory_space<vmem>>, vector<8x32xf32>
    tpu.vector_store %arg5[%c8, %c0_19], %20 {strides = array<i32>} : memref<32x32xf32, #tpu.memory_space<vmem>>, vector<8x32xf32>,
    %c2 = arith.constant 2 : index
    %c0_20 = arith.constant 0 : index
    %c0_21 = arith.constant 0 : index
    %22 = vector.load %arg1[%c2, %c0_20, %c0_21] : memref<4x8x16xf32, #tpu.memory_space<vmem>>, vector<1x8x16xf32>
    %23 = vector.shape_cast %22 : vector<1x8x16xf32> to vector<8x16xf32>
    %24 = arith.truncf %23 : vector<8x16xf32> to vector<8x16xbf16>
    %c0_22 = arith.constant 0 : index
    %c0_23 = arith.constant 0 : index
    %25 = vector.load %arg2[%c0_22, %c0_23] : memref<16x32xbf16, #tpu.memory_space<vmem>>, vector<16x32xbf16>
    %cst_24 = arith.constant dense<0.000000e+00> : vector<8x32xf32>
    %26 = tpu.matmul %24, %25, %cst_24 {dimension_numbers = #tpu.dot_dimension_numbers<[1], [0], [0], [1], [0, 0, 1, 1], [], []>} : vector<8x16xbf16>, vector<16x32xbf16>, vector<8x32xf32> -> vector<8x32xf32>
    %c0_25 = arith.constant 0 : index
    %c0_26 = arith.constant 0 : index
    %27 = vector.load %arg3[%c0_25, %c0_26] : memref<1x32xf32, #tpu.memory_space<vmem>>, vector<1x32xf32>
    %28 = vector.broadcast %27 : vector<1x32xf32> to vector<8x32xf32>
    %29 = arith.addf %26, %28 : vector<8x32xf32>
    %c0_27 = arith.constant 0 : index
    %c0_28 = arith.constant 0 : index
    %30 = vector.load %arg4[%c0_27, %c0_28] : memref<8x32xf32, #tpu.memory_space<vmem>>, vector<8x32xf32>
    %31 = arith.addf %29, %30 : vector<8x32xf32>
    %c16 = arith.constant 16 : index
    %c0_29 = arith.constant 0 : index
    %32 = vector.load %arg5[%c16, %c0_29] : memref<32x32xf32, #tpu.memory_space<vmem>>, vector<8x32xf32>
    tpu.vector_store %arg5[%c16, %c0_29], %31 {strides = array<i32>} : memref<32x32xf32, #tpu.memory_space<vmem>>, vector<8x32xf32>,
    %c3 = arith.constant 3 : index
    %c0_30 = arith.constant 0 : index
    %c0_31 = arith.constant 0 : index
    %33 = vector.load %arg1[%c3, %c0_30, %c0_31] : memref<4x8x16xf32, #tpu.memory_space<vmem>>, vector<1x8x16xf32>
    %34 = vector.shape_cast %33 : vector<1x8x16xf32> to vector<8x16xf32>
    %35 = arith.truncf %34 : vector<8x16xf32> to vector<8x16xbf16>
    %c0_32 = arith.constant 0 : index
    %c0_33 = arith.constant 0 : index
    %36 = vector.load %arg2[%c0_32, %c0_33] : memref<16x32xbf16, #tpu.memory_space<vmem>>, vector<16x32xbf16>
    %cst_34 = arith.constant dense<0.000000e+00> : vector<8x32xf32>
    %37 = tpu.matmul %35, %36, %cst_34 {dimension_numbers = #tpu.dot_dimension_numbers<[1], [0], [0], [1], [0, 0, 1, 1], [], []>} : vector<8x16xbf16>, vector<16x32xbf16>, vector<8x32xf32> -> vector<8x32xf32>
    %c0_35 = arith.constant 0 : index
    %c0_36 = arith.constant 0 : index
    %38 = vector.load %arg3[%c0_35, %c0_36] : memref<1x32xf32, #tpu.memory_space<vmem>>, vector<1x32xf32>
    %39 = vector.broadcast %38 : vector<1x32xf32> to vector<8x32xf32>
    %40 = arith.addf %37, %39 : vector<8x32xf32>
    %c0_37 = arith.constant 0 : index
    %c0_38 = arith.constant 0 : index
    %41 = vector.load %arg4[%c0_37, %c0_38] : memref<8x32xf32, #tpu.memory_space<vmem>>, vector<8x32xf32>
    %42 = arith.addf %40, %41 : vector<8x32xf32>
    %c24 = arith.constant 24 : index
    %c0_39 = arith.constant 0 : index
    %43 = vector.load %arg5[%c24, %c0_39] : memref<32x32xf32, #tpu.memory_space<vmem>>, vector<8x32xf32>
    tpu.vector_store %arg5[%c24, %c0_39], %42 {strides = array<i32>} : memref<32x32xf32, #tpu.memory_space<vmem>>, vector<8x32xf32>,
    return
  }
  func.func @transform_0(%arg0: i32) -> (i32, i32, i32) {
    %c0_i32 = arith.constant 0 : i32
    %c0_i32_0 = arith.constant 0 : i32
    %c0_i32_1 = arith.constant 0 : i32
    return %arg0, %c0_i32, %c0_i32_0 : i32, i32, i32
  }
  func.func @transform_1(%arg0: i32) -> (i32, i32) {
    %c0_i32 = arith.constant 0 : i32
    %c0_i32_0 = arith.constant 0 : i32
    %c0_i32_1 = arith.constant 0 : i32
    return %c0_i32, %c0_i32_0 : i32, i32
  }
  func.func @transform_2(%arg0: i32) -> (i32, i32) {
    %c0_i32 = arith.constant 0 : i32
    %c0_i32_0 = arith.constant 0 : i32
    %c0_i32_1 = arith.constant 0 : i32
    return %c0_i32, %c0_i32_0 : i32, i32
  }
  func.func @transform_3(%arg0: i32) -> (i32, i32) {
    %c0_i32 = arith.constant 0 : i32
    %c0_i32_0 = arith.constant 0 : i32
    %c0_i32_1 = arith.constant 0 : i32
    return %c0_i32, %c0_i32_0 : i32, i32
  }
  func.func @transform_4(%arg0: i32) -> (i32, i32) {
    %c0_i32 = arith.constant 0 : i32
    %c0_i32_0 = arith.constant 0 : i32
    return %arg0, %c0_i32 : i32, i32
  }
}

module attributes {stable_mosaic.version = 11 : i64} {
  func.func @_encoder_kernel(%arg0: i32, %arg1: i32, %arg2: memref<32x32xf32, #tpu.memory_space<vmem>>, %arg3: memref<1x32x96xbf16, #tpu.memory_space<vmem>>, %arg4: memref<1x1x96xf32, #tpu.memory_space<vmem>>, %arg5: memref<1x32x32xbf16, #tpu.memory_space<vmem>>, %arg6: memref<1x1x32xf32, #tpu.memory_space<vmem>>, %arg7: memref<1x32x128xbf16, #tpu.memory_space<vmem>>, %arg8: memref<1x1x128xf32, #tpu.memory_space<vmem>>, %arg9: memref<1x128x32xbf16, #tpu.memory_space<vmem>>, %arg10: memref<1x1x32xf32, #tpu.memory_space<vmem>>, %arg11: memref<1x1x32xf32, #tpu.memory_space<vmem>>, %arg12: memref<1x1x32xf32, #tpu.memory_space<vmem>>, %arg13: memref<1x1x32xf32, #tpu.memory_space<vmem>>, %arg14: memref<1x1x32xf32, #tpu.memory_space<vmem>>, %arg15: memref<1x4x32xf32, #tpu.memory_space<vmem>>, %arg16: memref<32x32xf32, #tpu.memory_space<vmem>>) attributes {dimension_semantics = [#tpu.dimension_semantics<parallel>, #tpu.dimension_semantics<arbitrary>], iteration_bounds = array<i64: 2, 2>, scalar_prefetch = 0 : i64, scratch_operands = 1 : i64, tpu.core_type = #tpu.core_type<tc>, window_params = [{transform_indices = @transform_0, window_bounds = array<i64: 32, 32>}, {transform_indices = @transform_1, window_bounds = array<i64: 1, 32, 96>}, {transform_indices = @transform_2, window_bounds = array<i64: 1, 1, 96>}, {transform_indices = @transform_3, window_bounds = array<i64: 1, 32, 32>}, {transform_indices = @transform_4, window_bounds = array<i64: 1, 1, 32>}, {transform_indices = @transform_5, window_bounds = array<i64: 1, 32, 128>}, {transform_indices = @transform_6, window_bounds = array<i64: 1, 1, 128>}, {transform_indices = @transform_7, window_bounds = array<i64: 1, 128, 32>}, {transform_indices = @transform_8, window_bounds = array<i64: 1, 1, 32>}, {transform_indices = @transform_9, window_bounds = array<i64: 1, 1, 32>}, {transform_indices = @transform_10, window_bounds = array<i64: 1, 1, 32>}, {transform_indices = @transform_11, window_bounds = array<i64: 1, 1, 32>}, {transform_indices = @transform_12, window_bounds = array<i64: 1, 1, 32>}, {transform_indices = @transform_13, window_bounds = array<i64: 1, 4, 32>}]} {
    %c0_i32 = arith.constant 0 : i32
    %0 = arith.cmpi eq, %arg1, %c0_i32 : i32
    %1 = arith.extui %0 : i1 to i32
    %c0_i32_0 = arith.constant 0 : i32
    %2 = arith.cmpi ne, %1, %c0_i32_0 : i32
    scf.if %2 {
      %c0_119 = arith.constant 0 : index
      %c0_120 = arith.constant 0 : index
      %389 = vector.load %arg2[%c0_119, %c0_120] : memref<32x32xf32, #tpu.memory_space<vmem>>, vector<32x32xf32>
      %c0_121 = arith.constant 0 : index
      %c0_122 = arith.constant 0 : index
      %390 = vector.load %arg16[%c0_121, %c0_122] : memref<32x32xf32, #tpu.memory_space<vmem>>, vector<32x32xf32>
      tpu.vector_store %arg16[%c0_121, %c0_122], %389 {strides = array<i32>} : memref<32x32xf32, #tpu.memory_space<vmem>>, vector<32x32xf32>,
    } else {
    }
    %c0 = arith.constant 0 : index
    %c0_1 = arith.constant 0 : index
    %3 = vector.load %arg16[%c0, %c0_1] : memref<32x32xf32, #tpu.memory_space<vmem>>, vector<32x32xf32>
    %4 = arith.truncf %3 : vector<32x32xf32> to vector<32x32xbf16>
    %c0_2 = arith.constant 0 : index
    %c0_3 = arith.constant 0 : index
    %c0_4 = arith.constant 0 : index
    %5 = vector.load %arg3[%c0_2, %c0_3, %c0_4] : memref<1x32x96xbf16, #tpu.memory_space<vmem>>, vector<1x32x96xbf16>
    %6 = vector.shape_cast %5 : vector<1x32x96xbf16> to vector<32x96xbf16>
    %cst = arith.constant dense<0.000000e+00> : vector<32x96xf32>
    %7 = tpu.matmul %4, %6, %cst {dimension_numbers = #tpu.dot_dimension_numbers<[1], [0], [0], [1], [0, 0, 1, 1], [], []>} : vector<32x32xbf16>, vector<32x96xbf16>, vector<32x96xf32> -> vector<32x96xf32>
    %c0_5 = arith.constant 0 : index
    %c0_6 = arith.constant 0 : index
    %c0_7 = arith.constant 0 : index
    %8 = vector.load %arg4[%c0_5, %c0_6, %c0_7] : memref<1x1x96xf32, #tpu.memory_space<vmem>>, vector<1x1x96xf32>
    %9 = vector.shape_cast %8 : vector<1x1x96xf32> to vector<1x96xf32>
    %10 = vector.broadcast %9 : vector<1x96xf32> to vector<32x96xf32>
    %11 = arith.addf %7, %10 : vector<32x96xf32>
    %12 = vector.extract_strided_slice %11 {offsets = [0, 0], sizes = [8, 8], strides = [1, 1]} : vector<32x96xf32> to vector<8x8xf32>
    %13 = vector.extract_strided_slice %11 {offsets = [0, 32], sizes = [8, 8], strides = [1, 1]} : vector<32x96xf32> to vector<8x8xf32>
    %14 = vector.extract_strided_slice %11 {offsets = [0, 64], sizes = [8, 8], strides = [1, 1]} : vector<32x96xf32> to vector<8x8xf32>
    %15 = arith.truncf %12 : vector<8x8xf32> to vector<8x8xbf16>
    %16 = arith.truncf %13 : vector<8x8xf32> to vector<8x8xbf16>
    %cst_8 = arith.constant dense<0.000000e+00> : vector<8x8xf32>
    %17 = tpu.matmul %15, %16, %cst_8 {dimension_numbers = #tpu.dot_dimension_numbers<[1], [1], [0], [0], [0, 0, 1, 0], [], []>} : vector<8x8xbf16>, vector<8x8xbf16>, vector<8x8xf32> -> vector<8x8xf32>
    %cst_9 = arith.constant dense<0xFF800000> : vector<8xf32>
    %18 = vector.multi_reduction <maximumf>, %17, %cst_9 [1] : vector<8x8xf32> to vector<8xf32>
    %19 = vector.shape_cast %18 : vector<8xf32> to vector<8x1xf32>
    %20 = vector.broadcast %19 : vector<8x1xf32> to vector<8x8xf32>
    %21 = arith.subf %17, %20 : vector<8x8xf32>
    %22 = math.exp %21 : vector<8x8xf32>
    %cst_10 = arith.constant dense<0.000000e+00> : vector<8xf32>
    %23 = vector.multi_reduction <add>, %22, %cst_10 [1] : vector<8x8xf32> to vector<8xf32>
    %24 = vector.shape_cast %23 : vector<8xf32> to vector<8x1xf32>
    %25 = vector.broadcast %24 : vector<8x1xf32> to vector<8x8xf32>
    %26 = arith.divf %22, %25 : vector<8x8xf32>
    %27 = arith.truncf %26 : vector<8x8xf32> to vector<8x8xbf16>
    %28 = arith.truncf %14 : vector<8x8xf32> to vector<8x8xbf16>
    %cst_11 = arith.constant dense<0.000000e+00> : vector<8x8xf32>
    %29 = tpu.matmul %27, %28, %cst_11 {dimension_numbers = #tpu.dot_dimension_numbers<[1], [0], [0], [1], [0, 0, 1, 1], [], []>} : vector<8x8xbf16>, vector<8x8xbf16>, vector<8x8xf32> -> vector<8x8xf32>
    %30 = vector.extract_strided_slice %11 {offsets = [0, 8], sizes = [8, 8], strides = [1, 1]} : vector<32x96xf32> to vector<8x8xf32>
    %31 = vector.extract_strided_slice %11 {offsets = [0, 40], sizes = [8, 8], strides = [1, 1]} : vector<32x96xf32> to vector<8x8xf32>
    %32 = vector.extract_strided_slice %11 {offsets = [0, 72], sizes = [8, 8], strides = [1, 1]} : vector<32x96xf32> to vector<8x8xf32>
    %33 = arith.truncf %30 : vector<8x8xf32> to vector<8x8xbf16>
    %34 = arith.truncf %31 : vector<8x8xf32> to vector<8x8xbf16>
    %cst_12 = arith.constant dense<0.000000e+00> : vector<8x8xf32>
    %35 = tpu.matmul %33, %34, %cst_12 {dimension_numbers = #tpu.dot_dimension_numbers<[1], [1], [0], [0], [0, 0, 1, 0], [], []>} : vector<8x8xbf16>, vector<8x8xbf16>, vector<8x8xf32> -> vector<8x8xf32>
    %cst_13 = arith.constant dense<0xFF800000> : vector<8xf32>
    %36 = vector.multi_reduction <maximumf>, %35, %cst_13 [1] : vector<8x8xf32> to vector<8xf32>
    %37 = vector.shape_cast %36 : vector<8xf32> to vector<8x1xf32>
    %38 = vector.broadcast %37 : vector<8x1xf32> to vector<8x8xf32>
    %39 = arith.subf %35, %38 : vector<8x8xf32>
    %40 = math.exp %39 : vector<8x8xf32>
    %cst_14 = arith.constant dense<0.000000e+00> : vector<8xf32>
    %41 = vector.multi_reduction <add>, %40, %cst_14 [1] : vector<8x8xf32> to vector<8xf32>
    %42 = vector.shape_cast %41 : vector<8xf32> to vector<8x1xf32>
    %43 = vector.broadcast %42 : vector<8x1xf32> to vector<8x8xf32>
    %44 = arith.divf %40, %43 : vector<8x8xf32>
    %45 = arith.truncf %44 : vector<8x8xf32> to vector<8x8xbf16>
    %46 = arith.truncf %32 : vector<8x8xf32> to vector<8x8xbf16>
    %cst_15 = arith.constant dense<0.000000e+00> : vector<8x8xf32>
    %47 = tpu.matmul %45, %46, %cst_15 {dimension_numbers = #tpu.dot_dimension_numbers<[1], [0], [0], [1], [0, 0, 1, 1], [], []>} : vector<8x8xbf16>, vector<8x8xbf16>, vector<8x8xf32> -> vector<8x8xf32>
    %48 = vector.extract_strided_slice %11 {offsets = [0, 16], sizes = [8, 8], strides = [1, 1]} : vector<32x96xf32> to vector<8x8xf32>
    %49 = vector.extract_strided_slice %11 {offsets = [0, 48], sizes = [8, 8], strides = [1, 1]} : vector<32x96xf32> to vector<8x8xf32>
    %50 = vector.extract_strided_slice %11 {offsets = [0, 80], sizes = [8, 8], strides = [1, 1]} : vector<32x96xf32> to vector<8x8xf32>
    %51 = arith.truncf %48 : vector<8x8xf32> to vector<8x8xbf16>
    %52 = arith.truncf %49 : vector<8x8xf32> to vector<8x8xbf16>
    %cst_16 = arith.constant dense<0.000000e+00> : vector<8x8xf32>
    %53 = tpu.matmul %51, %52, %cst_16 {dimension_numbers = #tpu.dot_dimension_numbers<[1], [1], [0], [0], [0, 0, 1, 0], [], []>} : vector<8x8xbf16>, vector<8x8xbf16>, vector<8x8xf32> -> vector<8x8xf32>
    %cst_17 = arith.constant dense<0xFF800000> : vector<8xf32>
    %54 = vector.multi_reduction <maximumf>, %53, %cst_17 [1] : vector<8x8xf32> to vector<8xf32>
    %55 = vector.shape_cast %54 : vector<8xf32> to vector<8x1xf32>
    %56 = vector.broadcast %55 : vector<8x1xf32> to vector<8x8xf32>
    %57 = arith.subf %53, %56 : vector<8x8xf32>
    %58 = math.exp %57 : vector<8x8xf32>
    %cst_18 = arith.constant dense<0.000000e+00> : vector<8xf32>
    %59 = vector.multi_reduction <add>, %58, %cst_18 [1] : vector<8x8xf32> to vector<8xf32>
    %60 = vector.shape_cast %59 : vector<8xf32> to vector<8x1xf32>
    %61 = vector.broadcast %60 : vector<8x1xf32> to vector<8x8xf32>
    %62 = arith.divf %58, %61 : vector<8x8xf32>
    %63 = arith.truncf %62 : vector<8x8xf32> to vector<8x8xbf16>
    %64 = arith.truncf %50 : vector<8x8xf32> to vector<8x8xbf16>
    %cst_19 = arith.constant dense<0.000000e+00> : vector<8x8xf32>
    %65 = tpu.matmul %63, %64, %cst_19 {dimension_numbers = #tpu.dot_dimension_numbers<[1], [0], [0], [1], [0, 0, 1, 1], [], []>} : vector<8x8xbf16>, vector<8x8xbf16>, vector<8x8xf32> -> vector<8x8xf32>
    %66 = vector.extract_strided_slice %11 {offsets = [0, 24], sizes = [8, 8], strides = [1, 1]} : vector<32x96xf32> to vector<8x8xf32>
    %67 = vector.extract_strided_slice %11 {offsets = [0, 56], sizes = [8, 8], strides = [1, 1]} : vector<32x96xf32> to vector<8x8xf32>
    %68 = vector.extract_strided_slice %11 {offsets = [0, 88], sizes = [8, 8], strides = [1, 1]} : vector<32x96xf32> to vector<8x8xf32>
    %69 = arith.truncf %66 : vector<8x8xf32> to vector<8x8xbf16>
    %70 = arith.truncf %67 : vector<8x8xf32> to vector<8x8xbf16>
    %cst_20 = arith.constant dense<0.000000e+00> : vector<8x8xf32>
    %71 = tpu.matmul %69, %70, %cst_20 {dimension_numbers = #tpu.dot_dimension_numbers<[1], [1], [0], [0], [0, 0, 1, 0], [], []>} : vector<8x8xbf16>, vector<8x8xbf16>, vector<8x8xf32> -> vector<8x8xf32>
    %cst_21 = arith.constant dense<0xFF800000> : vector<8xf32>
    %72 = vector.multi_reduction <maximumf>, %71, %cst_21 [1] : vector<8x8xf32> to vector<8xf32>
    %73 = vector.shape_cast %72 : vector<8xf32> to vector<8x1xf32>
    %74 = vector.broadcast %73 : vector<8x1xf32> to vector<8x8xf32>
    %75 = arith.subf %71, %74 : vector<8x8xf32>
    %76 = math.exp %75 : vector<8x8xf32>
    %cst_22 = arith.constant dense<0.000000e+00> : vector<8xf32>
    %77 = vector.multi_reduction <add>, %76, %cst_22 [1] : vector<8x8xf32> to vector<8xf32>
    %78 = vector.shape_cast %77 : vector<8xf32> to vector<8x1xf32>
    %79 = vector.broadcast %78 : vector<8x1xf32> to vector<8x8xf32>
    %80 = arith.divf %76, %79 : vector<8x8xf32>
    %81 = arith.truncf %80 : vector<8x8xf32> to vector<8x8xbf16>
    %82 = arith.truncf %68 : vector<8x8xf32> to vector<8x8xbf16>
    %cst_23 = arith.constant dense<0.000000e+00> : vector<8x8xf32>
    %83 = tpu.matmul %81, %82, %cst_23 {dimension_numbers = #tpu.dot_dimension_numbers<[1], [0], [0], [1], [0, 0, 1, 1], [], []>} : vector<8x8xbf16>, vector<8x8xbf16>, vector<8x8xf32> -> vector<8x8xf32>
    %84 = tpu.concatenate %29, %47, %65, %83 in 1 : vector<8x8xf32>, vector<8x8xf32>, vector<8x8xf32>, vector<8x8xf32> -> vector<8x32xf32>
    %85 = vector.extract_strided_slice %11 {offsets = [8, 0], sizes = [8, 8], strides = [1, 1]} : vector<32x96xf32> to vector<8x8xf32>
    %86 = vector.extract_strided_slice %11 {offsets = [8, 32], sizes = [8, 8], strides = [1, 1]} : vector<32x96xf32> to vector<8x8xf32>
    %87 = vector.extract_strided_slice %11 {offsets = [8, 64], sizes = [8, 8], strides = [1, 1]} : vector<32x96xf32> to vector<8x8xf32>
    %88 = arith.truncf %85 : vector<8x8xf32> to vector<8x8xbf16>
    %89 = arith.truncf %86 : vector<8x8xf32> to vector<8x8xbf16>
    %cst_24 = arith.constant dense<0.000000e+00> : vector<8x8xf32>
    %90 = tpu.matmul %88, %89, %cst_24 {dimension_numbers = #tpu.dot_dimension_numbers<[1], [1], [0], [0], [0, 0, 1, 0], [], []>} : vector<8x8xbf16>, vector<8x8xbf16>, vector<8x8xf32> -> vector<8x8xf32>
    %cst_25 = arith.constant dense<0xFF800000> : vector<8xf32>
    %91 = vector.multi_reduction <maximumf>, %90, %cst_25 [1] : vector<8x8xf32> to vector<8xf32>
    %92 = vector.shape_cast %91 : vector<8xf32> to vector<8x1xf32>
    %93 = vector.broadcast %92 : vector<8x1xf32> to vector<8x8xf32>
    %94 = arith.subf %90, %93 : vector<8x8xf32>
    %95 = math.exp %94 : vector<8x8xf32>
    %cst_26 = arith.constant dense<0.000000e+00> : vector<8xf32>
    %96 = vector.multi_reduction <add>, %95, %cst_26 [1] : vector<8x8xf32> to vector<8xf32>
    %97 = vector.shape_cast %96 : vector<8xf32> to vector<8x1xf32>
    %98 = vector.broadcast %97 : vector<8x1xf32> to vector<8x8xf32>
    %99 = arith.divf %95, %98 : vector<8x8xf32>
    %100 = arith.truncf %99 : vector<8x8xf32> to vector<8x8xbf16>
    %101 = arith.truncf %87 : vector<8x8xf32> to vector<8x8xbf16>
    %cst_27 = arith.constant dense<0.000000e+00> : vector<8x8xf32>
    %102 = tpu.matmul %100, %101, %cst_27 {dimension_numbers = #tpu.dot_dimension_numbers<[1], [0], [0], [1], [0, 0, 1, 1], [], []>} : vector<8x8xbf16>, vector<8x8xbf16>, vector<8x8xf32> -> vector<8x8xf32>
    %103 = vector.extract_strided_slice %11 {offsets = [8, 8], sizes = [8, 8], strides = [1, 1]} : vector<32x96xf32> to vector<8x8xf32>
    %104 = vector.extract_strided_slice %11 {offsets = [8, 40], sizes = [8, 8], strides = [1, 1]} : vector<32x96xf32> to vector<8x8xf32>
    %105 = vector.extract_strided_slice %11 {offsets = [8, 72], sizes = [8, 8], strides = [1, 1]} : vector<32x96xf32> to vector<8x8xf32>
    %106 = arith.truncf %103 : vector<8x8xf32> to vector<8x8xbf16>
    %107 = arith.truncf %104 : vector<8x8xf32> to vector<8x8xbf16>
    %cst_28 = arith.constant dense<0.000000e+00> : vector<8x8xf32>
    %108 = tpu.matmul %106, %107, %cst_28 {dimension_numbers = #tpu.dot_dimension_numbers<[1], [1], [0], [0], [0, 0, 1, 0], [], []>} : vector<8x8xbf16>, vector<8x8xbf16>, vector<8x8xf32> -> vector<8x8xf32>
    %cst_29 = arith.constant dense<0xFF800000> : vector<8xf32>
    %109 = vector.multi_reduction <maximumf>, %108, %cst_29 [1] : vector<8x8xf32> to vector<8xf32>
    %110 = vector.shape_cast %109 : vector<8xf32> to vector<8x1xf32>
    %111 = vector.broadcast %110 : vector<8x1xf32> to vector<8x8xf32>
    %112 = arith.subf %108, %111 : vector<8x8xf32>
    %113 = math.exp %112 : vector<8x8xf32>
    %cst_30 = arith.constant dense<0.000000e+00> : vector<8xf32>
    %114 = vector.multi_reduction <add>, %113, %cst_30 [1] : vector<8x8xf32> to vector<8xf32>
    %115 = vector.shape_cast %114 : vector<8xf32> to vector<8x1xf32>
    %116 = vector.broadcast %115 : vector<8x1xf32> to vector<8x8xf32>
    %117 = arith.divf %113, %116 : vector<8x8xf32>
    %118 = arith.truncf %117 : vector<8x8xf32> to vector<8x8xbf16>
    %119 = arith.truncf %105 : vector<8x8xf32> to vector<8x8xbf16>
    %cst_31 = arith.constant dense<0.000000e+00> : vector<8x8xf32>
    %120 = tpu.matmul %118, %119, %cst_31 {dimension_numbers = #tpu.dot_dimension_numbers<[1], [0], [0], [1], [0, 0, 1, 1], [], []>} : vector<8x8xbf16>, vector<8x8xbf16>, vector<8x8xf32> -> vector<8x8xf32>
    %121 = vector.extract_strided_slice %11 {offsets = [8, 16], sizes = [8, 8], strides = [1, 1]} : vector<32x96xf32> to vector<8x8xf32>
    %122 = vector.extract_strided_slice %11 {offsets = [8, 48], sizes = [8, 8], strides = [1, 1]} : vector<32x96xf32> to vector<8x8xf32>
    %123 = vector.extract_strided_slice %11 {offsets = [8, 80], sizes = [8, 8], strides = [1, 1]} : vector<32x96xf32> to vector<8x8xf32>
    %124 = arith.truncf %121 : vector<8x8xf32> to vector<8x8xbf16>
    %125 = arith.truncf %122 : vector<8x8xf32> to vector<8x8xbf16>
    %cst_32 = arith.constant dense<0.000000e+00> : vector<8x8xf32>
    %126 = tpu.matmul %124, %125, %cst_32 {dimension_numbers = #tpu.dot_dimension_numbers<[1], [1], [0], [0], [0, 0, 1, 0], [], []>} : vector<8x8xbf16>, vector<8x8xbf16>, vector<8x8xf32> -> vector<8x8xf32>
    %cst_33 = arith.constant dense<0xFF800000> : vector<8xf32>
    %127 = vector.multi_reduction <maximumf>, %126, %cst_33 [1] : vector<8x8xf32> to vector<8xf32>
    %128 = vector.shape_cast %127 : vector<8xf32> to vector<8x1xf32>
    %129 = vector.broadcast %128 : vector<8x1xf32> to vector<8x8xf32>
    %130 = arith.subf %126, %129 : vector<8x8xf32>
    %131 = math.exp %130 : vector<8x8xf32>
    %cst_34 = arith.constant dense<0.000000e+00> : vector<8xf32>
    %132 = vector.multi_reduction <add>, %131, %cst_34 [1] : vector<8x8xf32> to vector<8xf32>
    %133 = vector.shape_cast %132 : vector<8xf32> to vector<8x1xf32>
    %134 = vector.broadcast %133 : vector<8x1xf32> to vector<8x8xf32>
    %135 = arith.divf %131, %134 : vector<8x8xf32>
    %136 = arith.truncf %135 : vector<8x8xf32> to vector<8x8xbf16>
    %137 = arith.truncf %123 : vector<8x8xf32> to vector<8x8xbf16>
    %cst_35 = arith.constant dense<0.000000e+00> : vector<8x8xf32>
    %138 = tpu.matmul %136, %137, %cst_35 {dimension_numbers = #tpu.dot_dimension_numbers<[1], [0], [0], [1], [0, 0, 1, 1], [], []>} : vector<8x8xbf16>, vector<8x8xbf16>, vector<8x8xf32> -> vector<8x8xf32>
    %139 = vector.extract_strided_slice %11 {offsets = [8, 24], sizes = [8, 8], strides = [1, 1]} : vector<32x96xf32> to vector<8x8xf32>
    %140 = vector.extract_strided_slice %11 {offsets = [8, 56], sizes = [8, 8], strides = [1, 1]} : vector<32x96xf32> to vector<8x8xf32>
    %141 = vector.extract_strided_slice %11 {offsets = [8, 88], sizes = [8, 8], strides = [1, 1]} : vector<32x96xf32> to vector<8x8xf32>
    %142 = arith.truncf %139 : vector<8x8xf32> to vector<8x8xbf16>
    %143 = arith.truncf %140 : vector<8x8xf32> to vector<8x8xbf16>
    %cst_36 = arith.constant dense<0.000000e+00> : vector<8x8xf32>
    %144 = tpu.matmul %142, %143, %cst_36 {dimension_numbers = #tpu.dot_dimension_numbers<[1], [1], [0], [0], [0, 0, 1, 0], [], []>} : vector<8x8xbf16>, vector<8x8xbf16>, vector<8x8xf32> -> vector<8x8xf32>
    %cst_37 = arith.constant dense<0xFF800000> : vector<8xf32>
    %145 = vector.multi_reduction <maximumf>, %144, %cst_37 [1] : vector<8x8xf32> to vector<8xf32>
    %146 = vector.shape_cast %145 : vector<8xf32> to vector<8x1xf32>
    %147 = vector.broadcast %146 : vector<8x1xf32> to vector<8x8xf32>
    %148 = arith.subf %144, %147 : vector<8x8xf32>
    %149 = math.exp %148 : vector<8x8xf32>
    %cst_38 = arith.constant dense<0.000000e+00> : vector<8xf32>
    %150 = vector.multi_reduction <add>, %149, %cst_38 [1] : vector<8x8xf32> to vector<8xf32>
    %151 = vector.shape_cast %150 : vector<8xf32> to vector<8x1xf32>
    %152 = vector.broadcast %151 : vector<8x1xf32> to vector<8x8xf32>
    %153 = arith.divf %149, %152 : vector<8x8xf32>
    %154 = arith.truncf %153 : vector<8x8xf32> to vector<8x8xbf16>
    %155 = arith.truncf %141 : vector<8x8xf32> to vector<8x8xbf16>
    %cst_39 = arith.constant dense<0.000000e+00> : vector<8x8xf32>
    %156 = tpu.matmul %154, %155, %cst_39 {dimension_numbers = #tpu.dot_dimension_numbers<[1], [0], [0], [1], [0, 0, 1, 1], [], []>} : vector<8x8xbf16>, vector<8x8xbf16>, vector<8x8xf32> -> vector<8x8xf32>
    %157 = tpu.concatenate %102, %120, %138, %156 in 1 : vector<8x8xf32>, vector<8x8xf32>, vector<8x8xf32>, vector<8x8xf32> -> vector<8x32xf32>
    %158 = vector.extract_strided_slice %11 {offsets = [16, 0], sizes = [8, 8], strides = [1, 1]} : vector<32x96xf32> to vector<8x8xf32>
    %159 = vector.extract_strided_slice %11 {offsets = [16, 32], sizes = [8, 8], strides = [1, 1]} : vector<32x96xf32> to vector<8x8xf32>
    %160 = vector.extract_strided_slice %11 {offsets = [16, 64], sizes = [8, 8], strides = [1, 1]} : vector<32x96xf32> to vector<8x8xf32>
    %161 = arith.truncf %158 : vector<8x8xf32> to vector<8x8xbf16>
    %162 = arith.truncf %159 : vector<8x8xf32> to vector<8x8xbf16>
    %cst_40 = arith.constant dense<0.000000e+00> : vector<8x8xf32>
    %163 = tpu.matmul %161, %162, %cst_40 {dimension_numbers = #tpu.dot_dimension_numbers<[1], [1], [0], [0], [0, 0, 1, 0], [], []>} : vector<8x8xbf16>, vector<8x8xbf16>, vector<8x8xf32> -> vector<8x8xf32>
    %cst_41 = arith.constant dense<0xFF800000> : vector<8xf32>
    %164 = vector.multi_reduction <maximumf>, %163, %cst_41 [1] : vector<8x8xf32> to vector<8xf32>
    %165 = vector.shape_cast %164 : vector<8xf32> to vector<8x1xf32>
    %166 = vector.broadcast %165 : vector<8x1xf32> to vector<8x8xf32>
    %167 = arith.subf %163, %166 : vector<8x8xf32>
    %168 = math.exp %167 : vector<8x8xf32>
    %cst_42 = arith.constant dense<0.000000e+00> : vector<8xf32>
    %169 = vector.multi_reduction <add>, %168, %cst_42 [1] : vector<8x8xf32> to vector<8xf32>
    %170 = vector.shape_cast %169 : vector<8xf32> to vector<8x1xf32>
    %171 = vector.broadcast %170 : vector<8x1xf32> to vector<8x8xf32>
    %172 = arith.divf %168, %171 : vector<8x8xf32>
    %173 = arith.truncf %172 : vector<8x8xf32> to vector<8x8xbf16>
    %174 = arith.truncf %160 : vector<8x8xf32> to vector<8x8xbf16>
    %cst_43 = arith.constant dense<0.000000e+00> : vector<8x8xf32>
    %175 = tpu.matmul %173, %174, %cst_43 {dimension_numbers = #tpu.dot_dimension_numbers<[1], [0], [0], [1], [0, 0, 1, 1], [], []>} : vector<8x8xbf16>, vector<8x8xbf16>, vector<8x8xf32> -> vector<8x8xf32>
    %176 = vector.extract_strided_slice %11 {offsets = [16, 8], sizes = [8, 8], strides = [1, 1]} : vector<32x96xf32> to vector<8x8xf32>
    %177 = vector.extract_strided_slice %11 {offsets = [16, 40], sizes = [8, 8], strides = [1, 1]} : vector<32x96xf32> to vector<8x8xf32>
    %178 = vector.extract_strided_slice %11 {offsets = [16, 72], sizes = [8, 8], strides = [1, 1]} : vector<32x96xf32> to vector<8x8xf32>
    %179 = arith.truncf %176 : vector<8x8xf32> to vector<8x8xbf16>
    %180 = arith.truncf %177 : vector<8x8xf32> to vector<8x8xbf16>
    %cst_44 = arith.constant dense<0.000000e+00> : vector<8x8xf32>
    %181 = tpu.matmul %179, %180, %cst_44 {dimension_numbers = #tpu.dot_dimension_numbers<[1], [1], [0], [0], [0, 0, 1, 0], [], []>} : vector<8x8xbf16>, vector<8x8xbf16>, vector<8x8xf32> -> vector<8x8xf32>
    %cst_45 = arith.constant dense<0xFF800000> : vector<8xf32>
    %182 = vector.multi_reduction <maximumf>, %181, %cst_45 [1] : vector<8x8xf32> to vector<8xf32>
    %183 = vector.shape_cast %182 : vector<8xf32> to vector<8x1xf32>
    %184 = vector.broadcast %183 : vector<8x1xf32> to vector<8x8xf32>
    %185 = arith.subf %181, %184 : vector<8x8xf32>
    %186 = math.exp %185 : vector<8x8xf32>
    %cst_46 = arith.constant dense<0.000000e+00> : vector<8xf32>
    %187 = vector.multi_reduction <add>, %186, %cst_46 [1] : vector<8x8xf32> to vector<8xf32>
    %188 = vector.shape_cast %187 : vector<8xf32> to vector<8x1xf32>
    %189 = vector.broadcast %188 : vector<8x1xf32> to vector<8x8xf32>
    %190 = arith.divf %186, %189 : vector<8x8xf32>
    %191 = arith.truncf %190 : vector<8x8xf32> to vector<8x8xbf16>
    %192 = arith.truncf %178 : vector<8x8xf32> to vector<8x8xbf16>
    %cst_47 = arith.constant dense<0.000000e+00> : vector<8x8xf32>
    %193 = tpu.matmul %191, %192, %cst_47 {dimension_numbers = #tpu.dot_dimension_numbers<[1], [0], [0], [1], [0, 0, 1, 1], [], []>} : vector<8x8xbf16>, vector<8x8xbf16>, vector<8x8xf32> -> vector<8x8xf32>
    %194 = vector.extract_strided_slice %11 {offsets = [16, 16], sizes = [8, 8], strides = [1, 1]} : vector<32x96xf32> to vector<8x8xf32>
    %195 = vector.extract_strided_slice %11 {offsets = [16, 48], sizes = [8, 8], strides = [1, 1]} : vector<32x96xf32> to vector<8x8xf32>
    %196 = vector.extract_strided_slice %11 {offsets = [16, 80], sizes = [8, 8], strides = [1, 1]} : vector<32x96xf32> to vector<8x8xf32>
    %197 = arith.truncf %194 : vector<8x8xf32> to vector<8x8xbf16>
    %198 = arith.truncf %195 : vector<8x8xf32> to vector<8x8xbf16>
    %cst_48 = arith.constant dense<0.000000e+00> : vector<8x8xf32>
    %199 = tpu.matmul %197, %198, %cst_48 {dimension_numbers = #tpu.dot_dimension_numbers<[1], [1], [0], [0], [0, 0, 1, 0], [], []>} : vector<8x8xbf16>, vector<8x8xbf16>, vector<8x8xf32> -> vector<8x8xf32>
    %cst_49 = arith.constant dense<0xFF800000> : vector<8xf32>
    %200 = vector.multi_reduction <maximumf>, %199, %cst_49 [1] : vector<8x8xf32> to vector<8xf32>
    %201 = vector.shape_cast %200 : vector<8xf32> to vector<8x1xf32>
    %202 = vector.broadcast %201 : vector<8x1xf32> to vector<8x8xf32>
    %203 = arith.subf %199, %202 : vector<8x8xf32>
    %204 = math.exp %203 : vector<8x8xf32>
    %cst_50 = arith.constant dense<0.000000e+00> : vector<8xf32>
    %205 = vector.multi_reduction <add>, %204, %cst_50 [1] : vector<8x8xf32> to vector<8xf32>
    %206 = vector.shape_cast %205 : vector<8xf32> to vector<8x1xf32>
    %207 = vector.broadcast %206 : vector<8x1xf32> to vector<8x8xf32>
    %208 = arith.divf %204, %207 : vector<8x8xf32>
    %209 = arith.truncf %208 : vector<8x8xf32> to vector<8x8xbf16>
    %210 = arith.truncf %196 : vector<8x8xf32> to vector<8x8xbf16>
    %cst_51 = arith.constant dense<0.000000e+00> : vector<8x8xf32>
    %211 = tpu.matmul %209, %210, %cst_51 {dimension_numbers = #tpu.dot_dimension_numbers<[1], [0], [0], [1], [0, 0, 1, 1], [], []>} : vector<8x8xbf16>, vector<8x8xbf16>, vector<8x8xf32> -> vector<8x8xf32>
    %212 = vector.extract_strided_slice %11 {offsets = [16, 24], sizes = [8, 8], strides = [1, 1]} : vector<32x96xf32> to vector<8x8xf32>
    %213 = vector.extract_strided_slice %11 {offsets = [16, 56], sizes = [8, 8], strides = [1, 1]} : vector<32x96xf32> to vector<8x8xf32>
    %214 = vector.extract_strided_slice %11 {offsets = [16, 88], sizes = [8, 8], strides = [1, 1]} : vector<32x96xf32> to vector<8x8xf32>
    %215 = arith.truncf %212 : vector<8x8xf32> to vector<8x8xbf16>
    %216 = arith.truncf %213 : vector<8x8xf32> to vector<8x8xbf16>
    %cst_52 = arith.constant dense<0.000000e+00> : vector<8x8xf32>
    %217 = tpu.matmul %215, %216, %cst_52 {dimension_numbers = #tpu.dot_dimension_numbers<[1], [1], [0], [0], [0, 0, 1, 0], [], []>} : vector<8x8xbf16>, vector<8x8xbf16>, vector<8x8xf32> -> vector<8x8xf32>
    %cst_53 = arith.constant dense<0xFF800000> : vector<8xf32>
    %218 = vector.multi_reduction <maximumf>, %217, %cst_53 [1] : vector<8x8xf32> to vector<8xf32>
    %219 = vector.shape_cast %218 : vector<8xf32> to vector<8x1xf32>
    %220 = vector.broadcast %219 : vector<8x1xf32> to vector<8x8xf32>
    %221 = arith.subf %217, %220 : vector<8x8xf32>
    %222 = math.exp %221 : vector<8x8xf32>
    %cst_54 = arith.constant dense<0.000000e+00> : vector<8xf32>
    %223 = vector.multi_reduction <add>, %222, %cst_54 [1] : vector<8x8xf32> to vector<8xf32>
    %224 = vector.shape_cast %223 : vector<8xf32> to vector<8x1xf32>
    %225 = vector.broadcast %224 : vector<8x1xf32> to vector<8x8xf32>
    %226 = arith.divf %222, %225 : vector<8x8xf32>
    %227 = arith.truncf %226 : vector<8x8xf32> to vector<8x8xbf16>
    %228 = arith.truncf %214 : vector<8x8xf32> to vector<8x8xbf16>
    %cst_55 = arith.constant dense<0.000000e+00> : vector<8x8xf32>
    %229 = tpu.matmul %227, %228, %cst_55 {dimension_numbers = #tpu.dot_dimension_numbers<[1], [0], [0], [1], [0, 0, 1, 1], [], []>} : vector<8x8xbf16>, vector<8x8xbf16>, vector<8x8xf32> -> vector<8x8xf32>
    %230 = tpu.concatenate %175, %193, %211, %229 in 1 : vector<8x8xf32>, vector<8x8xf32>, vector<8x8xf32>, vector<8x8xf32> -> vector<8x32xf32>
    %231 = vector.extract_strided_slice %11 {offsets = [24, 0], sizes = [8, 8], strides = [1, 1]} : vector<32x96xf32> to vector<8x8xf32>
    %232 = vector.extract_strided_slice %11 {offsets = [24, 32], sizes = [8, 8], strides = [1, 1]} : vector<32x96xf32> to vector<8x8xf32>
    %233 = vector.extract_strided_slice %11 {offsets = [24, 64], sizes = [8, 8], strides = [1, 1]} : vector<32x96xf32> to vector<8x8xf32>
    %234 = arith.truncf %231 : vector<8x8xf32> to vector<8x8xbf16>
    %235 = arith.truncf %232 : vector<8x8xf32> to vector<8x8xbf16>
    %cst_56 = arith.constant dense<0.000000e+00> : vector<8x8xf32>
    %236 = tpu.matmul %234, %235, %cst_56 {dimension_numbers = #tpu.dot_dimension_numbers<[1], [1], [0], [0], [0, 0, 1, 0], [], []>} : vector<8x8xbf16>, vector<8x8xbf16>, vector<8x8xf32> -> vector<8x8xf32>
    %cst_57 = arith.constant dense<0xFF800000> : vector<8xf32>
    %237 = vector.multi_reduction <maximumf>, %236, %cst_57 [1] : vector<8x8xf32> to vector<8xf32>
    %238 = vector.shape_cast %237 : vector<8xf32> to vector<8x1xf32>
    %239 = vector.broadcast %238 : vector<8x1xf32> to vector<8x8xf32>
    %240 = arith.subf %236, %239 : vector<8x8xf32>
    %241 = math.exp %240 : vector<8x8xf32>
    %cst_58 = arith.constant dense<0.000000e+00> : vector<8xf32>
    %242 = vector.multi_reduction <add>, %241, %cst_58 [1] : vector<8x8xf32> to vector<8xf32>
    %243 = vector.shape_cast %242 : vector<8xf32> to vector<8x1xf32>
    %244 = vector.broadcast %243 : vector<8x1xf32> to vector<8x8xf32>
    %245 = arith.divf %241, %244 : vector<8x8xf32>
    %246 = arith.truncf %245 : vector<8x8xf32> to vector<8x8xbf16>
    %247 = arith.truncf %233 : vector<8x8xf32> to vector<8x8xbf16>
    %cst_59 = arith.constant dense<0.000000e+00> : vector<8x8xf32>
    %248 = tpu.matmul %246, %247, %cst_59 {dimension_numbers = #tpu.dot_dimension_numbers<[1], [0], [0], [1], [0, 0, 1, 1], [], []>} : vector<8x8xbf16>, vector<8x8xbf16>, vector<8x8xf32> -> vector<8x8xf32>
    %249 = vector.extract_strided_slice %11 {offsets = [24, 8], sizes = [8, 8], strides = [1, 1]} : vector<32x96xf32> to vector<8x8xf32>
    %250 = vector.extract_strided_slice %11 {offsets = [24, 40], sizes = [8, 8], strides = [1, 1]} : vector<32x96xf32> to vector<8x8xf32>
    %251 = vector.extract_strided_slice %11 {offsets = [24, 72], sizes = [8, 8], strides = [1, 1]} : vector<32x96xf32> to vector<8x8xf32>
    %252 = arith.truncf %249 : vector<8x8xf32> to vector<8x8xbf16>
    %253 = arith.truncf %250 : vector<8x8xf32> to vector<8x8xbf16>
    %cst_60 = arith.constant dense<0.000000e+00> : vector<8x8xf32>
    %254 = tpu.matmul %252, %253, %cst_60 {dimension_numbers = #tpu.dot_dimension_numbers<[1], [1], [0], [0], [0, 0, 1, 0], [], []>} : vector<8x8xbf16>, vector<8x8xbf16>, vector<8x8xf32> -> vector<8x8xf32>
    %cst_61 = arith.constant dense<0xFF800000> : vector<8xf32>
    %255 = vector.multi_reduction <maximumf>, %254, %cst_61 [1] : vector<8x8xf32> to vector<8xf32>
    %256 = vector.shape_cast %255 : vector<8xf32> to vector<8x1xf32>
    %257 = vector.broadcast %256 : vector<8x1xf32> to vector<8x8xf32>
    %258 = arith.subf %254, %257 : vector<8x8xf32>
    %259 = math.exp %258 : vector<8x8xf32>
    %cst_62 = arith.constant dense<0.000000e+00> : vector<8xf32>
    %260 = vector.multi_reduction <add>, %259, %cst_62 [1] : vector<8x8xf32> to vector<8xf32>
    %261 = vector.shape_cast %260 : vector<8xf32> to vector<8x1xf32>
    %262 = vector.broadcast %261 : vector<8x1xf32> to vector<8x8xf32>
    %263 = arith.divf %259, %262 : vector<8x8xf32>
    %264 = arith.truncf %263 : vector<8x8xf32> to vector<8x8xbf16>
    %265 = arith.truncf %251 : vector<8x8xf32> to vector<8x8xbf16>
    %cst_63 = arith.constant dense<0.000000e+00> : vector<8x8xf32>
    %266 = tpu.matmul %264, %265, %cst_63 {dimension_numbers = #tpu.dot_dimension_numbers<[1], [0], [0], [1], [0, 0, 1, 1], [], []>} : vector<8x8xbf16>, vector<8x8xbf16>, vector<8x8xf32> -> vector<8x8xf32>
    %267 = vector.extract_strided_slice %11 {offsets = [24, 16], sizes = [8, 8], strides = [1, 1]} : vector<32x96xf32> to vector<8x8xf32>
    %268 = vector.extract_strided_slice %11 {offsets = [24, 48], sizes = [8, 8], strides = [1, 1]} : vector<32x96xf32> to vector<8x8xf32>
    %269 = vector.extract_strided_slice %11 {offsets = [24, 80], sizes = [8, 8], strides = [1, 1]} : vector<32x96xf32> to vector<8x8xf32>
    %270 = arith.truncf %267 : vector<8x8xf32> to vector<8x8xbf16>
    %271 = arith.truncf %268 : vector<8x8xf32> to vector<8x8xbf16>
    %cst_64 = arith.constant dense<0.000000e+00> : vector<8x8xf32>
    %272 = tpu.matmul %270, %271, %cst_64 {dimension_numbers = #tpu.dot_dimension_numbers<[1], [1], [0], [0], [0, 0, 1, 0], [], []>} : vector<8x8xbf16>, vector<8x8xbf16>, vector<8x8xf32> -> vector<8x8xf32>
    %cst_65 = arith.constant dense<0xFF800000> : vector<8xf32>
    %273 = vector.multi_reduction <maximumf>, %272, %cst_65 [1] : vector<8x8xf32> to vector<8xf32>
    %274 = vector.shape_cast %273 : vector<8xf32> to vector<8x1xf32>
    %275 = vector.broadcast %274 : vector<8x1xf32> to vector<8x8xf32>
    %276 = arith.subf %272, %275 : vector<8x8xf32>
    %277 = math.exp %276 : vector<8x8xf32>
    %cst_66 = arith.constant dense<0.000000e+00> : vector<8xf32>
    %278 = vector.multi_reduction <add>, %277, %cst_66 [1] : vector<8x8xf32> to vector<8xf32>
    %279 = vector.shape_cast %278 : vector<8xf32> to vector<8x1xf32>
    %280 = vector.broadcast %279 : vector<8x1xf32> to vector<8x8xf32>
    %281 = arith.divf %277, %280 : vector<8x8xf32>
    %282 = arith.truncf %281 : vector<8x8xf32> to vector<8x8xbf16>
    %283 = arith.truncf %269 : vector<8x8xf32> to vector<8x8xbf16>
    %cst_67 = arith.constant dense<0.000000e+00> : vector<8x8xf32>
    %284 = tpu.matmul %282, %283, %cst_67 {dimension_numbers = #tpu.dot_dimension_numbers<[1], [0], [0], [1], [0, 0, 1, 1], [], []>} : vector<8x8xbf16>, vector<8x8xbf16>, vector<8x8xf32> -> vector<8x8xf32>
    %285 = vector.extract_strided_slice %11 {offsets = [24, 24], sizes = [8, 8], strides = [1, 1]} : vector<32x96xf32> to vector<8x8xf32>
    %286 = vector.extract_strided_slice %11 {offsets = [24, 56], sizes = [8, 8], strides = [1, 1]} : vector<32x96xf32> to vector<8x8xf32>
    %287 = vector.extract_strided_slice %11 {offsets = [24, 88], sizes = [8, 8], strides = [1, 1]} : vector<32x96xf32> to vector<8x8xf32>
    %288 = arith.truncf %285 : vector<8x8xf32> to vector<8x8xbf16>
    %289 = arith.truncf %286 : vector<8x8xf32> to vector<8x8xbf16>
    %cst_68 = arith.constant dense<0.000000e+00> : vector<8x8xf32>
    %290 = tpu.matmul %288, %289, %cst_68 {dimension_numbers = #tpu.dot_dimension_numbers<[1], [1], [0], [0], [0, 0, 1, 0], [], []>} : vector<8x8xbf16>, vector<8x8xbf16>, vector<8x8xf32> -> vector<8x8xf32>
    %cst_69 = arith.constant dense<0xFF800000> : vector<8xf32>
    %291 = vector.multi_reduction <maximumf>, %290, %cst_69 [1] : vector<8x8xf32> to vector<8xf32>
    %292 = vector.shape_cast %291 : vector<8xf32> to vector<8x1xf32>
    %293 = vector.broadcast %292 : vector<8x1xf32> to vector<8x8xf32>
    %294 = arith.subf %290, %293 : vector<8x8xf32>
    %295 = math.exp %294 : vector<8x8xf32>
    %cst_70 = arith.constant dense<0.000000e+00> : vector<8xf32>
    %296 = vector.multi_reduction <add>, %295, %cst_70 [1] : vector<8x8xf32> to vector<8xf32>
    %297 = vector.shape_cast %296 : vector<8xf32> to vector<8x1xf32>
    %298 = vector.broadcast %297 : vector<8x1xf32> to vector<8x8xf32>
    %299 = arith.divf %295, %298 : vector<8x8xf32>
    %300 = arith.truncf %299 : vector<8x8xf32> to vector<8x8xbf16>
    %301 = arith.truncf %287 : vector<8x8xf32> to vector<8x8xbf16>
    %cst_71 = arith.constant dense<0.000000e+00> : vector<8x8xf32>
    %302 = tpu.matmul %300, %301, %cst_71 {dimension_numbers = #tpu.dot_dimension_numbers<[1], [0], [0], [1], [0, 0, 1, 1], [], []>} : vector<8x8xbf16>, vector<8x8xbf16>, vector<8x8xf32> -> vector<8x8xf32>
    %303 = tpu.concatenate %248, %266, %284, %302 in 1 : vector<8x8xf32>, vector<8x8xf32>, vector<8x8xf32>, vector<8x8xf32> -> vector<8x32xf32>
    %304 = tpu.concatenate %84, %157, %230, %303 in 0 : vector<8x32xf32>, vector<8x32xf32>, vector<8x32xf32>, vector<8x32xf32> -> vector<32x32xf32>
    %305 = arith.truncf %304 : vector<32x32xf32> to vector<32x32xbf16>
    %c0_72 = arith.constant 0 : index
    %c0_73 = arith.constant 0 : index
    %c0_74 = arith.constant 0 : index
    %306 = vector.load %arg5[%c0_72, %c0_73, %c0_74] : memref<1x32x32xbf16, #tpu.memory_space<vmem>>, vector<1x32x32xbf16>
    %307 = vector.shape_cast %306 : vector<1x32x32xbf16> to vector<32x32xbf16>
    %cst_75 = arith.constant dense<0.000000e+00> : vector<32x32xf32>
    %308 = tpu.matmul %305, %307, %cst_75 {dimension_numbers = #tpu.dot_dimension_numbers<[1], [0], [0], [1], [0, 0, 1, 1], [], []>} : vector<32x32xbf16>, vector<32x32xbf16>, vector<32x32xf32> -> vector<32x32xf32>
    %c0_76 = arith.constant 0 : index
    %c0_77 = arith.constant 0 : index
    %c0_78 = arith.constant 0 : index
    %309 = vector.load %arg6[%c0_76, %c0_77, %c0_78] : memref<1x1x32xf32, #tpu.memory_space<vmem>>, vector<1x1x32xf32>
    %310 = vector.shape_cast %309 : vector<1x1x32xf32> to vector<1x32xf32>
    %311 = vector.broadcast %310 : vector<1x32xf32> to vector<32x32xf32>
    %312 = arith.addf %308, %311 : vector<32x32xf32>
    %313 = arith.addf %3, %312 : vector<32x32xf32>
    %c0_79 = arith.constant 0 : index
    %c0_80 = arith.constant 0 : index
    %c0_81 = arith.constant 0 : index
    %314 = vector.load %arg11[%c0_79, %c0_80, %c0_81] : memref<1x1x32xf32, #tpu.memory_space<vmem>>, vector<1x1x32xf32>
    %315 = vector.shape_cast %314 : vector<1x1x32xf32> to vector<1x32xf32>
    %c0_82 = arith.constant 0 : index
    %c0_83 = arith.constant 0 : index
    %c0_84 = arith.constant 0 : index
    %316 = vector.load %arg12[%c0_82, %c0_83, %c0_84] : memref<1x1x32xf32, #tpu.memory_space<vmem>>, vector<1x1x32xf32>
    %317 = vector.shape_cast %316 : vector<1x1x32xf32> to vector<1x32xf32>
    %cst_85 = arith.constant dense<0.000000e+00> : vector<32xf32>
    %318 = vector.multi_reduction <add>, %313, %cst_85 [1] : vector<32x32xf32> to vector<32xf32>
    %319 = vector.shape_cast %318 : vector<32xf32> to vector<32x1xf32>
    %cst_86 = arith.constant 3.200000e+01 : f32
    %320 = vector.broadcast %cst_86 : f32 to vector<32x1xf32>
    %321 = arith.divf %319, %320 : vector<32x1xf32>
    %322 = arith.mulf %313, %313 : vector<32x32xf32>
    %cst_87 = arith.constant dense<0.000000e+00> : vector<32xf32>
    %323 = vector.multi_reduction <add>, %322, %cst_87 [1] : vector<32x32xf32> to vector<32xf32>
    %324 = vector.shape_cast %323 : vector<32xf32> to vector<32x1xf32>
    %cst_88 = arith.constant 3.200000e+01 : f32
    %325 = vector.broadcast %cst_88 : f32 to vector<32x1xf32>
    %326 = arith.divf %324, %325 : vector<32x1xf32>
    %327 = arith.mulf %321, %321 : vector<32x1xf32>
    %328 = arith.subf %326, %327 : vector<32x1xf32>
    %329 = vector.broadcast %321 : vector<32x1xf32> to vector<32x32xf32>
    %330 = arith.subf %313, %329 : vector<32x32xf32>
    %cst_89 = arith.constant 9.99999974E-6 : f32
    %331 = vector.broadcast %cst_89 : f32 to vector<32x1xf32>
    %332 = arith.addf %328, %331 : vector<32x1xf32>
    %333 = math.rsqrt %332 : vector<32x1xf32>
    %334 = vector.broadcast %333 : vector<32x1xf32> to vector<32x32xf32>
    %335 = arith.mulf %330, %334 : vector<32x32xf32>
    %336 = vector.broadcast %315 : vector<1x32xf32> to vector<32x32xf32>
    %337 = arith.mulf %335, %336 : vector<32x32xf32>
    %338 = vector.broadcast %317 : vector<1x32xf32> to vector<32x32xf32>
    %339 = arith.addf %337, %338 : vector<32x32xf32>
    %340 = arith.truncf %339 : vector<32x32xf32> to vector<32x32xbf16>
    %c0_90 = arith.constant 0 : index
    %c0_91 = arith.constant 0 : index
    %c0_92 = arith.constant 0 : index
    %341 = vector.load %arg7[%c0_90, %c0_91, %c0_92] : memref<1x32x128xbf16, #tpu.memory_space<vmem>>, vector<1x32x128xbf16>
    %342 = vector.shape_cast %341 : vector<1x32x128xbf16> to vector<32x128xbf16>
    %cst_93 = arith.constant dense<0.000000e+00> : vector<32x128xf32>
    %343 = tpu.matmul %340, %342, %cst_93 {dimension_numbers = #tpu.dot_dimension_numbers<[1], [0], [0], [1], [0, 0, 1, 1], [], []>} : vector<32x32xbf16>, vector<32x128xbf16>, vector<32x128xf32> -> vector<32x128xf32>
    %c0_94 = arith.constant 0 : index
    %c0_95 = arith.constant 0 : index
    %c0_96 = arith.constant 0 : index
    %344 = vector.load %arg8[%c0_94, %c0_95, %c0_96] : memref<1x1x128xf32, #tpu.memory_space<vmem>>, vector<1x1x128xf32>
    %345 = vector.shape_cast %344 : vector<1x1x128xf32> to vector<1x128xf32>
    %346 = vector.broadcast %345 : vector<1x128xf32> to vector<32x128xf32>
    %347 = arith.addf %343, %346 : vector<32x128xf32>
    %cst_97 = arith.constant 0.000000e+00 : f32
    %348 = vector.broadcast %cst_97 : f32 to vector<32x128xf32>
    %349 = arith.maximumf %347, %348 : vector<32x128xf32>
    %350 = arith.truncf %349 : vector<32x128xf32> to vector<32x128xbf16>
    %c0_98 = arith.constant 0 : index
    %c0_99 = arith.constant 0 : index
    %c0_100 = arith.constant 0 : index
    %351 = vector.load %arg9[%c0_98, %c0_99, %c0_100] : memref<1x128x32xbf16, #tpu.memory_space<vmem>>, vector<1x128x32xbf16>
    %352 = vector.shape_cast %351 : vector<1x128x32xbf16> to vector<128x32xbf16>
    %cst_101 = arith.constant dense<0.000000e+00> : vector<32x32xf32>
    %353 = tpu.matmul %350, %352, %cst_101 {dimension_numbers = #tpu.dot_dimension_numbers<[1], [0], [0], [1], [0, 0, 1, 1], [], []>} : vector<32x128xbf16>, vector<128x32xbf16>, vector<32x32xf32> -> vector<32x32xf32>
    %c0_102 = arith.constant 0 : index
    %c0_103 = arith.constant 0 : index
    %c0_104 = arith.constant 0 : index
    %354 = vector.load %arg10[%c0_102, %c0_103, %c0_104] : memref<1x1x32xf32, #tpu.memory_space<vmem>>, vector<1x1x32xf32>
    %355 = vector.shape_cast %354 : vector<1x1x32xf32> to vector<1x32xf32>
    %356 = vector.broadcast %355 : vector<1x32xf32> to vector<32x32xf32>
    %357 = arith.addf %353, %356 : vector<32x32xf32>
    %358 = arith.addf %339, %357 : vector<32x32xf32>
    %c0_105 = arith.constant 0 : index
    %c0_106 = arith.constant 0 : index
    %c0_107 = arith.constant 0 : index
    %359 = vector.load %arg13[%c0_105, %c0_106, %c0_107] : memref<1x1x32xf32, #tpu.memory_space<vmem>>, vector<1x1x32xf32>
    %360 = vector.shape_cast %359 : vector<1x1x32xf32> to vector<1x32xf32>
    %c0_108 = arith.constant 0 : index
    %c0_109 = arith.constant 0 : index
    %c0_110 = arith.constant 0 : index
    %361 = vector.load %arg14[%c0_108, %c0_109, %c0_110] : memref<1x1x32xf32, #tpu.memory_space<vmem>>, vector<1x1x32xf32>
    %362 = vector.shape_cast %361 : vector<1x1x32xf32> to vector<1x32xf32>
    %cst_111 = arith.constant dense<0.000000e+00> : vector<32xf32>
    %363 = vector.multi_reduction <add>, %358, %cst_111 [1] : vector<32x32xf32> to vector<32xf32>
    %364 = vector.shape_cast %363 : vector<32xf32> to vector<32x1xf32>
    %cst_112 = arith.constant 3.200000e+01 : f32
    %365 = vector.broadcast %cst_112 : f32 to vector<32x1xf32>
    %366 = arith.divf %364, %365 : vector<32x1xf32>
    %367 = arith.mulf %358, %358 : vector<32x32xf32>
    %cst_113 = arith.constant dense<0.000000e+00> : vector<32xf32>
    %368 = vector.multi_reduction <add>, %367, %cst_113 [1] : vector<32x32xf32> to vector<32xf32>
    %369 = vector.shape_cast %368 : vector<32xf32> to vector<32x1xf32>
    %cst_114 = arith.constant 3.200000e+01 : f32
    %370 = vector.broadcast %cst_114 : f32 to vector<32x1xf32>
    %371 = arith.divf %369, %370 : vector<32x1xf32>
    %372 = arith.mulf %366, %366 : vector<32x1xf32>
    %373 = arith.subf %371, %372 : vector<32x1xf32>
    %374 = vector.broadcast %366 : vector<32x1xf32> to vector<32x32xf32>
    %375 = arith.subf %358, %374 : vector<32x32xf32>
    %cst_115 = arith.constant 9.99999974E-6 : f32
    %376 = vector.broadcast %cst_115 : f32 to vector<32x1xf32>
    %377 = arith.addf %373, %376 : vector<32x1xf32>
    %378 = math.rsqrt %377 : vector<32x1xf32>
    %379 = vector.broadcast %378 : vector<32x1xf32> to vector<32x32xf32>
    %380 = arith.mulf %375, %379 : vector<32x32xf32>
    %381 = vector.broadcast %360 : vector<1x32xf32> to vector<32x32xf32>
    %382 = arith.mulf %380, %381 : vector<32x32xf32>
    %383 = vector.broadcast %362 : vector<1x32xf32> to vector<32x32xf32>
    %384 = arith.addf %382, %383 : vector<32x32xf32>
    %c0_116 = arith.constant 0 : index
    %c0_117 = arith.constant 0 : index
    %385 = vector.load %arg16[%c0_116, %c0_117] : memref<32x32xf32, #tpu.memory_space<vmem>>, vector<32x32xf32>
    tpu.vector_store %arg16[%c0_116, %c0_117], %384 {strides = array<i32>} : memref<32x32xf32, #tpu.memory_space<vmem>>, vector<32x32xf32>,
    %c1_i32 = arith.constant 1 : i32
    %386 = arith.cmpi eq, %arg1, %c1_i32 : i32
    %387 = arith.extui %386 : i1 to i32
    %c0_i32_118 = arith.constant 0 : i32
    %388 = arith.cmpi ne, %387, %c0_i32_118 : i32
    scf.if %388 {
      %389 = vector.extract_strided_slice %384 {offsets = [0, 0], sizes = [1, 32], strides = [1, 1]} : vector<32x32xf32> to vector<1x32xf32>
      %390 = vector.extract_strided_slice %384 {offsets = [8, 0], sizes = [1, 32], strides = [1, 1]} : vector<32x32xf32> to vector<1x32xf32>
      %391 = vector.extract_strided_slice %384 {offsets = [16, 0], sizes = [1, 32], strides = [1, 1]} : vector<32x32xf32> to vector<1x32xf32>
      %392 = vector.extract_strided_slice %384 {offsets = [24, 0], sizes = [1, 32], strides = [1, 1]} : vector<32x32xf32> to vector<1x32xf32>
      %393 = tpu.concatenate %389, %390, %391, %392 in 0 : vector<1x32xf32>, vector<1x32xf32>, vector<1x32xf32>, vector<1x32xf32> -> vector<4x32xf32>
      %c0_119 = arith.constant 0 : index
      %c0_120 = arith.constant 0 : index
      %c0_121 = arith.constant 0 : index
      %394 = vector.load %arg15[%c0_119, %c0_120, %c0_121] : memref<1x4x32xf32, #tpu.memory_space<vmem>>, vector<1x4x32xf32>
      %395 = vector.shape_cast %394 : vector<1x4x32xf32> to vector<4x32xf32>
      %396 = vector.shape_cast %393 : vector<4x32xf32> to vector<1x4x32xf32>
      tpu.vector_store %arg15[%c0_119, %c0_120, %c0_121], %396 {strides = array<i32>} : memref<1x4x32xf32, #tpu.memory_space<vmem>>, vector<1x4x32xf32>,
    } else {
    }
    return
  }
  func.func @transform_0(%arg0: i32, %arg1: i32) -> (i32, i32) {
    %c0_i32 = arith.constant 0 : i32
    %c0_i32_0 = arith.constant 0 : i32
    return %arg0, %c0_i32 : i32, i32
  }
  func.func @transform_1(%arg0: i32, %arg1: i32) -> (i32, i32, i32) {
    %c0_i32 = arith.constant 0 : i32
    %c0_i32_0 = arith.constant 0 : i32
    %c0_i32_1 = arith.constant 0 : i32
    return %arg1, %c0_i32, %c0_i32_0 : i32, i32, i32
  }
  func.func @transform_2(%arg0: i32, %arg1: i32) -> (i32, i32, i32) {
    %c0_i32 = arith.constant 0 : i32
    %c0_i32_0 = arith.constant 0 : i32
    %c0_i32_1 = arith.constant 0 : i32
    return %arg1, %c0_i32, %c0_i32_0 : i32, i32, i32
  }
  func.func @transform_3(%arg0: i32, %arg1: i32) -> (i32, i32, i32) {
    %c0_i32 = arith.constant 0 : i32
    %c0_i32_0 = arith.constant 0 : i32
    %c0_i32_1 = arith.constant 0 : i32
    return %arg1, %c0_i32, %c0_i32_0 : i32, i32, i32
  }
  func.func @transform_4(%arg0: i32, %arg1: i32) -> (i32, i32, i32) {
    %c0_i32 = arith.constant 0 : i32
    %c0_i32_0 = arith.constant 0 : i32
    %c0_i32_1 = arith.constant 0 : i32
    return %arg1, %c0_i32, %c0_i32_0 : i32, i32, i32
  }
  func.func @transform_5(%arg0: i32, %arg1: i32) -> (i32, i32, i32) {
    %c0_i32 = arith.constant 0 : i32
    %c0_i32_0 = arith.constant 0 : i32
    %c0_i32_1 = arith.constant 0 : i32
    return %arg1, %c0_i32, %c0_i32_0 : i32, i32, i32
  }
  func.func @transform_6(%arg0: i32, %arg1: i32) -> (i32, i32, i32) {
    %c0_i32 = arith.constant 0 : i32
    %c0_i32_0 = arith.constant 0 : i32
    %c0_i32_1 = arith.constant 0 : i32
    return %arg1, %c0_i32, %c0_i32_0 : i32, i32, i32
  }
  func.func @transform_7(%arg0: i32, %arg1: i32) -> (i32, i32, i32) {
    %c0_i32 = arith.constant 0 : i32
    %c0_i32_0 = arith.constant 0 : i32
    %c0_i32_1 = arith.constant 0 : i32
    return %arg1, %c0_i32, %c0_i32_0 : i32, i32, i32
  }
  func.func @transform_8(%arg0: i32, %arg1: i32) -> (i32, i32, i32) {
    %c0_i32 = arith.constant 0 : i32
    %c0_i32_0 = arith.constant 0 : i32
    %c0_i32_1 = arith.constant 0 : i32
    return %arg1, %c0_i32, %c0_i32_0 : i32, i32, i32
  }
  func.func @transform_9(%arg0: i32, %arg1: i32) -> (i32, i32, i32) {
    %c0_i32 = arith.constant 0 : i32
    %c0_i32_0 = arith.constant 0 : i32
    %c0_i32_1 = arith.constant 0 : i32
    return %arg1, %c0_i32, %c0_i32_0 : i32, i32, i32
  }
  func.func @transform_10(%arg0: i32, %arg1: i32) -> (i32, i32, i32) {
    %c0_i32 = arith.constant 0 : i32
    %c0_i32_0 = arith.constant 0 : i32
    %c0_i32_1 = arith.constant 0 : i32
    return %arg1, %c0_i32, %c0_i32_0 : i32, i32, i32
  }
  func.func @transform_11(%arg0: i32, %arg1: i32) -> (i32, i32, i32) {
    %c0_i32 = arith.constant 0 : i32
    %c0_i32_0 = arith.constant 0 : i32
    %c0_i32_1 = arith.constant 0 : i32
    return %arg1, %c0_i32, %c0_i32_0 : i32, i32, i32
  }
  func.func @transform_12(%arg0: i32, %arg1: i32) -> (i32, i32, i32) {
    %c0_i32 = arith.constant 0 : i32
    %c0_i32_0 = arith.constant 0 : i32
    %c0_i32_1 = arith.constant 0 : i32
    return %arg1, %c0_i32, %c0_i32_0 : i32, i32, i32
  }
  func.func @transform_13(%arg0: i32, %arg1: i32) -> (i32, i32, i32) {
    %c0_i32 = arith.constant 0 : i32
    %c0_i32_0 = arith.constant 0 : i32
    %c0_i32_1 = arith.constant 0 : i32
    return %arg0, %c0_i32, %c0_i32_0 : i32, i32, i32
  }
}

</mosaic_0001>

<llo_original>
// kernel: base_encoder_forward.2
$region0: #{base_encoder_forward.2}
  #allocation0 [shape = 'u32[]', space=smem, size = 0x4, offset = 0x4, fixed_abs, tag = 'smem constant byte address 0x4 - core index']
  #allocation1 [shape = 'u32[144,128]{1,0:T(1,128)}', space=vmem, size = 0x12000, scoped, tag = 'internal scratch']
  %s0 = inlined_call_operand.vmem [shape: f32[8,8,16], index: 0, kind: input, shape index: {}]
  %s1 = inlined_call_operand.vmem [shape: bf16[16,32], index: 1, kind: input, shape index: {}]
  %s2 = inlined_call_operand.vmem [shape: f32[1,32], index: 2, kind: input, shape index: {}]
  %s3 = inlined_call_operand.vmem [shape: f32[8,32], index: 3, kind: input, shape index: {}]
  %s4 = inlined_call_operand.vmem [shape: f32[64,32], index: 4, kind: output, shape index: {}]
  %s5 = sld [smem:[#allocation0]]
  $region49: #{base_encoder_forward.2} parent=0
    _
  %s7 = ssub.s32 1, %s5
  %s8 = scalar_select 0, %s7, %s5
  loop: start=0, step=1, limit=4
  $region2: #{base_encoder_forward.2} parent=0 // loop_pre_header
    _
  $region3: #{base_encoder_forward.2} parent=0 // loop_header
    %s10 = sphi 0, %s14
    %p11 = scmp.ge.s32.totalorder %s10, 4
    %s20 = sphi 0, %s22
    %s23 = sphi 0, %s20
    %s24 = sphi 0, %s23
    %s40 = sphi 0, %s24
    %s44 = sphi 0, %s44
    %s46 = sphi 0, %s44
    %s47 = sphi 0, %s46
    %s61 = sphi 0, %s47
    %s65 = sphi 0, %s65
    %s67 = sphi 0, %s65
    %s68 = sphi 0, %s67
    %s82 = sphi 0, %s68
    %s86 = sphi 0, %s86
    %s88 = sphi 0, %s86
    %s89 = sphi 0, %s88
    %s103 = sphi 0, %s89
    %s109 = sphi 0, %s111
    %s112 = sphi 0, %s109
    %s113 = sphi 0, %s112
    %s129 = sphi 0, %s113
  $region4: #{base_encoder_forward.2} parent=0 // loop_header_branch
    %13 = sbr.rel (%p11) target = $region8
  $region5: #{base_encoder_forward.2} parent=0 // loop_body
    %s15 = ssub.s32 %s10, 1
    %s16 = ssub.s32 %s10, 2
    %s17 = sadd.s32 %s10, 1
    %s18 = ssub.s32 %s10, %s17
    %p19 = scmp.eq.s32.totalorder %s18, 0
    %s21 = sadd.s32 %s20, 1
    %s22 = scalar_select %p19, %s20, %s21
    %p25 = pneg %p19
    %p26 = scmp.eq.s32.totalorder %s10, 1
    %p27 = por %p25, %p26
    %p28 = scmp.ne.s32.totalorder %s20, %s23
    %p29 = scmp.eq.s32.totalorder %s10, 0
    %p30 = por %p28, %p29
    %p31 = scmp.ne.s32.totalorder %s20, %s23
    %p32 = scmp.eq.s32.totalorder %s15, 1
    %p33 = por %p31, %p32
    %p34 = scmp.ne.s32.totalorder %s23, %s24
    %p35 = scmp.eq.s32.totalorder %s15, 0
    %p36 = por %p34, %p35
    %p37 = scmp.ne.s32.totalorder %s23, %s24
    %p38 = scmp.eq.s32.totalorder %s16, 1
    %p39 = por %p37, %p38
    %p41 = scmp.ne.s32.totalorder %s24, %s40
    %p42 = scmp.eq.s32.totalorder %s16, 0
    %p43 = por %p41, %p42
    %s45 = sadd.s32 %s44, 1
    %p48 = scmp.eq.s32.totalorder %s10, 1
    %p49 = scmp.ne.s32.totalorder %s44, %s46
    %p50 = scmp.eq.s32.totalorder %s10, 0
    %p51 = por %p49, %p50
    %p52 = scmp.ne.s32.totalorder %s44, %s46
    %p53 = scmp.eq.s32.totalorder %s15, 1
    %p54 = por %p52, %p53
    %p55 = scmp.ne.s32.totalorder %s46, %s47
    %p56 = scmp.eq.s32.totalorder %s15, 0
    %p57 = por %p55, %p56
    %p58 = scmp.ne.s32.totalorder %s46, %s47
    %p59 = scmp.eq.s32.totalorder %s16, 1
    %p60 = por %p58, %p59
    %p62 = scmp.ne.s32.totalorder %s47, %s61
    %p63 = scmp.eq.s32.totalorder %s16, 0
    %p64 = por %p62, %p63
    %s66 = sadd.s32 %s65, 1
    %p69 = scmp.eq.s32.totalorder %s10, 1
    %p70 = scmp.ne.s32.totalorder %s65, %s67
    %p71 = scmp.eq.s32.totalorder %s10, 0
    %p72 = por %p70, %p71
    %p73 = scmp.ne.s32.totalorder %s65, %s67
    %p74 = scmp.eq.s32.totalorder %s15, 1
    %p75 = por %p73, %p74
    %p76 = scmp.ne.s32.totalorder %s67, %s68
    %p77 = scmp.eq.s32.totalorder %s15, 0
    %p78 = por %p76, %p77
    %p79 = scmp.ne.s32.totalorder %s67, %s68
    %p80 = scmp.eq.s32.totalorder %s16, 1
    %p81 = por %p79, %p80
    %p83 = scmp.ne.s32.totalorder %s68, %s82
    %p84 = scmp.eq.s32.totalorder %s16, 0
    %p85 = por %p83, %p84
    %s87 = sadd.s32 %s86, 1
    %p90 = scmp.eq.s32.totalorder %s10, 1
    %p91 = scmp.ne.s32.totalorder %s86, %s88
    %p92 = scmp.eq.s32.totalorder %s10, 0
    %p93 = por %p91, %p92
    %p94 = scmp.ne.s32.totalorder %s86, %s88
    %p95 = scmp.eq.s32.totalorder %s15, 1
    %p96 = por %p94, %p95
    %p97 = scmp.ne.s32.totalorder %s88, %s89
    %p98 = scmp.eq.s32.totalorder %s15, 0
    %p99 = por %p97, %p98
    %p100 = scmp.ne.s32.totalorder %s88, %s89
    %p101 = scmp.eq.s32.totalorder %s16, 1
    %p102 = por %p100, %p101
    %p104 = scmp.ne.s32.totalorder %s89, %s103
    %p105 = scmp.eq.s32.totalorder %s16, 0
    %p106 = por %p104, %p105
    %s107 = ssub.s32 %s10, %s17
    %p108 = scmp.eq.s32.totalorder %s107, 0
    %s110 = sadd.s32 %s109, 1
    %s111 = scalar_select %p108, %s109, %s110
    %p114 = pneg %p108
    %p115 = scmp.eq.s32.totalorder %s10, 1
    %p116 = por %p114, %p115
    %p117 = scmp.ne.s32.totalorder %s109, %s112
    %p118 = scmp.eq.s32.totalorder %s10, 0
    %p119 = por %p117, %p118
    %p120 = scmp.ne.s32.totalorder %s109, %s112
    %p121 = scmp.eq.s32.totalorder %s15, 1
    %p122 = por %p120, %p121
    %p123 = scmp.ne.s32.totalorder %s112, %s113
    %p124 = scmp.eq.s32.totalorder %s15, 0
    %p125 = por %p123, %p124
    %p126 = scmp.ne.s32.totalorder %s112, %s113
    %p127 = scmp.eq.s32.totalorder %s16, 1
    %p128 = por %p126, %p127
    %p130 = scmp.ne.s32.totalorder %s113, %s129
    %p131 = scmp.eq.s32.totalorder %s16, 0
    %p132 = por %p130, %p131
    %p133 = scmp.le.s32.totalorder 1, %s10
    %p134 = scmp.lt.s32.totalorder %s10, 3
    %p135 = pnand %p133, %p134
    %p136 = pneg %p135
    // Predicated region
    $region9: #{base_encoder_forward.2} parent=5 // pred_check
      _
    $region10: #{base_encoder_forward.2} parent=5 // pred_check_branch
      %138 = sbr.rel (%p135) target = $region12
    $region11: #{base_encoder_forward.2} parent=5 // pred_region
      %s139 = ssub.s32 %s10, 1
      // Predicated region
      $region13: #{base_encoder_forward.2} parent=11 // pred_check
        %p140 = pneg %p57
      $region14: #{base_encoder_forward.2} parent=11 // pred_check_branch
        %142 = sbr.rel (%p140) target = $region16
      $region15: #{base_encoder_forward.2} parent=11 // pred_region
        _
      $region16: #{base_encoder_forward.2} parent=11 // pred_fallthru
        _
      // Predicated region
      $region17: #{base_encoder_forward.2} parent=11 // pred_check
        %p143 = pneg %p78
      $region18: #{base_encoder_forward.2} parent=11 // pred_check_branch
        %145 = sbr.rel (%p143) target = $region20
      $region19: #{base_encoder_forward.2} parent=11 // pred_region
        _
      $region20: #{base_encoder_forward.2} parent=11 // pred_fallthru
        _
      // Predicated region
      $region21: #{base_encoder_forward.2} parent=11 // pred_check
        %p146 = pneg %p99
      $region22: #{base_encoder_forward.2} parent=11 // pred_check_branch
        %148 = sbr.rel (%p146) target = $region24
      $region23: #{base_encoder_forward.2} parent=11 // pred_region
        _
      $region24: #{base_encoder_forward.2} parent=11 // pred_fallthru
        _
    $region12: #{base_encoder_forward.2} parent=5 // pred_fallthru
      _
    %p149 = scmp.lt.s32.totalorder %s10, 2
    // Predicated region
    $region25: #{base_encoder_forward.2} parent=5 // pred_check
      %p150 = pneg %p149
    $region26: #{base_encoder_forward.2} parent=5 // pred_check_branch
      %152 = sbr.rel (%p150) target = $region28
    $region27: #{base_encoder_forward.2} parent=5 // pred_region
      // Predicated region
      $region29: #{base_encoder_forward.2} parent=27 // pred_check
        %p153 = pneg %p30
      $region30: #{base_encoder_forward.2} parent=27 // pred_check_branch
        %155 = sbr.rel (%p153) target = $region32
      $region31: #{base_encoder_forward.2} parent=27 // pred_region
        %s156 = smul.u32 4, %s10
        %p157 = scmp.lt.s32.totalorder %s156, 7
        %s158 = scalar_select %p157, %s156, 7
        %s159 = smul.addr %s158, 8
        %s160 = scalar_lea.vmem %s0, %s159
        %s161 = smul.u32 4, %s10
      $region32: #{base_encoder_forward.2} parent=27 // pred_fallthru
        _
    $region28: #{base_encoder_forward.2} parent=5 // pred_fallthru
      _
    %p162 = scmp.le.s32.totalorder 1, %s10
    %p163 = scmp.lt.s32.totalorder %s10, 3
    %p164 = pnand %p162, %p163
    %p165 = pneg %p164
    // Predicated region
    $region33: #{base_encoder_forward.2} parent=5 // pred_check
      _
    $region34: #{base_encoder_forward.2} parent=5 // pred_check_branch
      %167 = sbr.rel (%p164) target = $region36
    $region35: #{base_encoder_forward.2} parent=5 // pred_region
      %s168 = ssub.s32 %s10, 1
      %s169 = smul.u32 4, %s15
      %p170 = scmp.lt.s32.totalorder %s169, 7
      %s171 = scalar_select %p170, %s169, 7
      %s172 = smul.addr %s171, 8
      %s173 = scalar_lea.vmem %s0, %s172
      %p174 = pneg %p36
      %p175 = pneg %p33
      %p176 = pneg %p57
      %p177 = pneg %p54
      %p178 = pneg %p78
      %p179 = pneg %p75
      %p180 = pneg %p99
      %p181 = pneg %p96
      %p182 = pneg %p125
      %p183 = pneg %p122
      %s184 = smul.u32 4, %s15
      %p185 = scmp.lt.s32.totalorder %s184, 7
      %s186 = scalar_select %p185, %s184, 7
      %s187 = smul.addr %s186, 8
      %s188 = scalar_lea.vmem %s4, %s187
      %s189 = smul.u32 4, %s15
      %p190 = scmp.lt.s32.totalorder %s189, 7
      %s191 = scalar_select %p190, %s189, 7
      %s192 = smul.addr %s191, 8
      %s193 = scalar_lea.vmem %s0, %s192
      %s194 = smul.u32 4, %s15
      %s195 = smul.u32 4, %s15
      %p196 = scmp.lt.s32.totalorder %s195, 7
      %s197 = scalar_select %p196, %s195, 7
      %s198 = smul.addr %s197, 8
      %s199 = scalar_lea.vmem %s4, %s198
      %s200 = smul.u32 4, %s15
      %v202 = vld [vmem:[%s193] sm:$0xff]
      %v203 = vpack.c.bf16 %v202, %v202
      %v204 = vld [vmem:[%s1] sm:$0xf]
      %v205 = vld [vmem:[%s1 + $0x4] sm:$0xf]
      %v206 = vld [vmem:[%s2] sm:$0x1]
      %v208 = vlaneseq
      %v209 = vshrl.u32 %v208, 7
      %v210 = vsub.s32 0, %v209
      %v211 = vrot.slane %v206, %v210
      %v215 = vunpack.c.l.b16 %v204
      %v216 = vunpack.c.l.b16 %v205
      %v217 = vpack.c.b16 %v216, %v215
      %vm219 = vcmask 130048
      %v221 = vsel %vm219, %v203, 0
      %223 = vmatprep.subr.bf16.mxu0 0
      %224 = vmatpush1.bf16.msra.mxu0 %v217
      %225 = vmatprep.subr.bf16.mxu0 0
      %226 = vmatpush1.bf16.msra.mxu0 0
      %227 = vmatprep.subr.bf16.mxu0 0
      %228 = vmatpush1.bf16.msra.mxu0 0
      %229 = vmatprep.subr.bf16.mxu0 0
      %230 = vmatpush1.bf16.msra.mxu0 0
      %231 = vmatprep.subr.bf16.mxu0 0
      %232 = vmatpush1.bf16.msra.mxu0 0
      %233 = vmatprep.subr.bf16.mxu0 0
      %234 = vmatpush1.bf16.msra.mxu0 0
      %235 = vmatprep.subr.bf16.mxu0 0
      %236 = vmatpush1.bf16.msra.mxu0 0
      %237 = vmatprep.subr.bf16.mxu0 0
      %238 = vmatpush1.bf16.msra.mxu0 0
      %239 = vmatprep.subr.bf16.mxu0 0
      %240 = vmatpush1.bf16.msra.mxu0 0
      %241 = vmatprep.subr.bf16.mxu0 0
      %242 = vmatpush1.bf16.msra.mxu0 0
      %243 = vmatprep.subr.bf16.mxu0 0
      %244 = vmatpush1.bf16.msra.mxu0 0
      %245 = vmatprep.subr.bf16.mxu0 0
      %246 = vmatpush1.bf16.msra.mxu0 0
      %247 = vmatprep.subr.bf16.mxu0 0
      %248 = vmatpush1.bf16.msra.mxu0 0
      %249 = vmatprep.subr.bf16.mxu0 0
      %250 = vmatpush1.bf16.msra.mxu0 0
      %251 = vmatprep.subr.bf16.mxu0 0
      %252 = vmatpush1.bf16.msra.mxu0 0
      %253 = vmatprep.subr.bf16.mxu0 0
      %254 = vmatpush1.bf16.msra.mxu0 0
      %255 = vmatprep.mubr.bf16.mxu0 0
      %256 = vmatmul.mubr.bf16.gmra.mrb[0].mxu0 %v221
      %v257 = vpop.f32.mrb[0].mxu0
      %v258 = vadd.f32 %v211, %v257
      %v259 = vpop.f32.mrb[0].mxu0
      %v260 = vpop.f32.mrb[0].mxu0
      %v261 = vpop.f32.mrb[0].mxu0
      %262 = vdwg.mxu0
      %v263 = vld [vmem:[%s3] sm:$0xff]
      %v264 = vadd.f32 %v258, %v263
      %vm265 = vcmask 261120
      %266 = vst.msk [vmem:[%s199] sm:$0xff] %vm265, %v264
      %s267 = scalar_lea.vmem %s193, 8
      %v268 = vld [vmem:[%s267] sm:$0xff]
      %v269 = vpack.c.bf16 %v268, %v268
      %v270 = vld [vmem:[%s1] sm:$0xf]
      %v271 = vld [vmem:[%s1 + $0x4] sm:$0xf]
      %v272 = vld [vmem:[%s2] sm:$0x1]
      %v274 = vlaneseq
      %v275 = vshrl.u32 %v274, 7
      %v276 = vsub.s32 0, %v275
      %v277 = vrot.slane %v272, %v276
      %v281 = vunpack.c.l.b16 %v270
      %v282 = vunpack.c.l.b16 %v271
      %v283 = vpack.c.b16 %v282, %v281
      %v286 = vsel %vm219, %v269, 0
      %288 = vmatprep.subr.bf16.mxu0 0
      %289 = vmatpush1.bf16.msra.mxu0 %v283
      %290 = vmatprep.subr.bf16.mxu0 0
      %291 = vmatpush1.bf16.msra.mxu0 0
      %292 = vmatprep.subr.bf16.mxu0 0
      %293 = vmatpush1.bf16.msra.mxu0 0
      %294 = vmatprep.subr.bf16.mxu0 0
      %295 = vmatpush1.bf16.msra.mxu0 0
      %296 = vmatprep.subr.bf16.mxu0 0
      %297 = vmatpush1.bf16.msra.mxu0 0
      %298 = vmatprep.subr.bf16.mxu0 0
      %299 = vmatpush1.bf16.msra.mxu0 0
      %300 = vmatprep.subr.bf16.mxu0 0
      %301 = vmatpush1.bf16.msra.mxu0 0
      %302 = vmatprep.subr.bf16.mxu0 0
      %303 = vmatpush1.bf16.msra.mxu0 0
      %304 = vmatprep.subr.bf16.mxu0 0
      %305 = vmatpush1.bf16.msra.mxu0 0
      %306 = vmatprep.subr.bf16.mxu0 0
      %307 = vmatpush1.bf16.msra.mxu0 0
      %308 = vmatprep.subr.bf16.mxu0 0
      %309 = vmatpush1.bf16.msra.mxu0 0
      %310 = vmatprep.subr.bf16.mxu0 0
      %311 = vmatpush1.bf16.msra.mxu0 0
      %312 = vmatprep.subr.bf16.mxu0 0
      %313 = vmatpush1.bf16.msra.mxu0 0
      %314 = vmatprep.subr.bf16.mxu0 0
      %315 = vmatpush1.bf16.msra.mxu0 0
      %316 = vmatprep.subr.bf16.mxu0 0
      %317 = vmatpush1.bf16.msra.mxu0 0
      %318 = vmatprep.subr.bf16.mxu0 0
      %319 = vmatpush1.bf16.msra.mxu0 0
      %320 = vmatprep.mubr.bf16.mxu0 0
      %321 = vmatmul.mubr.bf16.gmra.mrb[0].mxu0 %v286
      %v322 = vpop.f32.mrb[0].mxu0
      %v323 = vadd.f32 %v277, %v322
      %v324 = vpop.f32.mrb[0].mxu0
      %v325 = vpop.f32.mrb[0].mxu0
      %v326 = vpop.f32.mrb[0].mxu0
      %327 = vdwg.mxu0
      %v328 = vld [vmem:[%s3] sm:$0xff]
      %v329 = vadd.f32 %v323, %v328
      %330 = vst.msk [vmem:[%s199 + $0x8] sm:$0xff] %vm265, %v329
      %s331 = scalar_lea.vmem %s193, 16
      %v332 = vld [vmem:[%s331] sm:$0xff]
      %v333 = vpack.c.bf16 %v332, %v332
      %v334 = vld [vmem:[%s1] sm:$0xf]
      %v335 = vld [vmem:[%s1 + $0x4] sm:$0xf]
      %v336 = vld [vmem:[%s2] sm:$0x1]
      %v338 = vlaneseq
      %v339 = vshrl.u32 %v338, 7
      %v340 = vsub.s32 0, %v339
      %v341 = vrot.slane %v336, %v340
      %v345 = vunpack.c.l.b16 %v334
      %v346 = vunpack.c.l.b16 %v335
      %v347 = vpack.c.b16 %v346, %v345
      %v350 = vsel %vm219, %v333, 0
      %352 = vmatprep.subr.bf16.mxu0 0
      %353 = vmatpush1.bf16.msra.mxu0 %v347
      %354 = vmatprep.subr.bf16.mxu0 0
      %355 = vmatpush1.bf16.msra.mxu0 0
      %356 = vmatprep.subr.bf16.mxu0 0
      %357 = vmatpush1.bf16.msra.mxu0 0
      %358 = vmatprep.subr.bf16.mxu0 0
      %359 = vmatpush1.bf16.msra.mxu0 0
      %360 = vmatprep.subr.bf16.mxu0 0
      %361 = vmatpush1.bf16.msra.mxu0 0
      %362 = vmatprep.subr.bf16.mxu0 0
      %363 = vmatpush1.bf16.msra.mxu0 0
      %364 = vmatprep.subr.bf16.mxu0 0
      %365 = vmatpush1.bf16.msra.mxu0 0
      %366 = vmatprep.subr.bf16.mxu0 0
      %367 = vmatpush1.bf16.msra.mxu0 0
      %368 = vmatprep.subr.bf16.mxu0 0
      %369 = vmatpush1.bf16.msra.mxu0 0
      %370 = vmatprep.subr.bf16.mxu0 0
      %371 = vmatpush1.bf16.msra.mxu0 0
      %372 = vmatprep.subr.bf16.mxu0 0
      %373 = vmatpush1.bf16.msra.mxu0 0
      %374 = vmatprep.subr.bf16.mxu0 0
      %375 = vmatpush1.bf16.msra.mxu0 0
      %376 = vmatprep.subr.bf16.mxu0 0
      %377 = vmatpush1.bf16.msra.mxu0 0
      %378 = vmatprep.subr.bf16.mxu0 0
      %379 = vmatpush1.bf16.msra.mxu0 0
      %380 = vmatprep.subr.bf16.mxu0 0
      %381 = vmatpush1.bf16.msra.mxu0 0
      %382 = vmatprep.subr.bf16.mxu0 0
      %383 = vmatpush1.bf16.msra.mxu0 0
      %384 = vmatprep.mubr.bf16.mxu0 0
      %385 = vmatmul.mubr.bf16.gmra.mrb[0].mxu0 %v350
      %v386 = vpop.f32.mrb[0].mxu0
      %v387 = vadd.f32 %v341, %v386
      %v388 = vpop.f32.mrb[0].mxu0
      %v389 = vpop.f32.mrb[0].mxu0
      %v390 = vpop.f32.mrb[0].mxu0
      %391 = vdwg.mxu0
      %v392 = vld [vmem:[%s3] sm:$0xff]
      %v393 = vadd.f32 %v387, %v392
      %394 = vst.msk [vmem:[%s199 + $0x10] sm:$0xff] %vm265, %v393
      %s395 = scalar_lea.vmem %s193, 24
      %v396 = vld [vmem:[%s395] sm:$0xff]
      %v397 = vpack.c.bf16 %v396, %v396
      %v398 = vld [vmem:[%s1] sm:$0xf]
      %v399 = vld [vmem:[%s1 + $0x4] sm:$0xf]
      %v400 = vld [vmem:[%s2] sm:$0x1]
      %v402 = vlaneseq
      %v403 = vshrl.u32 %v402, 7
      %v404 = vsub.s32 0, %v403
      %v405 = vrot.slane %v400, %v404
      %v409 = vunpack.c.l.b16 %v398
      %v410 = vunpack.c.l.b16 %v399
      %v411 = vpack.c.b16 %v410, %v409
      %v414 = vsel %vm219, %v397, 0
      %416 = vmatprep.subr.bf16.mxu0 0
      %417 = vmatpush1.bf16.msra.mxu0 %v411
      %418 = vmatprep.subr.bf16.mxu0 0
      %419 = vmatpush1.bf16.msra.mxu0 0
      %420 = vmatprep.subr.bf16.mxu0 0
      %421 = vmatpush1.bf16.msra.mxu0 0
      %422 = vmatprep.subr.bf16.mxu0 0
      %423 = vmatpush1.bf16.msra.mxu0 0
      %424 = vmatprep.subr.bf16.mxu0 0
      %425 = vmatpush1.bf16.msra.mxu0 0
      %426 = vmatprep.subr.bf16.mxu0 0
      %427 = vmatpush1.bf16.msra.mxu0 0
      %428 = vmatprep.subr.bf16.mxu0 0
      %429 = vmatpush1.bf16.msra.mxu0 0
      %430 = vmatprep.subr.bf16.mxu0 0
      %431 = vmatpush1.bf16.msra.mxu0 0
      %432 = vmatprep.subr.bf16.mxu0 0
      %433 = vmatpush1.bf16.msra.mxu0 0
      %434 = vmatprep.subr.bf16.mxu0 0
      %435 = vmatpush1.bf16.msra.mxu0 0
      %436 = vmatprep.subr.bf16.mxu0 0
      %437 = vmatpush1.bf16.msra.mxu0 0
      %438 = vmatprep.subr.bf16.mxu0 0
      %439 = vmatpush1.bf16.msra.mxu0 0
      %440 = vmatprep.subr.bf16.mxu0 0
      %441 = vmatpush1.bf16.msra.mxu0 0
      %442 = vmatprep.subr.bf16.mxu0 0
      %443 = vmatpush1.bf16.msra.mxu0 0
      %444 = vmatprep.subr.bf16.mxu0 0
      %445 = vmatpush1.bf16.msra.mxu0 0
      %446 = vmatprep.subr.bf16.mxu0 0
      %447 = vmatpush1.bf16.msra.mxu0 0
      %448 = vmatprep.mubr.bf16.mxu0 0
      %449 = vmatmul.mubr.bf16.gmra.mrb[0].mxu0 %v414
      %v450 = vpop.f32.mrb[0].mxu0
      %v451 = vadd.f32 %v405, %v450
      %v452 = vpop.f32.mrb[0].mxu0
      %v453 = vpop.f32.mrb[0].mxu0
      %v454 = vpop.f32.mrb[0].mxu0
      %455 = vdwg.mxu0
      %v456 = vld [vmem:[%s3] sm:$0xff]
      %v457 = vadd.f32 %v451, %v456
      %458 = vst.msk [vmem:[%s199 + $0x18] sm:$0xff] %vm265, %v457
      %s459 = smul.u32 4, %s15
      %p460 = scmp.lt.s32.totalorder %s459, 7
      %s461 = scalar_select %p460, %s459, 7
      %s462 = smul.addr %s461, 8
      %s463 = scalar_lea.vmem %s4, %s462
      // Predicated region
      $region37: #{base_encoder_forward.2} parent=35 // pred_check
        %p464 = pneg %p122
      $region38: #{base_encoder_forward.2} parent=35 // pred_check_branch
        %466 = sbr.rel (%p464) target = $region40
      $region39: #{base_encoder_forward.2} parent=35 // pred_region
        %s467 = smul.u32 4, %s15
      $region40: #{base_encoder_forward.2} parent=35 // pred_fallthru
        _
    $region36: #{base_encoder_forward.2} parent=5 // pred_fallthru
      _
    %p468 = scmp.le.s32.totalorder 2, %s10
    // Predicated region
    $region41: #{base_encoder_forward.2} parent=5 // pred_check
      %p469 = pneg %p468
    $region42: #{base_encoder_forward.2} parent=5 // pred_check_branch
      %471 = sbr.rel (%p469) target = $region44
    $region43: #{base_encoder_forward.2} parent=5 // pred_region
      %s472 = ssub.s32 %s10, 2
      // Predicated region
      $region45: #{base_encoder_forward.2} parent=43 // pred_check
        %p473 = pneg %p128
      $region46: #{base_encoder_forward.2} parent=43 // pred_check_branch
        %475 = sbr.rel (%p473) target = $region48
      $region47: #{base_encoder_forward.2} parent=43 // pred_region
        %s476 = smul.u32 4, %s16
        %p477 = scmp.lt.s32.totalorder %s476, 7
        %s478 = scalar_select %p477, %s476, 7
        %s479 = smul.addr %s478, 8
        %s480 = scalar_lea.vmem %s4, %s479
      $region48: #{base_encoder_forward.2} parent=43 // pred_fallthru
        _
    $region44: #{base_encoder_forward.2} parent=5 // pred_fallthru
      _
  $region6: #{base_encoder_forward.2} parent=0 // loop_footer
    %s14 = sadd.s32 1, %s10
  $region7: #{base_encoder_forward.2} parent=0 // loop_footer_branch
    %9 = sbr.rel target = $region3
  $region8: #{base_encoder_forward.2} parent=0 // loop_exit
    _

// kernel: base_encoder_forward.3
$region0: #{base_encoder_forward.3}
  #allocation0 [shape = 'u32[]', space=smem, size = 0x4, offset = 0x4, fixed_abs, tag = 'smem constant byte address 0x4 - core index']
  #allocation1 [shape = 'u32[144,128]{1,0:T(1,128)}', space=vmem, size = 0x12000, scoped, tag = 'internal scratch']
  #allocation2 [shape = 'f32[32,32]{1,0:T(8,128)}', space=vmem, size = 0x4000, scoped, tag = 'scratch operand']
  %s0 = inlined_call_operand.vmem [shape: f32[64,32], index: 0, kind: input, shape index: {}]
  %s1 = inlined_call_operand.vmem [shape: bf16[2,32,96], index: 1, kind: input, shape index: {}]
  %s2 = inlined_call_operand.vmem [shape: f32[2,1,96], index: 2, kind: input, shape index: {}]
  %s3 = inlined_call_operand.vmem [shape: bf16[2,32,32], index: 3, kind: input, shape index: {}]
  %s4 = inlined_call_operand.vmem [shape: f32[2,1,32], index: 4, kind: input, shape index: {}]
  %s5 = inlined_call_operand.vmem [shape: bf16[2,32,128], index: 5, kind: input, shape index: {}]
  %s6 = inlined_call_operand.vmem [shape: f32[2,1,128], index: 6, kind: input, shape index: {}]
  %s7 = inlined_call_operand.vmem [shape: bf16[2,128,32], index: 7, kind: input, shape index: {}]
  %s8 = inlined_call_operand.vmem [shape: f32[2,1,32], index: 8, kind: input, shape index: {}]
  %s9 = inlined_call_operand.vmem [shape: f32[2,1,32], index: 9, kind: input, shape index: {}]
  %s10 = inlined_call_operand.vmem [shape: f32[2,1,32], index: 10, kind: input, shape index: {}]
  %s11 = inlined_call_operand.vmem [shape: f32[2,1,32], index: 11, kind: input, shape index: {}]
  %s12 = inlined_call_operand.vmem [shape: f32[2,1,32], index: 12, kind: input, shape index: {}]
  %s13 = inlined_call_operand.hbm [shape: f32[2,4,32], index: 13, kind: output, shape index: {}]
  %s14 = sld [smem:[#allocation0]]
  $region93: #{base_encoder_forward.3} parent=0
    _
  %s16 = ssub.s32 1, %s14
  %s17 = scalar_select 0, %s16, %s14
  $region1: #{base_encoder_forward.3} parent=0
    #allocation3 [shape = 'u8[4096]{0}', space=vmem, size = 0x1000, scoped, tag = 'output window, operand 0']
    #allocation4 [shape = 's32[2]{0}', space=sflag, size = 0x8, scoped, tag = 'scoped memory for base_encoder_forward.3']
    %18 = vsyncpa [#allocation4], 0
    %s19 = scalar_lea.sflag [#allocation4], 1
    %20 = vsyncpa %s19, 0
    loop: start=0, step=1, limit=6
    $region2: #{base_encoder_forward.3} parent=1 // loop_pre_header
      _
    $region3: #{base_encoder_forward.3} parent=1 // loop_header
      %s22 = sphi 0, %s26
      %p23 = scmp.ge.s32.totalorder %s22, 6
      %s29 = sphi 0, %s41
      %s30 = sphi 0, %s37
      %s31 = sphi 0, %s29
      %s32 = sphi 0, %s30
      %s33 = sphi 0, %s31
      %s34 = sphi 0, %s32
      %s44 = sphi 0, %s46
      %s47 = sphi 0, %s44
      %s48 = sphi 0, %s47
      %s64 = sphi 0, %s48
      %s70 = sphi 0, %s72
      %s73 = sphi 0, %s70
      %s74 = sphi 0, %s73
      %s90 = sphi 0, %s74
      %s96 = sphi 0, %s98
      %s99 = sphi 0, %s96
      %s100 = sphi 0, %s99
      %s116 = sphi 0, %s100
      %s122 = sphi 0, %s124
      %s125 = sphi 0, %s122
      %s126 = sphi 0, %s125
      %s142 = sphi 0, %s126
      %s148 = sphi 0, %s150
      %s151 = sphi 0, %s148
      %s152 = sphi 0, %s151
      %s168 = sphi 0, %s152
      %s174 = sphi 0, %s176
      %s177 = sphi 0, %s174
      %s178 = sphi 0, %s177
      %s194 = sphi 0, %s178
      %s200 = sphi 0, %s202
      %s203 = sphi 0, %s200
      %s204 = sphi 0, %s203
      %s220 = sphi 0, %s204
      %s226 = sphi 0, %s228
      %s229 = sphi 0, %s226
      %s230 = sphi 0, %s229
      %s246 = sphi 0, %s230
      %s252 = sphi 0, %s254
      %s255 = sphi 0, %s252
      %s256 = sphi 0, %s255
      %s272 = sphi 0, %s256
      %s278 = sphi 0, %s280
      %s281 = sphi 0, %s278
      %s282 = sphi 0, %s281
      %s298 = sphi 0, %s282
      %s304 = sphi 0, %s306
      %s307 = sphi 0, %s304
      %s308 = sphi 0, %s307
      %s324 = sphi 0, %s308
      %s330 = sphi 0, %s332
      %s333 = sphi 0, %s330
      %s334 = sphi 0, %s333
      %s350 = sphi 0, %s334
      %s356 = sphi 0, %s358
      %s359 = sphi 0, %s356
      %s360 = sphi 0, %s359
      %s376 = sphi 0, %s360
      %s382 = sphi 0, %s384
      %s385 = sphi 0, %s382
      %s386 = sphi 0, %s385
      %s402 = sphi 0, %s386
    $region4: #{base_encoder_forward.3} parent=1 // loop_header_branch
      %25 = sbr.rel (%p23) target = $region8
    $region5: #{base_encoder_forward.3} parent=1 // loop_body
      %s27 = ssub.s32 %s22, 1
      %s28 = ssub.s32 %s22, 2
      %s35 = sadd.s32 1, %s30
      %p36 = scmp.ge.s32.totalorder %s35, 2
      %s37 = scalar_select %p36, 0, %s35
      %s38 = sadd.s32 1, %s29
      %s39 = scalar_select %p36, %s38, %s29
      %p40 = scmp.ge.s32.totalorder %s39, 2
      %s41 = scalar_select %p40, 0, %s39
      %s42 = ssub.s32 %s29, %s41
      %p43 = scmp.eq.s32.totalorder %s42, 0
      %s45 = sadd.s32 %s44, 1
      %s46 = scalar_select %p43, %s44, %s45
      %p49 = pneg %p43
      %p50 = scmp.eq.s32.totalorder %s22, 3
      %p51 = por %p49, %p50
      %p52 = scmp.ne.s32.totalorder %s44, %s47
      %p53 = scmp.eq.s32.totalorder %s22, 0
      %p54 = por %p52, %p53
      %p55 = scmp.ne.s32.totalorder %s44, %s47
      %p56 = scmp.eq.s32.totalorder %s27, 3
      %p57 = por %p55, %p56
      %p58 = scmp.ne.s32.totalorder %s47, %s48
      %p59 = scmp.eq.s32.totalorder %s27, 0
      %p60 = por %p58, %p59
      %p61 = scmp.ne.s32.totalorder %s47, %s48
      %p62 = scmp.eq.s32.totalorder %s28, 3
      %p63 = por %p61, %p62
      %p65 = scmp.ne.s32.totalorder %s48, %s64
      %p66 = scmp.eq.s32.totalorder %s28, 0
      %p67 = por %p65, %p66
      %s68 = ssub.s32 %s30, %s37
      %p69 = scmp.eq.s32.totalorder %s68, 0
      %s71 = sadd.s32 %s70, 1
      %s72 = scalar_select %p69, %s70, %s71
      %p75 = pneg %p69
      %p76 = scmp.eq.s32.totalorder %s22, 3
      %p77 = por %p75, %p76
      %p78 = scmp.ne.s32.totalorder %s70, %s73
      %p79 = scmp.eq.s32.totalorder %s22, 0
      %p80 = por %p78, %p79
      %p81 = scmp.ne.s32.totalorder %s70, %s73
      %p82 = scmp.eq.s32.totalorder %s27, 3
      %p83 = por %p81, %p82
      %p84 = scmp.ne.s32.totalorder %s73, %s74
      %p85 = scmp.eq.s32.totalorder %s27, 0
      %p86 = por %p84, %p85
      %p87 = scmp.ne.s32.totalorder %s73, %s74
      %p88 = scmp.eq.s32.totalorder %s28, 3
      %p89 = por %p87, %p88
      %p91 = scmp.ne.s32.totalorder %s74, %s90
      %p92 = scmp.eq.s32.totalorder %s28, 0
      %p93 = por %p91, %p92
      %s94 = ssub.s32 %s30, %s37
      %p95 = scmp.eq.s32.totalorder %s94, 0
      %s97 = sadd.s32 %s96, 1
      %s98 = scalar_select %p95, %s96, %s97
      %p101 = pneg %p95
      %p102 = scmp.eq.s32.totalorder %s22, 3
      %p103 = por %p101, %p102
      %p104 = scmp.ne.s32.totalorder %s96, %s99
      %p105 = scmp.eq.s32.totalorder %s22, 0
      %p106 = por %p104, %p105
      %p107 = scmp.ne.s32.totalorder %s96, %s99
      %p108 = scmp.eq.s32.totalorder %s27, 3
      %p109 = por %p107, %p108
      %p110 = scmp.ne.s32.totalorder %s99, %s100
      %p111 = scmp.eq.s32.totalorder %s27, 0
      %p112 = por %p110, %p111
      %p113 = scmp.ne.s32.totalorder %s99, %s100
      %p114 = scmp.eq.s32.totalorder %s28, 3
      %p115 = por %p113, %p114
      %p117 = scmp.ne.s32.totalorder %s100, %s116
      %p118 = scmp.eq.s32.totalorder %s28, 0
      %p119 = por %p117, %p118
      %s120 = ssub.s32 %s30, %s37
      %p121 = scmp.eq.s32.totalorder %s120, 0
      %s123 = sadd.s32 %s122, 1
      %s124 = scalar_select %p121, %s122, %s123
      %p127 = pneg %p121
      %p128 = scmp.eq.s32.totalorder %s22, 3
      %p129 = por %p127, %p128
      %p130 = scmp.ne.s32.totalorder %s122, %s125
      %p131 = scmp.eq.s32.totalorder %s22, 0
      %p132 = por %p130, %p131
      %p133 = scmp.ne.s32.totalorder %s122, %s125
      %p134 = scmp.eq.s32.totalorder %s27, 3
      %p135 = por %p133, %p134
      %p136 = scmp.ne.s32.totalorder %s125, %s126
      %p137 = scmp.eq.s32.totalorder %s27, 0
      %p138 = por %p136, %p137
      %p139 = scmp.ne.s32.totalorder %s125, %s126
      %p140 = scmp.eq.s32.totalorder %s28, 3
      %p141 = por %p139, %p140
      %p143 = scmp.ne.s32.totalorder %s126, %s142
      %p144 = scmp.eq.s32.totalorder %s28, 0
      %p145 = por %p143, %p144
      %s146 = ssub.s32 %s30, %s37
      %p147 = scmp.eq.s32.totalorder %s146, 0
      %s149 = sadd.s32 %s148, 1
      %s150 = scalar_select %p147, %s148, %s149
      %p153 = pneg %p147
      %p154 = scmp.eq.s32.totalorder %s22, 3
      %p155 = por %p153, %p154
      %p156 = scmp.ne.s32.totalorder %s148, %s151
      %p157 = scmp.eq.s32.totalorder %s22, 0
      %p158 = por %p156, %p157
      %p159 = scmp.ne.s32.totalorder %s148, %s151
      %p160 = scmp.eq.s32.totalorder %s27, 3
      %p161 = por %p159, %p160
      %p162 = scmp.ne.s32.totalorder %s151, %s152
      %p163 = scmp.eq.s32.totalorder %s27, 0
      %p164 = por %p162, %p163
      %p165 = scmp.ne.s32.totalorder %s151, %s152
      %p166 = scmp.eq.s32.totalorder %s28, 3
      %p167 = por %p165, %p166
      %p169 = scmp.ne.s32.totalorder %s152, %s168
      %p170 = scmp.eq.s32.totalorder %s28, 0
      %p171 = por %p169, %p170
      %s172 = ssub.s32 %s30, %s37
      %p173 = scmp.eq.s32.totalorder %s172, 0
      %s175 = sadd.s32 %s174, 1
      %s176 = scalar_select %p173, %s174, %s175
      %p179 = pneg %p173
      %p180 = scmp.eq.s32.totalorder %s22, 3
      %p181 = por %p179, %p180
      %p182 = scmp.ne.s32.totalorder %s174, %s177
      %p183 = scmp.eq.s32.totalorder %s22, 0
      %p184 = por %p182, %p183
      %p185 = scmp.ne.s32.totalorder %s174, %s177
      %p186 = scmp.eq.s32.totalorder %s27, 3
      %p187 = por %p185, %p186
      %p188 = scmp.ne.s32.totalorder %s177, %s178
      %p189 = scmp.eq.s32.totalorder %s27, 0
      %p190 = por %p188, %p189
      %p191 = scmp.ne.s32.totalorder %s177, %s178
      %p192 = scmp.eq.s32.totalorder %s28, 3
      %p193 = por %p191, %p192
      %p195 = scmp.ne.s32.totalorder %s178, %s194
      %p196 = scmp.eq.s32.totalorder %s28, 0
      %p197 = por %p195, %p196
      %s198 = ssub.s32 %s30, %s37
      %p199 = scmp.eq.s32.totalorder %s198, 0
      %s201 = sadd.s32 %s200, 1
      %s202 = scalar_select %p199, %s200, %s201
      %p205 = pneg %p199
      %p206 = scmp.eq.s32.totalorder %s22, 3
      %p207 = por %p205, %p206
      %p208 = scmp.ne.s32.totalorder %s200, %s203
      %p209 = scmp.eq.s32.totalorder %s22, 0
      %p210 = por %p208, %p209
      %p211 = scmp.ne.s32.totalorder %s200, %s203
      %p212 = scmp.eq.s32.totalorder %s27, 3
      %p213 = por %p211, %p212
      %p214 = scmp.ne.s32.totalorder %s203, %s204
      %p215 = scmp.eq.s32.totalorder %s27, 0
      %p216 = por %p214, %p215
      %p217 = scmp.ne.s32.totalorder %s203, %s204
      %p218 = scmp.eq.s32.totalorder %s28, 3
      %p219 = por %p217, %p218
      %p221 = scmp.ne.s32.totalorder %s204, %s220
      %p222 = scmp.eq.s32.totalorder %s28, 0
      %p223 = por %p221, %p222
      %s224 = ssub.s32 %s30, %s37
      %p225 = scmp.eq.s32.totalorder %s224, 0
      %s227 = sadd.s32 %s226, 1
      %s228 = scalar_select %p225, %s226, %s227
      %p231 = pneg %p225
      %p232 = scmp.eq.s32.totalorder %s22, 3
      %p233 = por %p231, %p232
      %p234 = scmp.ne.s32.totalorder %s226, %s229
      %p235 = scmp.eq.s32.totalorder %s22, 0
      %p236 = por %p234, %p235
      %p237 = scmp.ne.s32.totalorder %s226, %s229
      %p238 = scmp.eq.s32.totalorder %s27, 3
      %p239 = por %p237, %p238
      %p240 = scmp.ne.s32.totalorder %s229, %s230
      %p241 = scmp.eq.s32.totalorder %s27, 0
      %p242 = por %p240, %p241
      %p243 = scmp.ne.s32.totalorder %s229, %s230
      %p244 = scmp.eq.s32.totalorder %s28, 3
      %p245 = por %p243, %p244
      %p247 = scmp.ne.s32.totalorder %s230, %s246
      %p248 = scmp.eq.s32.totalorder %s28, 0
      %p249 = por %p247, %p248
      %s250 = ssub.s32 %s30, %s37
      %p251 = scmp.eq.s32.totalorder %s250, 0
      %s253 = sadd.s32 %s252, 1
      %s254 = scalar_select %p251, %s252, %s253
      %p257 = pneg %p251
      %p258 = scmp.eq.s32.totalorder %s22, 3
      %p259 = por %p257, %p258
      %p260 = scmp.ne.s32.totalorder %s252, %s255
      %p261 = scmp.eq.s32.totalorder %s22, 0
      %p262 = por %p260, %p261
      %p263 = scmp.ne.s32.totalorder %s252, %s255
      %p264 = scmp.eq.s32.totalorder %s27, 3
      %p265 = por %p263, %p264
      %p266 = scmp.ne.s32.totalorder %s255, %s256
      %p267 = scmp.eq.s32.totalorder %s27, 0
      %p268 = por %p266, %p267
      %p269 = scmp.ne.s32.totalorder %s255, %s256
      %p270 = scmp.eq.s32.totalorder %s28, 3
      %p271 = por %p269, %p270
      %p273 = scmp.ne.s32.totalorder %s256, %s272
      %p274 = scmp.eq.s32.totalorder %s28, 0
      %p275 = por %p273, %p274
      %s276 = ssub.s32 %s30, %s37
      %p277 = scmp.eq.s32.totalorder %s276, 0
      %s279 = sadd.s32 %s278, 1
      %s280 = scalar_select %p277, %s278, %s279
      %p283 = pneg %p277
      %p284 = scmp.eq.s32.totalorder %s22, 3
      %p285 = por %p283, %p284
      %p286 = scmp.ne.s32.totalorder %s278, %s281
      %p287 = scmp.eq.s32.totalorder %s22, 0
      %p288 = por %p286, %p287
      %p289 = scmp.ne.s32.totalorder %s278, %s281
      %p290 = scmp.eq.s32.totalorder %s27, 3
      %p291 = por %p289, %p290
      %p292 = scmp.ne.s32.totalorder %s281, %s282
      %p293 = scmp.eq.s32.totalorder %s27, 0
      %p294 = por %p292, %p293
      %p295 = scmp.ne.s32.totalorder %s281, %s282
      %p296 = scmp.eq.s32.totalorder %s28, 3
      %p297 = por %p295, %p296
      %p299 = scmp.ne.s32.totalorder %s282, %s298
      %p300 = scmp.eq.s32.totalorder %s28, 0
      %p301 = por %p299, %p300
      %s302 = ssub.s32 %s30, %s37
      %p303 = scmp.eq.s32.totalorder %s302, 0
      %s305 = sadd.s32 %s304, 1
      %s306 = scalar_select %p303, %s304, %s305
      %p309 = pneg %p303
      %p310 = scmp.eq.s32.totalorder %s22, 3
      %p311 = por %p309, %p310
      %p312 = scmp.ne.s32.totalorder %s304, %s307
      %p313 = scmp.eq.s32.totalorder %s22, 0
      %p314 = por %p312, %p313
      %p315 = scmp.ne.s32.totalorder %s304, %s307
      %p316 = scmp.eq.s32.totalorder %s27, 3
      %p317 = por %p315, %p316
      %p318 = scmp.ne.s32.totalorder %s307, %s308
      %p319 = scmp.eq.s32.totalorder %s27, 0
      %p320 = por %p318, %p319
      %p321 = scmp.ne.s32.totalorder %s307, %s308
      %p322 = scmp.eq.s32.totalorder %s28, 3
      %p323 = por %p321, %p322
      %p325 = scmp.ne.s32.totalorder %s308, %s324
      %p326 = scmp.eq.s32.totalorder %s28, 0
      %p327 = por %p325, %p326
      %s328 = ssub.s32 %s30, %s37
      %p329 = scmp.eq.s32.totalorder %s328, 0
      %s331 = sadd.s32 %s330, 1
      %s332 = scalar_select %p329, %s330, %s331
      %p335 = pneg %p329
      %p336 = scmp.eq.s32.totalorder %s22, 3
      %p337 = por %p335, %p336
      %p338 = scmp.ne.s32.totalorder %s330, %s333
      %p339 = scmp.eq.s32.totalorder %s22, 0
      %p340 = por %p338, %p339
      %p341 = scmp.ne.s32.totalorder %s330, %s333
      %p342 = scmp.eq.s32.totalorder %s27, 3
      %p343 = por %p341, %p342
      %p344 = scmp.ne.s32.totalorder %s333, %s334
      %p345 = scmp.eq.s32.totalorder %s27, 0
      %p346 = por %p344, %p345
      %p347 = scmp.ne.s32.totalorder %s333, %s334
      %p348 = scmp.eq.s32.totalorder %s28, 3
      %p349 = por %p347, %p348
      %p351 = scmp.ne.s32.totalorder %s334, %s350
      %p352 = scmp.eq.s32.totalorder %s28, 0
      %p353 = por %p351, %p352
      %s354 = ssub.s32 %s30, %s37
      %p355 = scmp.eq.s32.totalorder %s354, 0
      %s357 = sadd.s32 %s356, 1
      %s358 = scalar_select %p355, %s356, %s357
      %p361 = pneg %p355
      %p362 = scmp.eq.s32.totalorder %s22, 3
      %p363 = por %p361, %p362
      %p364 = scmp.ne.s32.totalorder %s356, %s359
      %p365 = scmp.eq.s32.totalorder %s22, 0
      %p366 = por %p364, %p365
      %p367 = scmp.ne.s32.totalorder %s356, %s359
      %p368 = scmp.eq.s32.totalorder %s27, 3
      %p369 = por %p367, %p368
      %p370 = scmp.ne.s32.totalorder %s359, %s360
      %p371 = scmp.eq.s32.totalorder %s27, 0
      %p372 = por %p370, %p371
      %p373 = scmp.ne.s32.totalorder %s359, %s360
      %p374 = scmp.eq.s32.totalorder %s28, 3
      %p375 = por %p373, %p374
      %p377 = scmp.ne.s32.totalorder %s360, %s376
      %p378 = scmp.eq.s32.totalorder %s28, 0
      %p379 = por %p377, %p378
      %s380 = ssub.s32 %s29, %s41
      %p381 = scmp.eq.s32.totalorder %s380, 0
      %s383 = sadd.s32 %s382, 1
      %s384 = scalar_select %p381, %s382, %s383
      %p387 = pneg %p381
      %p388 = scmp.eq.s32.totalorder %s22, 3
      %p389 = por %p387, %p388
      %p390 = scmp.ne.s32.totalorder %s382, %s385
      %p391 = scmp.eq.s32.totalorder %s22, 0
      %p392 = por %p390, %p391
      %p393 = scmp.ne.s32.totalorder %s382, %s385
      %p394 = scmp.eq.s32.totalorder %s27, 3
      %p395 = por %p393, %p394
      %p396 = scmp.ne.s32.totalorder %s385, %s386
      %p397 = scmp.eq.s32.totalorder %s27, 0
      %p398 = por %p396, %p397
      %p399 = scmp.ne.s32.totalorder %s385, %s386
      %p400 = scmp.eq.s32.totalorder %s28, 3
      %p401 = por %p399, %p400
      %p403 = scmp.ne.s32.totalorder %s386, %s402
      %p404 = scmp.eq.s32.totalorder %s28, 0
      %p405 = por %p403, %p404
      %p406 = scmp.le.s32.totalorder 1, %s22
      %p407 = scmp.lt.s32.totalorder %s22, 5
      %p408 = pnand %p406, %p407
      %p409 = pneg %p408
      // Predicated region
      $region9: #{base_encoder_forward.3} parent=5 // pred_check
        _
      $region10: #{base_encoder_forward.3} parent=5 // pred_check_branch
        %411 = sbr.rel (%p408) target = $region12
      $region11: #{base_encoder_forward.3} parent=5 // pred_region
        %s412 = ssub.s32 %s22, 1
      $region12: #{base_encoder_forward.3} parent=5 // pred_fallthru
        _
      %p413 = scmp.lt.s32.totalorder %s22, 4
      // Predicated region
      $region13: #{base_encoder_forward.3} parent=5 // pred_check
        %p414 = pneg %p413
      $region14: #{base_encoder_forward.3} parent=5 // pred_check_branch
        %416 = sbr.rel (%p414) target = $region16
      $region15: #{base_encoder_forward.3} parent=5 // pred_region
        // Predicated region
        $region17: #{base_encoder_forward.3} parent=15 // pred_check
          %p417 = pneg %p54
        $region18: #{base_encoder_forward.3} parent=15 // pred_check_branch
          %419 = sbr.rel (%p417) target = $region20
        $region19: #{base_encoder_forward.3} parent=15 // pred_region
          %s420 = smul.u32 4, %s29
          %p421 = scmp.lt.s32.totalorder %s420, 7
          %s422 = scalar_select %p421, %s420, 7
          %s423 = smul.addr %s422, 8
          %s424 = scalar_lea.vmem %s0, %s423
          %s425 = smul.u32 4, %s29
        $region20: #{base_encoder_forward.3} parent=15 // pred_fallthru
          _
        // Predicated region
        $region21: #{base_encoder_forward.3} parent=15 // pred_check
          %p426 = pneg %p80
        $region22: #{base_encoder_forward.3} parent=15 // pred_check_branch
          %428 = sbr.rel (%p426) target = $region24
        $region23: #{base_encoder_forward.3} parent=15 // pred_region
          %p429 = scmp.lt.s32.totalorder %s30, 1
          %s430 = scalar_select %p429, %s30, 1
          %s431 = smul.addr %s430, 4
          %s432 = smul.addr %s431, 4
          %s433 = scalar_lea.vmem %s1, %s432
        $region24: #{base_encoder_forward.3} parent=15 // pred_fallthru
          _
        // Predicated region
        $region25: #{base_encoder_forward.3} parent=15 // pred_check
          %p434 = pneg %p106
        $region26: #{base_encoder_forward.3} parent=15 // pred_check_branch
          %436 = sbr.rel (%p434) target = $region28
        $region27: #{base_encoder_forward.3} parent=15 // pred_region
          %p437 = scmp.lt.s32.totalorder %s30, 1
          %s438 = scalar_select %p437, %s30, 1
          %s439 = scalar_lea.vmem %s2, %s438
        $region28: #{base_encoder_forward.3} parent=15 // pred_fallthru
          _
        // Predicated region
        $region29: #{base_encoder_forward.3} parent=15 // pred_check
          %p440 = pneg %p132
        $region30: #{base_encoder_forward.3} parent=15 // pred_check_branch
          %442 = sbr.rel (%p440) target = $region32
        $region31: #{base_encoder_forward.3} parent=15 // pred_region
          %p443 = scmp.lt.s32.totalorder %s30, 1
          %s444 = scalar_select %p443, %s30, 1
          %s445 = smul.addr %s444, 4
          %s446 = smul.addr %s445, 4
          %s447 = scalar_lea.vmem %s3, %s446
        $region32: #{base_encoder_forward.3} parent=15 // pred_fallthru
          _
        // Predicated region
        $region33: #{base_encoder_forward.3} parent=15 // pred_check
          %p448 = pneg %p158
        $region34: #{base_encoder_forward.3} parent=15 // pred_check_branch
          %450 = sbr.rel (%p448) target = $region36
        $region35: #{base_encoder_forward.3} parent=15 // pred_region
          %p451 = scmp.lt.s32.totalorder %s30, 1
          %s452 = scalar_select %p451, %s30, 1
          %s453 = scalar_lea.vmem %s4, %s452
        $region36: #{base_encoder_forward.3} parent=15 // pred_fallthru
          _
        // Predicated region
        $region37: #{base_encoder_forward.3} parent=15 // pred_check
          %p454 = pneg %p184
        $region38: #{base_encoder_forward.3} parent=15 // pred_check_branch
          %456 = sbr.rel (%p454) target = $region40
        $region39: #{base_encoder_forward.3} parent=15 // pred_region
          %p457 = scmp.lt.s32.totalorder %s30, 1
          %s458 = scalar_select %p457, %s30, 1
          %s459 = smul.addr %s458, 4
          %s460 = smul.addr %s459, 4
          %s461 = scalar_lea.vmem %s5, %s460
        $region40: #{base_encoder_forward.3} parent=15 // pred_fallthru
          _
        // Predicated region
        $region41: #{base_encoder_forward.3} parent=15 // pred_check
          %p462 = pneg %p210
        $region42: #{base_encoder_forward.3} parent=15 // pred_check_branch
          %464 = sbr.rel (%p462) target = $region44
        $region43: #{base_encoder_forward.3} parent=15 // pred_region
          %p465 = scmp.lt.s32.totalorder %s30, 1
          %s466 = scalar_select %p465, %s30, 1
          %s467 = scalar_lea.vmem %s6, %s466
        $region44: #{base_encoder_forward.3} parent=15 // pred_fallthru
          _
        // Predicated region
        $region45: #{base_encoder_forward.3} parent=15 // pred_check
          %p468 = pneg %p236
        $region46: #{base_encoder_forward.3} parent=15 // pred_check_branch
          %470 = sbr.rel (%p468) target = $region48
        $region47: #{base_encoder_forward.3} parent=15 // pred_region
          %p471 = scmp.lt.s32.totalorder %s30, 1
          %s472 = scalar_select %p471, %s30, 1
          %s473 = smul.addr %s472, 16
          %s474 = smul.addr %s473, 4
          %s475 = scalar_lea.vmem %s7, %s474
        $region48: #{base_encoder_forward.3} parent=15 // pred_fallthru
          _
        // Predicated region
        $region49: #{base_encoder_forward.3} parent=15 // pred_check
          %p476 = pneg %p262
        $region50: #{base_encoder_forward.3} parent=15 // pred_check_branch
          %478 = sbr.rel (%p476) target = $region52
        $region51: #{base_encoder_forward.3} parent=15 // pred_region
          %p479 = scmp.lt.s32.totalorder %s30, 1
          %s480 = scalar_select %p479, %s30, 1
          %s481 = scalar_lea.vmem %s8, %s480
        $region52: #{base_encoder_forward.3} parent=15 // pred_fallthru
          _
        // Predicated region
        $region53: #{base_encoder_forward.3} parent=15 // pred_check
          %p482 = pneg %p288
        $region54: #{base_encoder_forward.3} parent=15 // pred_check_branch
          %484 = sbr.rel (%p482) target = $region56
        $region55: #{base_encoder_forward.3} parent=15 // pred_region
          %p485 = scmp.lt.s32.totalorder %s30, 1
          %s486 = scalar_select %p485, %s30, 1
          %s487 = scalar_lea.vmem %s9, %s486
        $region56: #{base_encoder_forward.3} parent=15 // pred_fallthru
          _
        // Predicated region
        $region57: #{base_encoder_forward.3} parent=15 // pred_check
          %p488 = pneg %p314
        $region58: #{base_encoder_forward.3} parent=15 // pred_check_branch
          %490 = sbr.rel (%p488) target = $region60
        $region59: #{base_encoder_forward.3} parent=15 // pred_region
          %p491 = scmp.lt.s32.totalorder %s30, 1
          %s492 = scalar_select %p491, %s30, 1
          %s493 = scalar_lea.vmem %s10, %s492
        $region60: #{base_encoder_forward.3} parent=15 // pred_fallthru
          _
        // Predicated region
        $region61: #{base_encoder_forward.3} parent=15 // pred_check
          %p494 = pneg %p340
        $region62: #{base_encoder_forward.3} parent=15 // pred_check_branch
          %496 = sbr.rel (%p494) target = $region64
        $region63: #{base_encoder_forward.3} parent=15 // pred_region
          %p497 = scmp.lt.s32.totalorder %s30, 1
          %s498 = scalar_select %p497, %s30, 1
          %s499 = scalar_lea.vmem %s11, %s498
        $region64: #{base_encoder_forward.3} parent=15 // pred_fallthru
          _
        // Predicated region
        $region65: #{base_encoder_forward.3} parent=15 // pred_check
          %p500 = pneg %p366
        $region66: #{base_encoder_forward.3} parent=15 // pred_check_branch
          %502 = sbr.rel (%p500) target = $region68
        $region67: #{base_encoder_forward.3} parent=15 // pred_region
          %p503 = scmp.lt.s32.totalorder %s30, 1
          %s504 = scalar_select %p503, %s30, 1
          %s505 = scalar_lea.vmem %s12, %s504
        $region68: #{base_encoder_forward.3} parent=15 // pred_fallthru
          _
      $region16: #{base_encoder_forward.3} parent=5 // pred_fallthru
        _
      %p506 = scmp.le.s32.totalorder 1, %s22
      %p507 = scmp.lt.s32.totalorder %s22, 5
      %p508 = pnand %p506, %p507
      %p509 = pneg %p508
      // Predicated region
      $region69: #{base_encoder_forward.3} parent=5 // pred_check
        _
      $region70: #{base_encoder_forward.3} parent=5 // pred_check_branch
        %511 = sbr.rel (%p508) target = $region72
      $region71: #{base_encoder_forward.3} parent=5 // pred_region
        %s512 = ssub.s32 %s22, 1
        %s513 = smul.u32 4, %s31
        %p514 = scmp.lt.s32.totalorder %s513, 7
        %s515 = scalar_select %p514, %s513, 7
        %s516 = smul.addr %s515, 8
        %s517 = scalar_lea.vmem %s0, %s516
        %p518 = pneg %p60
        %p519 = pneg %p57
        %p520 = scmp.lt.s32.totalorder %s32, 1
        %s521 = scalar_select %p520, %s32, 1
        %s522 = smul.addr %s521, 4
        %s523 = smul.addr %s522, 4
        %s524 = scalar_lea.vmem %s1, %s523
        %p525 = pneg %p86
        %p526 = pneg %p83
        %p527 = scmp.lt.s32.totalorder %s32, 1
        %s528 = scalar_select %p527, %s32, 1
        %s529 = scalar_lea.vmem %s2, %s528
        %p530 = pneg %p112
        %p531 = pneg %p109
        %p532 = scmp.lt.s32.totalorder %s32, 1
        %s533 = scalar_select %p532, %s32, 1
        %s534 = smul.addr %s533, 4
        %s535 = smul.addr %s534, 4
        %s536 = scalar_lea.vmem %s3, %s535
        %p537 = pneg %p138
        %p538 = pneg %p135
        %p539 = scmp.lt.s32.totalorder %s32, 1
        %s540 = scalar_select %p539, %s32, 1
        %s541 = scalar_lea.vmem %s4, %s540
        %p542 = pneg %p164
        %p543 = pneg %p161
        %p544 = scmp.lt.s32.totalorder %s32, 1
        %s545 = scalar_select %p544, %s32, 1
        %s546 = smul.addr %s545, 4
        %s547 = smul.addr %s546, 4
        %s548 = scalar_lea.vmem %s5, %s547
        %p549 = pneg %p190
        %p550 = pneg %p187
        %p551 = scmp.lt.s32.totalorder %s32, 1
        %s552 = scalar_select %p551, %s32, 1
        %s553 = scalar_lea.vmem %s6, %s552
        %p554 = pneg %p216
        %p555 = pneg %p213
        %p556 = scmp.lt.s32.totalorder %s32, 1
        %s557 = scalar_select %p556, %s32, 1
        %s558 = smul.addr %s557, 16
        %s559 = smul.addr %s558, 4
        %s560 = scalar_lea.vmem %s7, %s559
        %p561 = pneg %p242
        %p562 = pneg %p239
        %p563 = scmp.lt.s32.totalorder %s32, 1
        %s564 = scalar_select %p563, %s32, 1
        %s565 = scalar_lea.vmem %s8, %s564
        %p566 = pneg %p268
        %p567 = pneg %p265
        %p568 = scmp.lt.s32.totalorder %s32, 1
        %s569 = scalar_select %p568, %s32, 1
        %s570 = scalar_lea.vmem %s9, %s569
        %p571 = pneg %p294
        %p572 = pneg %p291
        %p573 = scmp.lt.s32.totalorder %s32, 1
        %s574 = scalar_select %p573, %s32, 1
        %s575 = scalar_lea.vmem %s10, %s574
        %p576 = pneg %p320
        %p577 = pneg %p317
        %p578 = scmp.lt.s32.totalorder %s32, 1
        %s579 = scalar_select %p578, %s32, 1
        %s580 = scalar_lea.vmem %s11, %s579
        %p581 = pneg %p346
        %p582 = pneg %p343
        %p583 = scmp.lt.s32.totalorder %s32, 1
        %s584 = scalar_select %p583, %s32, 1
        %s585 = scalar_lea.vmem %s12, %s584
        %p586 = pneg %p372
        %p587 = pneg %p369
        %p588 = pneg %p398
        %p589 = pneg %p395
        %s590 = sand.u32 %s385, 1
        %s591 = scalar_lea.sflag [#allocation4], %s590
        %s592 = sand.u32 %s385, 1
        %s593 = smul.addr %s592, 4
        %s594 = scalar_lea.vmem [#allocation3], %s593
        %s595 = smul.u32 4, %s31
        %p596 = scmp.lt.s32.totalorder %s595, 7
        %s597 = scalar_select %p596, %s595, 7
        %s598 = smul.addr %s597, 8
        %s599 = scalar_lea.vmem %s0, %s598
        %s600 = smul.u32 4, %s31
        %p601 = scmp.lt.s32.totalorder %s32, 1
        %s602 = scalar_select %p601, %s32, 1
        %s603 = smul.addr %s602, 4
        %s604 = smul.addr %s603, 4
        %s605 = scalar_lea.vmem %s1, %s604
        %p606 = scmp.lt.s32.totalorder %s32, 1
        %s607 = scalar_select %p606, %s32, 1
        %s608 = scalar_lea.vmem %s2, %s607
        %p609 = scmp.lt.s32.totalorder %s32, 1
        %s610 = scalar_select %p609, %s32, 1
        %s611 = smul.addr %s610, 4
        %s612 = smul.addr %s611, 4
        %s613 = scalar_lea.vmem %s3, %s612
        %p614 = scmp.lt.s32.totalorder %s32, 1
        %s615 = scalar_select %p614, %s32, 1
        %s616 = scalar_lea.vmem %s4, %s615
        %p617 = scmp.lt.s32.totalorder %s32, 1
        %s618 = scalar_select %p617, %s32, 1
        %s619 = smul.addr %s618, 4
        %s620 = smul.addr %s619, 4
        %s621 = scalar_lea.vmem %s5, %s620
        %p622 = scmp.lt.s32.totalorder %s32, 1
        %s623 = scalar_select %p622, %s32, 1
        %s624 = scalar_lea.vmem %s6, %s623
        %p625 = scmp.lt.s32.totalorder %s32, 1
        %s626 = scalar_select %p625, %s32, 1
        %s627 = smul.addr %s626, 16
        %s628 = smul.addr %s627, 4
        %s629 = scalar_lea.vmem %s7, %s628
        %p630 = scmp.lt.s32.totalorder %s32, 1
        %s631 = scalar_select %p630, %s32, 1
        %s632 = scalar_lea.vmem %s8, %s631
        %p633 = scmp.lt.s32.totalorder %s32, 1
        %s634 = scalar_select %p633, %s32, 1
        %s635 = scalar_lea.vmem %s9, %s634
        %p636 = scmp.lt.s32.totalorder %s32, 1
        %s637 = scalar_select %p636, %s32, 1
        %s638 = scalar_lea.vmem %s10, %s637
        %p639 = scmp.lt.s32.totalorder %s32, 1
        %s640 = scalar_select %p639, %s32, 1
        %s641 = scalar_lea.vmem %s11, %s640
        %p642 = scmp.lt.s32.totalorder %s32, 1
        %s643 = scalar_select %p642, %s32, 1
        %s644 = scalar_lea.vmem %s12, %s643
        %p646 = scmp.eq.s32.totalorder %s32, 0
        // Predicated region
        $region73: #{base_encoder_forward.3} parent=71 // pred_check
          %p647 = pneg %p646
        $region74: #{base_encoder_forward.3} parent=71 // pred_check_branch
          %649 = sbr.rel (%p647) target = $region76
        $region75: #{base_encoder_forward.3} parent=71 // pred_region
          %v650 = vld [vmem:[%s599] sm:$0xff]
          %v651 = vld [vmem:[%s599 + $0x8] sm:$0xff]
          %v652 = vld [vmem:[%s599 + $0x10] sm:$0xff]
          %v653 = vld [vmem:[%s599 + $0x18] sm:$0xff]
          %vm654 = vcmask 261120
          %655 = vst.msk [vmem:[#allocation2] sm:$0xff] %vm654, %v650
          %656 = vst.msk [vmem:[#allocation2 + $0x8] sm:$0xff] %vm654, %v651
          %657 = vst.msk [vmem:[#allocation2 + $0x10] sm:$0xff] %vm654, %v652
          %658 = vst.msk [vmem:[#allocation2 + $0x18] sm:$0xff] %vm654, %v653
        $region76: #{base_encoder_forward.3} parent=71 // pred_fallthru
          _
        %v659 = vld [vmem:[#allocation2] sm:$0xff]
        %v660 = vld [vmem:[#allocation2 + $0x8] sm:$0xff]
        %v661 = vld [vmem:[#allocation2 + $0x10] sm:$0xff]
        %v662 = vld [vmem:[#allocation2 + $0x18] sm:$0xff]
        %v663 = vpack.c.bf16 %v660, %v659
        %v664 = vpack.c.bf16 %v662, %v661
        %v665 = vld [vmem:[%s605] sm:$0xf]
        %v666 = vld [vmem:[%s605 + $0x4] sm:$0xf]
        %v667 = vld [vmem:[%s605 + $0x8] sm:$0xf]
        %v668 = vld [vmem:[%s605 + $0xc] sm:$0xf]
        %v669 = vld [vmem:[%s608] sm:$0x1]
        %v671 = vlaneseq
        %v672 = vshrl.u32 %v671, 7
        %v673 = vsub.s32 0, %v672
        %v674 = vrot.slane %v669, %v673
        %v680 = vunpack.c.l.b16 %v665
        %v681 = vunpack.c.l.b16 %v666
        %v682 = vunpack.c.l.b16 %v667
        %v683 = vunpack.c.l.b16 %v668
        %v684 = vpack.c.b16 %v681, %v680
        %v685 = vpack.c.b16 %v683, %v682
        %vm688 = vcmask 261120
        %v690 = vsel %vm688, %v663, 0
        %v693 = vsel %vm688, %v664, 0
        %695 = vmatprep.subr.bf16.mxu0 0
        %696 = vmatpush1.bf16.msra.mxu0 %v684
        %697 = vmatprep.subr.bf16.mxu0 0
        %698 = vmatpush1.bf16.msra.mxu0 %v685
        %699 = vmatprep.subr.bf16.mxu0 0
        %700 = vmatpush1.bf16.msra.mxu0 0
        %701 = vmatprep.subr.bf16.mxu0 0
        %702 = vmatpush1.bf16.msra.mxu0 0
        %703 = vmatprep.subr.bf16.mxu0 0
        %704 = vmatpush1.bf16.msra.mxu0 0
        %705 = vmatprep.subr.bf16.mxu0 0
        %706 = vmatpush1.bf16.msra.mxu0 0
        %707 = vmatprep.subr.bf16.mxu0 0
        %708 = vmatpush1.bf16.msra.mxu0 0
        %709 = vmatprep.subr.bf16.mxu0 0
        %710 = vmatpush1.bf16.msra.mxu0 0
        %711 = vmatprep.subr.bf16.mxu0 0
        %712 = vmatpush1.bf16.msra.mxu0 0
        %713 = vmatprep.subr.bf16.mxu0 0
        %714 = vmatpush1.bf16.msra.mxu0 0
        %715 = vmatprep.subr.bf16.mxu0 0
        %716 = vmatpush1.bf16.msra.mxu0 0
        %717 = vmatprep.subr.bf16.mxu0 0
        %718 = vmatpush1.bf16.msra.mxu0 0
        %719 = vmatprep.subr.bf16.mxu0 0
        %720 = vmatpush1.bf16.msra.mxu0 0
        %721 = vmatprep.subr.bf16.mxu0 0
        %722 = vmatpush1.bf16.msra.mxu0 0
        %723 = vmatprep.subr.bf16.mxu0 0
        %724 = vmatpush1.bf16.msra.mxu0 0
        %725 = vmatprep.subr.bf16.mxu0 0
        %726 = vmatpush1.bf16.msra.mxu0 0
        %727 = vmatprep.mubr.bf16.mxu0 0
        %728 = vmatmul.mubr.bf16.gmra.mrb[0].mxu0 %v690
        %v729 = vpop.f32.mrb[0].mxu0
        %v730 = vadd.f32 %v674, %v729
        %v731 = vpop.f32.mrb[0].mxu0
        %v732 = vpop.f32.mrb[0].mxu0
        %v733 = vadd.f32 %v674, %v732
        %v734 = vpop.f32.mrb[0].mxu0
        %735 = vmatprep.mubr.bf16.mxu0 0
        %736 = vmatmul.mubr.bf16.gmra.mrb[0].mxu0 %v693
        %v737 = vpop.f32.mrb[0].mxu0
        %v738 = vadd.f32 %v674, %v737
        %v739 = vpop.f32.mrb[0].mxu0
        %v740 = vpop.f32.mrb[0].mxu0
        %v741 = vadd.f32 %v674, %v740
        %v742 = vpop.f32.mrb[0].mxu0
        %743 = vdwg.mxu0
        %v744 = vpack.c.bf16 %v730, %v730
        %746 = vrot.lane.b32.xlu0 %v744, 96
        %v747 = vpop.permute.xlu0 %746
        %vm748 = vcmask 64512
        %v750 = vsel %vm748, %v744, 0
        %v753 = vsel %vm748, %v747, 0
        %755 = vmatprep.subr.bf16.mxu0 0
        %756 = vmatpush1.bf16.xpose.msra.mxu0 %v753
        %757 = vmatprep.subr.bf16.mxu0 0
        %758 = vmatpush1.bf16.xpose.msra.mxu0 0
        %759 = vmatprep.subr.bf16.mxu0 0
        %760 = vmatpush1.bf16.xpose.msra.mxu0 0
        %761 = vmatprep.subr.bf16.mxu0 0
        %762 = vmatpush1.bf16.xpose.msra.mxu0 0
        %763 = vmatprep.subr.bf16.mxu0 0
        %764 = vmatpush1.bf16.xpose.msra.mxu0 0
        %765 = vmatprep.subr.bf16.mxu0 0
        %766 = vmatpush1.bf16.xpose.msra.mxu0 0
        %767 = vmatprep.subr.bf16.mxu0 0
        %768 = vmatpush1.bf16.xpose.msra.mxu0 0
        %769 = vmatprep.subr.bf16.mxu0 0
        %770 = vmatpush1.bf16.xpose.msra.mxu0 0
        %771 = vmatprep.subr.bf16.mxu0 0
        %772 = vmatpush1.bf16.xpose.msra.mxu0 0
        %773 = vmatprep.subr.bf16.mxu0 0
        %774 = vmatpush1.bf16.xpose.msra.mxu0 0
        %775 = vmatprep.subr.bf16.mxu0 0
        %776 = vmatpush1.bf16.xpose.msra.mxu0 0
        %777 = vmatprep.subr.bf16.mxu0 0
        %778 = vmatpush1.bf16.xpose.msra.mxu0 0
        %779 = vmatprep.subr.bf16.mxu0 0
        %780 = vmatpush1.bf16.xpose.msra.mxu0 0
        %781 = vmatprep.subr.bf16.mxu0 0
        %782 = vmatpush1.bf16.xpose.msra.mxu0 0
        %783 = vmatprep.subr.bf16.mxu0 0
        %784 = vmatpush1.bf16.xpose.msra.mxu0 0
        %785 = vmatprep.subr.bf16.mxu0 0
        %786 = vmatpush1.bf16.xpose.msra.mxu0 0
        %787 = vmatprep.mubr.bf16.mxu0 0
        %788 = vmatmul.mubr.bf16.gmra.mrb[0].mxu0 %v750
        %v789 = vpop.f32.mrb[0].mxu0
        %v790 = vadd.f32 0.0, %v789
        %v791 = vpop.f32.mrb[0].mxu0
        %v792 = vpop.f32.mrb[0].mxu0
        %v793 = vpop.f32.mrb[0].mxu0
        %794 = vdwg.mxu0
        %v795 = vsel %vm748, %v790, -inf
        %796 = vmax.xlane.f32.xlu0 %v795
        %v797 = vpop.xlane.xlu0 %796
        %v798 = vsub.f32 %v790, %v797
        %v799 = vmul.f32 %v798, 1.442695
        %v800 = vpow.pop %v799
        %v801 = vsel %vm748, %v800, 0.0
        %802 = vadd.xlane.f32.xlu0 %v801
        %v803 = vpop.xlane.xlu0 %802
        %v804 = vrcp.pop %v803
        %v805 = vmul.f32 %v800, %v804
        %v806 = vpack.c.bf16 %v805, %v805
        %807 = vrot.lane.b32.xlu0 %v744, 64
        %v808 = vpop.permute.xlu0 %807
        %v810 = vsel %vm748, %v806, 0
        %vm812 = vcmask 1043456
        %v814 = vsel %vm812, %v808, 0
        %816 = vmatprep.subr.bf16.mxu0 0
        %817 = vmatpush1.bf16.msra.mxu0 %v814
        %818 = vmatprep.subr.bf16.mxu0 0
        %819 = vmatpush1.bf16.msra.mxu0 0
        %820 = vmatprep.subr.bf16.mxu0 0
        %821 = vmatpush1.bf16.msra.mxu0 0
        %822 = vmatprep.subr.bf16.mxu0 0
        %823 = vmatpush1.bf16.msra.mxu0 0
        %824 = vmatprep.subr.bf16.mxu0 0
        %825 = vmatpush1.bf16.msra.mxu0 0
        %826 = vmatprep.subr.bf16.mxu0 0
        %827 = vmatpush1.bf16.msra.mxu0 0
        %828 = vmatprep.subr.bf16.mxu0 0
        %829 = vmatpush1.bf16.msra.mxu0 0
        %830 = vmatprep.subr.bf16.mxu0 0
        %831 = vmatpush1.bf16.msra.mxu0 0
        %832 = vmatprep.subr.bf16.mxu0 0
        %833 = vmatpush1.bf16.msra.mxu0 0
        %834 = vmatprep.subr.bf16.mxu0 0
        %835 = vmatpush1.bf16.msra.mxu0 0
        %836 = vmatprep.subr.bf16.mxu0 0
        %837 = vmatpush1.bf16.msra.mxu0 0
        %838 = vmatprep.subr.bf16.mxu0 0
        %839 = vmatpush1.bf16.msra.mxu0 0
        %840 = vmatprep.subr.bf16.mxu0 0
        %841 = vmatpush1.bf16.msra.mxu0 0
        %842 = vmatprep.subr.bf16.mxu0 0
        %843 = vmatpush1.bf16.msra.mxu0 0
        %844 = vmatprep.subr.bf16.mxu0 0
        %845 = vmatpush1.bf16.msra.mxu0 0
        %846 = vmatprep.subr.bf16.mxu0 0
        %847 = vmatpush1.bf16.msra.mxu0 0
        %848 = vmatprep.mubr.bf16.mxu0 0
        %849 = vmatmul.mubr.bf16.gmra.mrb[0].mxu0 %v810
        %v850 = vpop.f32.mrb[0].mxu0
        %v851 = vadd.f32 0.0, %v850
        %v852 = vpop.f32.mrb[0].mxu0
        %v853 = vpop.f32.mrb[0].mxu0
        %v854 = vpop.f32.mrb[0].mxu0
        %855 = vdwg.mxu0
        %856 = vrot.lane.b32.xlu0 %v744, 120
        %v857 = vpop.permute.xlu0 %856
        %858 = vrot.lane.b32.xlu0 %v744, 88
        %v859 = vpop.permute.xlu0 %858
        %v861 = vsel %vm748, %v857, 0
        %v864 = vsel %vm748, %v859, 0
        %866 = vmatprep.subr.bf16.mxu0 0
        %867 = vmatpush1.bf16.xpose.msra.mxu0 %v864
        %868 = vmatprep.subr.bf16.mxu0 0
        %869 = vmatpush1.bf16.xpose.msra.mxu0 0
        %870 = vmatprep.subr.bf16.mxu0 0
        %871 = vmatpush1.bf16.xpose.msra.mxu0 0
        %872 = vmatprep.subr.bf16.mxu0 0
        %873 = vmatpush1.bf16.xpose.msra.mxu0 0
        %874 = vmatprep.subr.bf16.mxu0 0
        %875 = vmatpush1.bf16.xpose.msra.mxu0 0
        %876 = vmatprep.subr.bf16.mxu0 0
        %877 = vmatpush1.bf16.xpose.msra.mxu0 0
        %878 = vmatprep.subr.bf16.mxu0 0
        %879 = vmatpush1.bf16.xpose.msra.mxu0 0
        %880 = vmatprep.subr.bf16.mxu0 0
        %881 = vmatpush1.bf16.xpose.msra.mxu0 0
        %882 = vmatprep.subr.bf16.mxu0 0
        %883 = vmatpush1.bf16.xpose.msra.mxu0 0
        %884 = vmatprep.subr.bf16.mxu0 0
        %885 = vmatpush1.bf16.xpose.msra.mxu0 0
        %886 = vmatprep.subr.bf16.mxu0 0
        %887 = vmatpush1.bf16.xpose.msra.mxu0 0
        %888 = vmatprep.subr.bf16.mxu0 0
        %889 = vmatpush1.bf16.xpose.msra.mxu0 0
        %890 = vmatprep.subr.bf16.mxu0 0
        %891 = vmatpush1.bf16.xpose.msra.mxu0 0
        %892 = vmatprep.subr.bf16.mxu0 0
        %893 = vmatpush1.bf16.xpose.msra.mxu0 0
        %894 = vmatprep.subr.bf16.mxu0 0
        %895 = vmatpush1.bf16.xpose.msra.mxu0 0
        %896 = vmatprep.subr.bf16.mxu0 0
        %897 = vmatpush1.bf16.xpose.msra.mxu0 0
        %898 = vmatprep.mubr.bf16.mxu0 0
        %899 = vmatmul.mubr.bf16.gmra.mrb[0].mxu0 %v861
        %v900 = vpop.f32.mrb[0].mxu0
        %v901 = vadd.f32 0.0, %v900
        %v902 = vpop.f32.mrb[0].mxu0
        %v903 = vpop.f32.mrb[0].mxu0
        %v904 = vpop.f32.mrb[0].mxu0
        %905 = vdwg.mxu0
        %v906 = vsel %vm748, %v901, -inf
        %907 = vmax.xlane.f32.xlu0 %v906
        %v908 = vpop.xlane.xlu0 %907
        %v909 = vsub.f32 %v901, %v908
        %v910 = vmul.f32 %v909, 1.442695
        %v911 = vpow.pop %v910
        %v912 = vsel %vm748, %v911, 0.0
        %913 = vadd.xlane.f32.xlu0 %v912
        %v914 = vpop.xlane.xlu0 %913
        %v915 = vrcp.pop %v914
        %v916 = vmul.f32 %v911, %v915
        %v917 = vpack.c.bf16 %v916, %v916
        %918 = vrot.lane.b32.xlu0 %v744, 56
        %v919 = vpop.permute.xlu0 %918
        %v921 = vsel %vm748, %v917, 0
        %v924 = vsel %vm812, %v919, 0
        %926 = vmatprep.subr.bf16.mxu0 0
        %927 = vmatpush1.bf16.msra.mxu0 %v924
        %928 = vmatprep.subr.bf16.mxu0 0
        %929 = vmatpush1.bf16.msra.mxu0 0
        %930 = vmatprep.subr.bf16.mxu0 0
        %931 = vmatpush1.bf16.msra.mxu0 0
        %932 = vmatprep.subr.bf16.mxu0 0
        %933 = vmatpush1.bf16.msra.mxu0 0
        %934 = vmatprep.subr.bf16.mxu0 0
        %935 = vmatpush1.bf16.msra.mxu0 0
        %936 = vmatprep.subr.bf16.mxu0 0
        %937 = vmatpush1.bf16.msra.mxu0 0
        %938 = vmatprep.subr.bf16.mxu0 0
        %939 = vmatpush1.bf16.msra.mxu0 0
        %940 = vmatprep.subr.bf16.mxu0 0
        %941 = vmatpush1.bf16.msra.mxu0 0
        %942 = vmatprep.subr.bf16.mxu0 0
        %943 = vmatpush1.bf16.msra.mxu0 0
        %944 = vmatprep.subr.bf16.mxu0 0
        %945 = vmatpush1.bf16.msra.mxu0 0
        %946 = vmatprep.subr.bf16.mxu0 0
        %947 = vmatpush1.bf16.msra.mxu0 0
        %948 = vmatprep.subr.bf16.mxu0 0
        %949 = vmatpush1.bf16.msra.mxu0 0
        %950 = vmatprep.subr.bf16.mxu0 0
        %951 = vmatpush1.bf16.msra.mxu0 0
        %952 = vmatprep.subr.bf16.mxu0 0
        %953 = vmatpush1.bf16.msra.mxu0 0
        %954 = vmatprep.subr.bf16.mxu0 0
        %955 = vmatpush1.bf16.msra.mxu0 0
        %956 = vmatprep.subr.bf16.mxu0 0
        %957 = vmatpush1.bf16.msra.mxu0 0
        %958 = vmatprep.mubr.bf16.mxu0 0
        %959 = vmatmul.mubr.bf16.gmra.mrb[0].mxu0 %v921
        %v960 = vpop.f32.mrb[0].mxu0
        %v961 = vadd.f32 0.0, %v960
        %v962 = vpop.f32.mrb[0].mxu0
        %v963 = vpop.f32.mrb[0].mxu0
        %v964 = vpop.f32.mrb[0].mxu0
        %965 = vdwg.mxu0
        %966 = vrot.lane.b32.xlu0 %v744, 112
        %v967 = vpop.permute.xlu0 %966
        %968 = vrot.lane.b32.xlu0 %v744, 80
        %v969 = vpop.permute.xlu0 %968
        %v971 = vsel %vm748, %v967, 0
        %v974 = vsel %vm748, %v969, 0
        %976 = vmatprep.subr.bf16.mxu0 0
        %977 = vmatpush1.bf16.xpose.msra.mxu0 %v974
        %978 = vmatprep.subr.bf16.mxu0 0
        %979 = vmatpush1.bf16.xpose.msra.mxu0 0
        %980 = vmatprep.subr.bf16.mxu0 0
        %981 = vmatpush1.bf16.xpose.msra.mxu0 0
        %982 = vmatprep.subr.bf16.mxu0 0
        %983 = vmatpush1.bf16.xpose.msra.mxu0 0
        %984 = vmatprep.subr.bf16.mxu0 0
        %985 = vmatpush1.bf16.xpose.msra.mxu0 0
        %986 = vmatprep.subr.bf16.mxu0 0
        %987 = vmatpush1.bf16.xpose.msra.mxu0 0
        %988 = vmatprep.subr.bf16.mxu0 0
        %989 = vmatpush1.bf16.xpose.msra.mxu0 0
        %990 = vmatprep.subr.bf16.mxu0 0
        %991 = vmatpush1.bf16.xpose.msra.mxu0 0
        %992 = vmatprep.subr.bf16.mxu0 0
        %993 = vmatpush1.bf16.xpose.msra.mxu0 0
        %994 = vmatprep.subr.bf16.mxu0 0
        %995 = vmatpush1.bf16.xpose.msra.mxu0 0
        %996 = vmatprep.subr.bf16.mxu0 0
        %997 = vmatpush1.bf16.xpose.msra.mxu0 0
        %998 = vmatprep.subr.bf16.mxu0 0
        %999 = vmatpush1.bf16.xpose.msra.mxu0 0
        %1000 = vmatprep.subr.bf16.mxu0 0
        %1001 = vmatpush1.bf16.xpose.msra.mxu0 0
        %1002 = vmatprep.subr.bf16.mxu0 0
        %1003 = vmatpush1.bf16.xpose.msra.mxu0 0
        %1004 = vmatprep.subr.bf16.mxu0 0
        %1005 = vmatpush1.bf16.xpose.msra.mxu0 0
        %1006 = vmatprep.subr.bf16.mxu0 0
        %1007 = vmatpush1.bf16.xpose.msra.mxu0 0
        %1008 = vmatprep.mubr.bf16.mxu0 0
        %1009 = vmatmul.mubr.bf16.gmra.mrb[0].mxu0 %v971
        %v1010 = vpop.f32.mrb[0].mxu0
        %v1011 = vadd.f32 0.0, %v1010
        %v1012 = vpop.f32.mrb[0].mxu0
        %v1013 = vpop.f32.mrb[0].mxu0
        %v1014 = vpop.f32.mrb[0].mxu0
        %1015 = vdwg.mxu0
        %v1016 = vsel %vm748, %v1011, -inf
        %1017 = vmax.xlane.f32.xlu0 %v1016
        %v1018 = vpop.xlane.xlu0 %1017
        %v1019 = vsub.f32 %v1011, %v1018
        %v1020 = vmul.f32 %v1019, 1.442695
        %v1021 = vpow.pop %v1020
        %v1022 = vsel %vm748, %v1021, 0.0
        %1023 = vadd.xlane.f32.xlu0 %v1022
        %v1024 = vpop.xlane.xlu0 %1023
        %v1025 = vrcp.pop %v1024
        %v1026 = vmul.f32 %v1021, %v1025
        %v1027 = vpack.c.bf16 %v1026, %v1026
        %1028 = vrot.lane.b32.xlu0 %v744, 48
        %v1029 = vpop.permute.xlu0 %1028
        %v1031 = vsel %vm748, %v1027, 0
        %v1034 = vsel %vm812, %v1029, 0
        %1036 = vmatprep.subr.bf16.mxu0 0
        %1037 = vmatpush1.bf16.msra.mxu0 %v1034
        %1038 = vmatprep.subr.bf16.mxu0 0
        %1039 = vmatpush1.bf16.msra.mxu0 0
        %1040 = vmatprep.subr.bf16.mxu0 0
        %1041 = vmatpush1.bf16.msra.mxu0 0
        %1042 = vmatprep.subr.bf16.mxu0 0
        %1043 = vmatpush1.bf16.msra.mxu0 0
        %1044 = vmatprep.subr.bf16.mxu0 0
        %1045 = vmatpush1.bf16.msra.mxu0 0
        %1046 = vmatprep.subr.bf16.mxu0 0
        %1047 = vmatpush1.bf16.msra.mxu0 0
        %1048 = vmatprep.subr.bf16.mxu0 0
        %1049 = vmatpush1.bf16.msra.mxu0 0
        %1050 = vmatprep.subr.bf16.mxu0 0
        %1051 = vmatpush1.bf16.msra.mxu0 0
        %1052 = vmatprep.subr.bf16.mxu0 0
        %1053 = vmatpush1.bf16.msra.mxu0 0
        %1054 = vmatprep.subr.bf16.mxu0 0
        %1055 = vmatpush1.bf16.msra.mxu0 0
        %1056 = vmatprep.subr.bf16.mxu0 0
        %1057 = vmatpush1.bf16.msra.mxu0 0
        %1058 = vmatprep.subr.bf16.mxu0 0
        %1059 = vmatpush1.bf16.msra.mxu0 0
        %1060 = vmatprep.subr.bf16.mxu0 0
        %1061 = vmatpush1.bf16.msra.mxu0 0
        %1062 = vmatprep.subr.bf16.mxu0 0
        %1063 = vmatpush1.bf16.msra.mxu0 0
        %1064 = vmatprep.subr.bf16.mxu0 0
        %1065 = vmatpush1.bf16.msra.mxu0 0
        %1066 = vmatprep.subr.bf16.mxu0 0
        %1067 = vmatpush1.bf16.msra.mxu0 0
        %1068 = vmatprep.mubr.bf16.mxu0 0
        %1069 = vmatmul.mubr.bf16.gmra.mrb[0].mxu0 %v1031
        %v1070 = vpop.f32.mrb[0].mxu0
        %v1071 = vadd.f32 0.0, %v1070
        %v1072 = vpop.f32.mrb[0].mxu0
        %v1073 = vpop.f32.mrb[0].mxu0
        %v1074 = vpop.f32.mrb[0].mxu0
        %1075 = vdwg.mxu0
        %1076 = vrot.lane.b32.xlu0 %v744, 104
        %v1077 = vpop.permute.xlu0 %1076
        %1078 = vrot.lane.b32.xlu0 %v744, 72
        %v1079 = vpop.permute.xlu0 %1078
        %v1081 = vsel %vm748, %v1077, 0
        %v1084 = vsel %vm748, %v1079, 0
        %1086 = vmatprep.subr.bf16.mxu0 0
        %1087 = vmatpush1.bf16.xpose.msra.mxu0 %v1084
        %1088 = vmatprep.subr.bf16.mxu0 0
        %1089 = vmatpush1.bf16.xpose.msra.mxu0 0
        %1090 = vmatprep.subr.bf16.mxu0 0
        %1091 = vmatpush1.bf16.xpose.msra.mxu0 0
        %1092 = vmatprep.subr.bf16.mxu0 0
        %1093 = vmatpush1.bf16.xpose.msra.mxu0 0
        %1094 = vmatprep.subr.bf16.mxu0 0
        %1095 = vmatpush1.bf16.xpose.msra.mxu0 0
        %1096 = vmatprep.subr.bf16.mxu0 0
        %1097 = vmatpush1.bf16.xpose.msra.mxu0 0
        %1098 = vmatprep.subr.bf16.mxu0 0
        %1099 = vmatpush1.bf16.xpose.msra.mxu0 0
        %1100 = vmatprep.subr.bf16.mxu0 0
        %1101 = vmatpush1.bf16.xpose.msra.mxu0 0
        %1102 = vmatprep.subr.bf16.mxu0 0
        %1103 = vmatpush1.bf16.xpose.msra.mxu0 0
        %1104 = vmatprep.subr.bf16.mxu0 0
        %1105 = vmatpush1.bf16.xpose.msra.mxu0 0
        %1106 = vmatprep.subr.bf16.mxu0 0
        %1107 = vmatpush1.bf16.xpose.msra.mxu0 0
        %1108 = vmatprep.subr.bf16.mxu0 0
        %1109 = vmatpush1.bf16.xpose.msra.mxu0 0
        %1110 = vmatprep.subr.bf16.mxu0 0
        %1111 = vmatpush1.bf16.xpose.msra.mxu0 0
        %1112 = vmatprep.subr.bf16.mxu0 0
        %1113 = vmatpush1.bf16.xpose.msra.mxu0 0
        %1114 = vmatprep.subr.bf16.mxu0 0
        %1115 = vmatpush1.bf16.xpose.msra.mxu0 0
        %1116 = vmatprep.subr.bf16.mxu0 0
        %1117 = vmatpush1.bf16.xpose.msra.mxu0 0
        %1118 = vmatprep.mubr.bf16.mxu0 0
        %1119 = vmatmul.mubr.bf16.gmra.mrb[0].mxu0 %v1081
        %v1120 = vpop.f32.mrb[0].mxu0
        %v1121 = vadd.f32 0.0, %v1120
        %v1122 = vpop.f32.mrb[0].mxu0
        %v1123 = vpop.f32.mrb[0].mxu0
        %v1124 = vpop.f32.mrb[0].mxu0
        %1125 = vdwg.mxu0
        %v1126 = vsel %vm748, %v1121, -inf
        %1127 = vmax.xlane.f32.xlu0 %v1126
        %v1128 = vpop.xlane.xlu0 %1127
        %v1129 = vsub.f32 %v1121, %v1128
        %v1130 = vmul.f32 %v1129, 1.442695
        %v1131 = vpow.pop %v1130
        %v1132 = vsel %vm748, %v1131, 0.0
        %1133 = vadd.xlane.f32.xlu0 %v1132
        %v1134 = vpop.xlane.xlu0 %1133
        %v1135 = vrcp.pop %v1134
        %v1136 = vmul.f32 %v1131, %v1135
        %v1137 = vpack.c.bf16 %v1136, %v1136
        %1138 = vrot.lane.b32.xlu0 %v744, 40
        %v1139 = vpop.permute.xlu0 %1138
        %v1141 = vsel %vm748, %v1137, 0
        %v1144 = vsel %vm812, %v1139, 0
        %1146 = vmatprep.subr.bf16.mxu0 0
        %1147 = vmatpush1.bf16.msra.mxu0 %v1144
        %1148 = vmatprep.subr.bf16.mxu0 0
        %1149 = vmatpush1.bf16.msra.mxu0 0
        %1150 = vmatprep.subr.bf16.mxu0 0
        %1151 = vmatpush1.bf16.msra.mxu0 0
        %1152 = vmatprep.subr.bf16.mxu0 0
        %1153 = vmatpush1.bf16.msra.mxu0 0
        %1154 = vmatprep.subr.bf16.mxu0 0
        %1155 = vmatpush1.bf16.msra.mxu0 0
        %1156 = vmatprep.subr.bf16.mxu0 0
        %1157 = vmatpush1.bf16.msra.mxu0 0
        %1158 = vmatprep.subr.bf16.mxu0 0
        %1159 = vmatpush1.bf16.msra.mxu0 0
        %1160 = vmatprep.subr.bf16.mxu0 0
        %1161 = vmatpush1.bf16.msra.mxu0 0
        %1162 = vmatprep.subr.bf16.mxu0 0
        %1163 = vmatpush1.bf16.msra.mxu0 0
        %1164 = vmatprep.subr.bf16.mxu0 0
        %1165 = vmatpush1.bf16.msra.mxu0 0
        %1166 = vmatprep.subr.bf16.mxu0 0
        %1167 = vmatpush1.bf16.msra.mxu0 0
        %1168 = vmatprep.subr.bf16.mxu0 0
        %1169 = vmatpush1.bf16.msra.mxu0 0
        %1170 = vmatprep.subr.bf16.mxu0 0
        %1171 = vmatpush1.bf16.msra.mxu0 0
        %1172 = vmatprep.subr.bf16.mxu0 0
        %1173 = vmatpush1.bf16.msra.mxu0 0
        %1174 = vmatprep.subr.bf16.mxu0 0
        %1175 = vmatpush1.bf16.msra.mxu0 0
        %1176 = vmatprep.subr.bf16.mxu0 0
        %1177 = vmatpush1.bf16.msra.mxu0 0
        %1178 = vmatprep.mubr.bf16.mxu0 0
        %1179 = vmatmul.mubr.bf16.gmra.mrb[0].mxu0 %v1141
        %v1180 = vpop.f32.mrb[0].mxu0
        %v1181 = vadd.f32 0.0, %v1180
        %v1182 = vpop.f32.mrb[0].mxu0
        %v1183 = vpop.f32.mrb[0].mxu0
        %v1184 = vpop.f32.mrb[0].mxu0
        %1185 = vdwg.mxu0
        %1187 = vrot.lane.b32.xlu0 %v961, 8
        %v1188 = vpop.permute.xlu0 %1187
        %1191 = vrot.lane.b32.xlu0 %v1071, 16
        %v1192 = vpop.permute.xlu0 %1191
        %1195 = vrot.lane.b32.xlu0 %v1181, 24
        %v1196 = vpop.permute.xlu0 %1195
        %v1198 = vsel %vm748, %v851, %v1188
        %vm1199 = vcmask 130048
        %v1200 = vsel %vm1199, %v1198, %v1192
        %vm1201 = vcmask 195584
        %v1202 = vsel %vm1201, %v1200, %v1196
        %v1203 = vpack.c.bf16 %v733, %v733
        %1205 = vrot.lane.b32.xlu0 %v1203, 96
        %v1206 = vpop.permute.xlu0 %1205
        %v1208 = vsel %vm748, %v1203, 0
        %v1211 = vsel %vm748, %v1206, 0
        %1213 = vmatprep.subr.bf16.mxu0 0
        %1214 = vmatpush1.bf16.xpose.msra.mxu0 %v1211
        %1215 = vmatprep.subr.bf16.mxu0 0
        %1216 = vmatpush1.bf16.xpose.msra.mxu0 0
        %1217 = vmatprep.subr.bf16.mxu0 0
        %1218 = vmatpush1.bf16.xpose.msra.mxu0 0
        %1219 = vmatprep.subr.bf16.mxu0 0
        %1220 = vmatpush1.bf16.xpose.msra.mxu0 0
        %1221 = vmatprep.subr.bf16.mxu0 0
        %1222 = vmatpush1.bf16.xpose.msra.mxu0 0
        %1223 = vmatprep.subr.bf16.mxu0 0
        %1224 = vmatpush1.bf16.xpose.msra.mxu0 0
        %1225 = vmatprep.subr.bf16.mxu0 0
        %1226 = vmatpush1.bf16.xpose.msra.mxu0 0
        %1227 = vmatprep.subr.bf16.mxu0 0
        %1228 = vmatpush1.bf16.xpose.msra.mxu0 0
        %1229 = vmatprep.subr.bf16.mxu0 0
        %1230 = vmatpush1.bf16.xpose.msra.mxu0 0
        %1231 = vmatprep.subr.bf16.mxu0 0
        %1232 = vmatpush1.bf16.xpose.msra.mxu0 0
        %1233 = vmatprep.subr.bf16.mxu0 0
        %1234 = vmatpush1.bf16.xpose.msra.mxu0 0
        %1235 = vmatprep.subr.bf16.mxu0 0
        %1236 = vmatpush1.bf16.xpose.msra.mxu0 0
        %1237 = vmatprep.subr.bf16.mxu0 0
        %1238 = vmatpush1.bf16.xpose.msra.mxu0 0
        %1239 = vmatprep.subr.bf16.mxu0 0
        %1240 = vmatpush1.bf16.xpose.msra.mxu0 0
        %1241 = vmatprep.subr.bf16.mxu0 0
        %1242 = vmatpush1.bf16.xpose.msra.mxu0 0
        %1243 = vmatprep.subr.bf16.mxu0 0
        %1244 = vmatpush1.bf16.xpose.msra.mxu0 0
        %1245 = vmatprep.mubr.bf16.mxu0 0
        %1246 = vmatmul.mubr.bf16.gmra.mrb[0].mxu0 %v1208
        %v1247 = vpop.f32.mrb[0].mxu0
        %v1248 = vadd.f32 0.0, %v1247
        %v1249 = vpop.f32.mrb[0].mxu0
        %v1250 = vpop.f32.mrb[0].mxu0
        %v1251 = vpop.f32.mrb[0].mxu0
        %1252 = vdwg.mxu0
        %v1253 = vsel %vm748, %v1248, -inf
        %1254 = vmax.xlane.f32.xlu0 %v1253
        %v1255 = vpop.xlane.xlu0 %1254
        %v1256 = vsub.f32 %v1248, %v1255
        %v1257 = vmul.f32 %v1256, 1.442695
        %v1258 = vpow.pop %v1257
        %v1259 = vsel %vm748, %v1258, 0.0
        %1260 = vadd.xlane.f32.xlu0 %v1259
        %v1261 = vpop.xlane.xlu0 %1260
        %v1262 = vrcp.pop %v1261
        %v1263 = vmul.f32 %v1258, %v1262
        %v1264 = vpack.c.bf16 %v1263, %v1263
        %1265 = vrot.lane.b32.xlu0 %v1203, 64
        %v1266 = vpop.permute.xlu0 %1265
        %v1268 = vsel %vm748, %v1264, 0
        %v1271 = vsel %vm812, %v1266, 0
        %1273 = vmatprep.subr.bf16.mxu0 0
        %1274 = vmatpush1.bf16.msra.mxu0 %v1271
        %1275 = vmatprep.subr.bf16.mxu0 0
        %1276 = vmatpush1.bf16.msra.mxu0 0
        %1277 = vmatprep.subr.bf16.mxu0 0
        %1278 = vmatpush1.bf16.msra.mxu0 0
        %1279 = vmatprep.subr.bf16.mxu0 0
        %1280 = vmatpush1.bf16.msra.mxu0 0
        %1281 = vmatprep.subr.bf16.mxu0 0
        %1282 = vmatpush1.bf16.msra.mxu0 0
        %1283 = vmatprep.subr.bf16.mxu0 0
        %1284 = vmatpush1.bf16.msra.mxu0 0
        %1285 = vmatprep.subr.bf16.mxu0 0
        %1286 = vmatpush1.bf16.msra.mxu0 0
        %1287 = vmatprep.subr.bf16.mxu0 0
        %1288 = vmatpush1.bf16.msra.mxu0 0
        %1289 = vmatprep.subr.bf16.mxu0 0
        %1290 = vmatpush1.bf16.msra.mxu0 0
        %1291 = vmatprep.subr.bf16.mxu0 0
        %1292 = vmatpush1.bf16.msra.mxu0 0
        %1293 = vmatprep.subr.bf16.mxu0 0
        %1294 = vmatpush1.bf16.msra.mxu0 0
        %1295 = vmatprep.subr.bf16.mxu0 0
        %1296 = vmatpush1.bf16.msra.mxu0 0
        %1297 = vmatprep.subr.bf16.mxu0 0
        %1298 = vmatpush1.bf16.msra.mxu0 0
        %1299 = vmatprep.subr.bf16.mxu0 0
        %1300 = vmatpush1.bf16.msra.mxu0 0
        %1301 = vmatprep.subr.bf16.mxu0 0
        %1302 = vmatpush1.bf16.msra.mxu0 0
        %1303 = vmatprep.subr.bf16.mxu0 0
        %1304 = vmatpush1.bf16.msra.mxu0 0
        %1305 = vmatprep.mubr.bf16.mxu0 0
        %1306 = vmatmul.mubr.bf16.gmra.mrb[0].mxu0 %v1268
        %v1307 = vpop.f32.mrb[0].mxu0
        %v1308 = vadd.f32 0.0, %v1307
        %v1309 = vpop.f32.mrb[0].mxu0
        %v1310 = vpop.f32.mrb[0].mxu0
        %v1311 = vpop.f32.mrb[0].mxu0
        %1312 = vdwg.mxu0
        %1313 = vrot.lane.b32.xlu0 %v1203, 120
        %v1314 = vpop.permute.xlu0 %1313
        %1315 = vrot.lane.b32.xlu0 %v1203, 88
        %v1316 = vpop.permute.xlu0 %1315
        %v1318 = vsel %vm748, %v1314, 0
        %v1321 = vsel %vm748, %v1316, 0
        %1323 = vmatprep.subr.bf16.mxu0 0
        %1324 = vmatpush1.bf16.xpose.msra.mxu0 %v1321
        %1325 = vmatprep.subr.bf16.mxu0 0
        %1326 = vmatpush1.bf16.xpose.msra.mxu0 0
        %1327 = vmatprep.subr.bf16.mxu0 0
        %1328 = vmatpush1.bf16.xpose.msra.mxu0 0
        %1329 = vmatprep.subr.bf16.mxu0 0
        %1330 = vmatpush1.bf16.xpose.msra.mxu0 0
        %1331 = vmatprep.subr.bf16.mxu0 0
        %1332 = vmatpush1.bf16.xpose.msra.mxu0 0
        %1333 = vmatprep.subr.bf16.mxu0 0
        %1334 = vmatpush1.bf16.xpose.msra.mxu0 0
        %1335 = vmatprep.subr.bf16.mxu0 0
        %1336 = vmatpush1.bf16.xpose.msra.mxu0 0
        %1337 = vmatprep.subr.bf16.mxu0 0
        %1338 = vmatpush1.bf16.xpose.msra.mxu0 0
        %1339 = vmatprep.subr.bf16.mxu0 0
        %1340 = vmatpush1.bf16.xpose.msra.mxu0 0
        %1341 = vmatprep.subr.bf16.mxu0 0
        %1342 = vmatpush1.bf16.xpose.msra.mxu0 0
        %1343 = vmatprep.subr.bf16.mxu0 0
        %1344 = vmatpush1.bf16.xpose.msra.mxu0 0
        %1345 = vmatprep.subr.bf16.mxu0 0
        %1346 = vmatpush1.bf16.xpose.msra.mxu0 0
        %1347 = vmatprep.subr.bf16.mxu0 0
        %1348 = vmatpush1.bf16.xpose.msra.mxu0 0
        %1349 = vmatprep.subr.bf16.mxu0 0
        %1350 = vmatpush1.bf16.xpose.msra.mxu0 0
        %1351 = vmatprep.subr.bf16.mxu0 0
        %1352 = vmatpush1.bf16.xpose.msra.mxu0 0
        %1353 = vmatprep.subr.bf16.mxu0 0
        %1354 = vmatpush1.bf16.xpose.msra.mxu0 0
        %1355 = vmatprep.mubr.bf16.mxu0 0
        %1356 = vmatmul.mubr.bf16.gmra.mrb[0].mxu0 %v1318
        %v1357 = vpop.f32.mrb[0].mxu0
        %v1358 = vadd.f32 0.0, %v1357
        %v1359 = vpop.f32.mrb[0].mxu0
        %v1360 = vpop.f32.mrb[0].mxu0
        %v1361 = vpop.f32.mrb[0].mxu0
        %1362 = vdwg.mxu0
        %v1363 = vsel %vm748, %v1358, -inf
        %1364 = vmax.xlane.f32.xlu0 %v1363
        %v1365 = vpop.xlane.xlu0 %1364
        %v1366 = vsub.f32 %v1358, %v1365
        %v1367 = vmul.f32 %v1366, 1.442695
        %v1368 = vpow.pop %v1367
        %v1369 = vsel %vm748, %v1368, 0.0
        %1370 = vadd.xlane.f32.xlu0 %v1369
        %v1371 = vpop.xlane.xlu0 %1370
        %v1372 = vrcp.pop %v1371
        %v1373 = vmul.f32 %v1368, %v1372
        %v1374 = vpack.c.bf16 %v1373, %v1373
        %1375 = vrot.lane.b32.xlu0 %v1203, 56
        %v1376 = vpop.permute.xlu0 %1375
        %v1378 = vsel %vm748, %v1374, 0
        %v1381 = vsel %vm812, %v1376, 0
        %1383 = vmatprep.subr.bf16.mxu0 0
        %1384 = vmatpush1.bf16.msra.mxu0 %v1381
        %1385 = vmatprep.subr.bf16.mxu0 0
        %1386 = vmatpush1.bf16.msra.mxu0 0
        %1387 = vmatprep.subr.bf16.mxu0 0
        %1388 = vmatpush1.bf16.msra.mxu0 0
        %1389 = vmatprep.subr.bf16.mxu0 0
        %1390 = vmatpush1.bf16.msra.mxu0 0
        %1391 = vmatprep.subr.bf16.mxu0 0
        %1392 = vmatpush1.bf16.msra.mxu0 0
        %1393 = vmatprep.subr.bf16.mxu0 0
        %1394 = vmatpush1.bf16.msra.mxu0 0
        %1395 = vmatprep.subr.bf16.mxu0 0
        %1396 = vmatpush1.bf16.msra.mxu0 0
        %1397 = vmatprep.subr.bf16.mxu0 0
        %1398 = vmatpush1.bf16.msra.mxu0 0
        %1399 = vmatprep.subr.bf16.mxu0 0
        %1400 = vmatpush1.bf16.msra.mxu0 0
        %1401 = vmatprep.subr.bf16.mxu0 0
        %1402 = vmatpush1.bf16.msra.mxu0 0
        %1403 = vmatprep.subr.bf16.mxu0 0
        %1404 = vmatpush1.bf16.msra.mxu0 0
        %1405 = vmatprep.subr.bf16.mxu0 0
        %1406 = vmatpush1.bf16.msra.mxu0 0
        %1407 = vmatprep.subr.bf16.mxu0 0
        %1408 = vmatpush1.bf16.msra.mxu0 0
        %1409 = vmatprep.subr.bf16.mxu0 0
        %1410 = vmatpush1.bf16.msra.mxu0 0
        %1411 = vmatprep.subr.bf16.mxu0 0
        %1412 = vmatpush1.bf16.msra.mxu0 0
        %1413 = vmatprep.subr.bf16.mxu0 0
        %1414 = vmatpush1.bf16.msra.mxu0 0
        %1415 = vmatprep.mubr.bf16.mxu0 0
        %1416 = vmatmul.mubr.bf16.gmra.mrb[0].mxu0 %v1378
        %v1417 = vpop.f32.mrb[0].mxu0
        %v1418 = vadd.f32 0.0, %v1417
        %v1419 = vpop.f32.mrb[0].mxu0
        %v1420 = vpop.f32.mrb[0].mxu0
        %v1421 = vpop.f32.mrb[0].mxu0
        %1422 = vdwg.mxu0
        %1423 = vrot.lane.b32.xlu0 %v1203, 112
        %v1424 = vpop.permute.xlu0 %1423
        %1425 = vrot.lane.b32.xlu0 %v1203, 80
        %v1426 = vpop.permute.xlu0 %1425
        %v1428 = vsel %vm748, %v1424, 0
        %v1431 = vsel %vm748, %v1426, 0
        %1433 = vmatprep.subr.bf16.mxu0 0
        %1434 = vmatpush1.bf16.xpose.msra.mxu0 %v1431
        %1435 = vmatprep.subr.bf16.mxu0 0
        %1436 = vmatpush1.bf16.xpose.msra.mxu0 0
        %1437 = vmatprep.subr.bf16.mxu0 0
        %1438 = vmatpush1.bf16.xpose.msra.mxu0 0
        %1439 = vmatprep.subr.bf16.mxu0 0
        %1440 = vmatpush1.bf16.xpose.msra.mxu0 0
        %1441 = vmatprep.subr.bf16.mxu0 0
        %1442 = vmatpush1.bf16.xpose.msra.mxu0 0
        %1443 = vmatprep.subr.bf16.mxu0 0
        %1444 = vmatpush1.bf16.xpose.msra.mxu0 0
        %1445 = vmatprep.subr.bf16.mxu0 0
        %1446 = vmatpush1.bf16.xpose.msra.mxu0 0
        %1447 = vmatprep.subr.bf16.mxu0 0
        %1448 = vmatpush1.bf16.xpose.msra.mxu0 0
        %1449 = vmatprep.subr.bf16.mxu0 0
        %1450 = vmatpush1.bf16.xpose.msra.mxu0 0
        %1451 = vmatprep.subr.bf16.mxu0 0
        %1452 = vmatpush1.bf16.xpose.msra.mxu0 0
        %1453 = vmatprep.subr.bf16.mxu0 0
        %1454 = vmatpush1.bf16.xpose.msra.mxu0 0
        %1455 = vmatprep.subr.bf16.mxu0 0
        %1456 = vmatpush1.bf16.xpose.msra.mxu0 0
        %1457 = vmatprep.subr.bf16.mxu0 0
        %1458 = vmatpush1.bf16.xpose.msra.mxu0 0
        %1459 = vmatprep.subr.bf16.mxu0 0
        %1460 = vmatpush1.bf16.xpose.msra.mxu0 0
        %1461 = vmatprep.subr.bf16.mxu0 0
        %1462 = vmatpush1.bf16.xpose.msra.mxu0 0
        %1463 = vmatprep.subr.bf16.mxu0 0
        %1464 = vmatpush1.bf16.xpose.msra.mxu0 0
        %1465 = vmatprep.mubr.bf16.mxu0 0
        %1466 = vmatmul.mubr.bf16.gmra.mrb[0].mxu0 %v1428
        %v1467 = vpop.f32.mrb[0].mxu0
        %v1468 = vadd.f32 0.0, %v1467
        %v1469 = vpop.f32.mrb[0].mxu0
        %v1470 = vpop.f32.mrb[0].mxu0
        %v1471 = vpop.f32.mrb[0].mxu0
        %1472 = vdwg.mxu0
        %v1473 = vsel %vm748, %v1468, -inf
        %1474 = vmax.xlane.f32.xlu0 %v1473
        %v1475 = vpop.xlane.xlu0 %1474
        %v1476 = vsub.f32 %v1468, %v1475
        %v1477 = vmul.f32 %v1476, 1.442695
        %v1478 = vpow.pop %v1477
        %v1479 = vsel %vm748, %v1478, 0.0
        %1480 = vadd.xlane.f32.xlu0 %v1479
        %v1481 = vpop.xlane.xlu0 %1480
        %v1482 = vrcp.pop %v1481
        %v1483 = vmul.f32 %v1478, %v1482
        %v1484 = vpack.c.bf16 %v1483, %v1483
        %1485 = vrot.lane.b32.xlu0 %v1203, 48
        %v1486 = vpop.permute.xlu0 %1485
        %v1488 = vsel %vm748, %v1484, 0
        %v1491 = vsel %vm812, %v1486, 0
        %1493 = vmatprep.subr.bf16.mxu0 0
        %1494 = vmatpush1.bf16.msra.mxu0 %v1491
        %1495 = vmatprep.subr.bf16.mxu0 0
        %1496 = vmatpush1.bf16.msra.mxu0 0
        %1497 = vmatprep.subr.bf16.mxu0 0
        %1498 = vmatpush1.bf16.msra.mxu0 0
        %1499 = vmatprep.subr.bf16.mxu0 0
        %1500 = vmatpush1.bf16.msra.mxu0 0
        %1501 = vmatprep.subr.bf16.mxu0 0
        %1502 = vmatpush1.bf16.msra.mxu0 0
        %1503 = vmatprep.subr.bf16.mxu0 0
        %1504 = vmatpush1.bf16.msra.mxu0 0
        %1505 = vmatprep.subr.bf16.mxu0 0
        %1506 = vmatpush1.bf16.msra.mxu0 0
        %1507 = vmatprep.subr.bf16.mxu0 0
        %1508 = vmatpush1.bf16.msra.mxu0 0
        %1509 = vmatprep.subr.bf16.mxu0 0
        %1510 = vmatpush1.bf16.msra.mxu0 0
        %1511 = vmatprep.subr.bf16.mxu0 0
        %1512 = vmatpush1.bf16.msra.mxu0 0
        %1513 = vmatprep.subr.bf16.mxu0 0
        %1514 = vmatpush1.bf16.msra.mxu0 0
        %1515 = vmatprep.subr.bf16.mxu0 0
        %1516 = vmatpush1.bf16.msra.mxu0 0
        %1517 = vmatprep.subr.bf16.mxu0 0
        %1518 = vmatpush1.bf16.msra.mxu0 0
        %1519 = vmatprep.subr.bf16.mxu0 0
        %1520 = vmatpush1.bf16.msra.mxu0 0
        %1521 = vmatprep.subr.bf16.mxu0 0
        %1522 = vmatpush1.bf16.msra.mxu0 0
        %1523 = vmatprep.subr.bf16.mxu0 0
        %1524 = vmatpush1.bf16.msra.mxu0 0
        %1525 = vmatprep.mubr.bf16.mxu0 0
        %1526 = vmatmul.mubr.bf16.gmra.mrb[0].mxu0 %v1488
        %v1527 = vpop.f32.mrb[0].mxu0
        %v1528 = vadd.f32 0.0, %v1527
        %v1529 = vpop.f32.mrb[0].mxu0
        %v1530 = vpop.f32.mrb[0].mxu0
        %v1531 = vpop.f32.mrb[0].mxu0
        %1532 = vdwg.mxu0
        %1533 = vrot.lane.b32.xlu0 %v1203, 104
        %v1534 = vpop.permute.xlu0 %1533
        %1535 = vrot.lane.b32.xlu0 %v1203, 72
        %v1536 = vpop.permute.xlu0 %1535
        %v1538 = vsel %vm748, %v1534, 0
        %v1541 = vsel %vm748, %v1536, 0
        %1543 = vmatprep.subr.bf16.mxu0 0
        %1544 = vmatpush1.bf16.xpose.msra.mxu0 %v1541
        %1545 = vmatprep.subr.bf16.mxu0 0
        %1546 = vmatpush1.bf16.xpose.msra.mxu0 0
        %1547 = vmatprep.subr.bf16.mxu0 0
        %1548 = vmatpush1.bf16.xpose.msra.mxu0 0
        %1549 = vmatprep.subr.bf16.mxu0 0
        %1550 = vmatpush1.bf16.xpose.msra.mxu0 0
        %1551 = vmatprep.subr.bf16.mxu0 0
        %1552 = vmatpush1.bf16.xpose.msra.mxu0 0
        %1553 = vmatprep.subr.bf16.mxu0 0
        %1554 = vmatpush1.bf16.xpose.msra.mxu0 0
        %1555 = vmatprep.subr.bf16.mxu0 0
        %1556 = vmatpush1.bf16.xpose.msra.mxu0 0
        %1557 = vmatprep.subr.bf16.mxu0 0
        %1558 = vmatpush1.bf16.xpose.msra.mxu0 0
        %1559 = vmatprep.subr.bf16.mxu0 0
        %1560 = vmatpush1.bf16.xpose.msra.mxu0 0
        %1561 = vmatprep.subr.bf16.mxu0 0
        %1562 = vmatpush1.bf16.xpose.msra.mxu0 0
        %1563 = vmatprep.subr.bf16.mxu0 0
        %1564 = vmatpush1.bf16.xpose.msra.mxu0 0
        %1565 = vmatprep.subr.bf16.mxu0 0
        %1566 = vmatpush1.bf16.xpose.msra.mxu0 0
        %1567 = vmatprep.subr.bf16.mxu0 0
        %1568 = vmatpush1.bf16.xpose.msra.mxu0 0
        %1569 = vmatprep.subr.bf16.mxu0 0
        %1570 = vmatpush1.bf16.xpose.msra.mxu0 0
        %1571 = vmatprep.subr.bf16.mxu0 0
        %1572 = vmatpush1.bf16.xpose.msra.mxu0 0
        %1573 = vmatprep.subr.bf16.mxu0 0
        %1574 = vmatpush1.bf16.xpose.msra.mxu0 0
        %1575 = vmatprep.mubr.bf16.mxu0 0
        %1576 = vmatmul.mubr.bf16.gmra.mrb[0].mxu0 %v1538
        %v1577 = vpop.f32.mrb[0].mxu0
        %v1578 = vadd.f32 0.0, %v1577
        %v1579 = vpop.f32.mrb[0].mxu0
        %v1580 = vpop.f32.mrb[0].mxu0
        %v1581 = vpop.f32.mrb[0].mxu0
        %1582 = vdwg.mxu0
        %v1583 = vsel %vm748, %v1578, -inf
        %1584 = vmax.xlane.f32.xlu0 %v1583
        %v1585 = vpop.xlane.xlu0 %1584
        %v1586 = vsub.f32 %v1578, %v1585
        %v1587 = vmul.f32 %v1586, 1.442695
        %v1588 = vpow.pop %v1587
        %v1589 = vsel %vm748, %v1588, 0.0
        %1590 = vadd.xlane.f32.xlu0 %v1589
        %v1591 = vpop.xlane.xlu0 %1590
        %v1592 = vrcp.pop %v1591
        %v1593 = vmul.f32 %v1588, %v1592
        %v1594 = vpack.c.bf16 %v1593, %v1593
        %1595 = vrot.lane.b32.xlu0 %v1203, 40
        %v1596 = vpop.permute.xlu0 %1595
        %v1598 = vsel %vm748, %v1594, 0
        %v1601 = vsel %vm812, %v1596, 0
        %1603 = vmatprep.subr.bf16.mxu0 0
        %1604 = vmatpush1.bf16.msra.mxu0 %v1601
        %1605 = vmatprep.subr.bf16.mxu0 0
        %1606 = vmatpush1.bf16.msra.mxu0 0
        %1607 = vmatprep.subr.bf16.mxu0 0
        %1608 = vmatpush1.bf16.msra.mxu0 0
        %1609 = vmatprep.subr.bf16.mxu0 0
        %1610 = vmatpush1.bf16.msra.mxu0 0
        %1611 = vmatprep.subr.bf16.mxu0 0
        %1612 = vmatpush1.bf16.msra.mxu0 0
        %1613 = vmatprep.subr.bf16.mxu0 0
        %1614 = vmatpush1.bf16.msra.mxu0 0
        %1615 = vmatprep.subr.bf16.mxu0 0
        %1616 = vmatpush1.bf16.msra.mxu0 0
        %1617 = vmatprep.subr.bf16.mxu0 0
        %1618 = vmatpush1.bf16.msra.mxu0 0
        %1619 = vmatprep.subr.bf16.mxu0 0
        %1620 = vmatpush1.bf16.msra.mxu0 0
        %1621 = vmatprep.subr.bf16.mxu0 0
        %1622 = vmatpush1.bf16.msra.mxu0 0
        %1623 = vmatprep.subr.bf16.mxu0 0
        %1624 = vmatpush1.bf16.msra.mxu0 0
        %1625 = vmatprep.subr.bf16.mxu0 0
        %1626 = vmatpush1.bf16.msra.mxu0 0
        %1627 = vmatprep.subr.bf16.mxu0 0
        %1628 = vmatpush1.bf16.msra.mxu0 0
        %1629 = vmatprep.subr.bf16.mxu0 0
        %1630 = vmatpush1.bf16.msra.mxu0 0
        %1631 = vmatprep.subr.bf16.mxu0 0
        %1632 = vmatpush1.bf16.msra.mxu0 0
        %1633 = vmatprep.subr.bf16.mxu0 0
        %1634 = vmatpush1.bf16.msra.mxu0 0
        %1635 = vmatprep.mubr.bf16.mxu0 0
        %1636 = vmatmul.mubr.bf16.gmra.mrb[0].mxu0 %v1598
        %v1637 = vpop.f32.mrb[0].mxu0
        %v1638 = vadd.f32 0.0, %v1637
        %v1639 = vpop.f32.mrb[0].mxu0
        %v1640 = vpop.f32.mrb[0].mxu0
        %v1641 = vpop.f32.mrb[0].mxu0
        %1642 = vdwg.mxu0
        %1644 = vrot.lane.b32.xlu0 %v1418, 8
        %v1645 = vpop.permute.xlu0 %1644
        %1648 = vrot.lane.b32.xlu0 %v1528, 16
        %v1649 = vpop.permute.xlu0 %1648
        %1652 = vrot.lane.b32.xlu0 %v1638, 24
        %v1653 = vpop.permute.xlu0 %1652
        %v1655 = vsel %vm748, %v1308, %v1645
        %v1656 = vsel %vm1199, %v1655, %v1649
        %v1657 = vsel %vm1201, %v1656, %v1653
        %v1658 = vpack.c.bf16 %v738, %v738
        %1660 = vrot.lane.b32.xlu0 %v1658, 96
        %v1661 = vpop.permute.xlu0 %1660
        %v1663 = vsel %vm748, %v1658, 0
        %v1666 = vsel %vm748, %v1661, 0
        %1668 = vmatprep.subr.bf16.mxu0 0
        %1669 = vmatpush1.bf16.xpose.msra.mxu0 %v1666
        %1670 = vmatprep.subr.bf16.mxu0 0
        %1671 = vmatpush1.bf16.xpose.msra.mxu0 0
        %1672 = vmatprep.subr.bf16.mxu0 0
        %1673 = vmatpush1.bf16.xpose.msra.mxu0 0
        %1674 = vmatprep.subr.bf16.mxu0 0
        %1675 = vmatpush1.bf16.xpose.msra.mxu0 0
        %1676 = vmatprep.subr.bf16.mxu0 0
        %1677 = vmatpush1.bf16.xpose.msra.mxu0 0
        %1678 = vmatprep.subr.bf16.mxu0 0
        %1679 = vmatpush1.bf16.xpose.msra.mxu0 0
        %1680 = vmatprep.subr.bf16.mxu0 0
        %1681 = vmatpush1.bf16.xpose.msra.mxu0 0
        %1682 = vmatprep.subr.bf16.mxu0 0
        %1683 = vmatpush1.bf16.xpose.msra.mxu0 0
        %1684 = vmatprep.subr.bf16.mxu0 0
        %1685 = vmatpush1.bf16.xpose.msra.mxu0 0
        %1686 = vmatprep.subr.bf16.mxu0 0
        %1687 = vmatpush1.bf16.xpose.msra.mxu0 0
        %1688 = vmatprep.subr.bf16.mxu0 0
        %1689 = vmatpush1.bf16.xpose.msra.mxu0 0
        %1690 = vmatprep.subr.bf16.mxu0 0
        %1691 = vmatpush1.bf16.xpose.msra.mxu0 0
        %1692 = vmatprep.subr.bf16.mxu0 0
        %1693 = vmatpush1.bf16.xpose.msra.mxu0 0
        %1694 = vmatprep.subr.bf16.mxu0 0
        %1695 = vmatpush1.bf16.xpose.msra.mxu0 0
        %1696 = vmatprep.subr.bf16.mxu0 0
        %1697 = vmatpush1.bf16.xpose.msra.mxu0 0
        %1698 = vmatprep.subr.bf16.mxu0 0
        %1699 = vmatpush1.bf16.xpose.msra.mxu0 0
        %1700 = vmatprep.mubr.bf16.mxu0 0
        %1701 = vmatmul.mubr.bf16.gmra.mrb[0].mxu0 %v1663
        %v1702 = vpop.f32.mrb[0].mxu0
        %v1703 = vadd.f32 0.0, %v1702
        %v1704 = vpop.f32.mrb[0].mxu0
        %v1705 = vpop.f32.mrb[0].mxu0
        %v1706 = vpop.f32.mrb[0].mxu0
        %1707 = vdwg.mxu0
        %v1708 = vsel %vm748, %v1703, -inf
        %1709 = vmax.xlane.f32.xlu0 %v1708
        %v1710 = vpop.xlane.xlu0 %1709
        %v1711 = vsub.f32 %v1703, %v1710
        %v1712 = vmul.f32 %v1711, 1.442695
        %v1713 = vpow.pop %v1712
        %v1714 = vsel %vm748, %v1713, 0.0
        %1715 = vadd.xlane.f32.xlu0 %v1714
        %v1716 = vpop.xlane.xlu0 %1715
        %v1717 = vrcp.pop %v1716
        %v1718 = vmul.f32 %v1713, %v1717
        %v1719 = vpack.c.bf16 %v1718, %v1718
        %1720 = vrot.lane.b32.xlu0 %v1658, 64
        %v1721 = vpop.permute.xlu0 %1720
        %v1723 = vsel %vm748, %v1719, 0
        %v1726 = vsel %vm812, %v1721, 0
        %1728 = vmatprep.subr.bf16.mxu0 0
        %1729 = vmatpush1.bf16.msra.mxu0 %v1726
        %1730 = vmatprep.subr.bf16.mxu0 0
        %1731 = vmatpush1.bf16.msra.mxu0 0
        %1732 = vmatprep.subr.bf16.mxu0 0
        %1733 = vmatpush1.bf16.msra.mxu0 0
        %1734 = vmatprep.subr.bf16.mxu0 0
        %1735 = vmatpush1.bf16.msra.mxu0 0
        %1736 = vmatprep.subr.bf16.mxu0 0
        %1737 = vmatpush1.bf16.msra.mxu0 0
        %1738 = vmatprep.subr.bf16.mxu0 0
        %1739 = vmatpush1.bf16.msra.mxu0 0
        %1740 = vmatprep.subr.bf16.mxu0 0
        %1741 = vmatpush1.bf16.msra.mxu0 0
        %1742 = vmatprep.subr.bf16.mxu0 0
        %1743 = vmatpush1.bf16.msra.mxu0 0
        %1744 = vmatprep.subr.bf16.mxu0 0
        %1745 = vmatpush1.bf16.msra.mxu0 0
        %1746 = vmatprep.subr.bf16.mxu0 0
        %1747 = vmatpush1.bf16.msra.mxu0 0
        %1748 = vmatprep.subr.bf16.mxu0 0
        %1749 = vmatpush1.bf16.msra.mxu0 0
        %1750 = vmatprep.subr.bf16.mxu0 0
        %1751 = vmatpush1.bf16.msra.mxu0 0
        %1752 = vmatprep.subr.bf16.mxu0 0
        %1753 = vmatpush1.bf16.msra.mxu0 0
        %1754 = vmatprep.subr.bf16.mxu0 0
        %1755 = vmatpush1.bf16.msra.mxu0 0
        %1756 = vmatprep.subr.bf16.mxu0 0
        %1757 = vmatpush1.bf16.msra.mxu0 0
        %1758 = vmatprep.subr.bf16.mxu0 0
        %1759 = vmatpush1.bf16.msra.mxu0 0
        %1760 = vmatprep.mubr.bf16.mxu0 0
        %1761 = vmatmul.mubr.bf16.gmra.mrb[0].mxu0 %v1723
        %v1762 = vpop.f32.mrb[0].mxu0
        %v1763 = vadd.f32 0.0, %v1762
        %v1764 = vpop.f32.mrb[0].mxu0
        %v1765 = vpop.f32.mrb[0].mxu0
        %v1766 = vpop.f32.mrb[0].mxu0
        %1767 = vdwg.mxu0
        %1768 = vrot.lane.b32.xlu0 %v1658, 120
        %v1769 = vpop.permute.xlu0 %1768
        %1770 = vrot.lane.b32.xlu0 %v1658, 88
        %v1771 = vpop.permute.xlu0 %1770
        %v1773 = vsel %vm748, %v1769, 0
        %v1776 = vsel %vm748, %v1771, 0
        %1778 = vmatprep.subr.bf16.mxu0 0
        %1779 = vmatpush1.bf16.xpose.msra.mxu0 %v1776
        %1780 = vmatprep.subr.bf16.mxu0 0
        %1781 = vmatpush1.bf16.xpose.msra.mxu0 0
        %1782 = vmatprep.subr.bf16.mxu0 0
        %1783 = vmatpush1.bf16.xpose.msra.mxu0 0
        %1784 = vmatprep.subr.bf16.mxu0 0
        %1785 = vmatpush1.bf16.xpose.msra.mxu0 0
        %1786 = vmatprep.subr.bf16.mxu0 0
        %1787 = vmatpush1.bf16.xpose.msra.mxu0 0
        %1788 = vmatprep.subr.bf16.mxu0 0
        %1789 = vmatpush1.bf16.xpose.msra.mxu0 0
        %1790 = vmatprep.subr.bf16.mxu0 0
        %1791 = vmatpush1.bf16.xpose.msra.mxu0 0
        %1792 = vmatprep.subr.bf16.mxu0 0
        %1793 = vmatpush1.bf16.xpose.msra.mxu0 0
        %1794 = vmatprep.subr.bf16.mxu0 0
        %1795 = vmatpush1.bf16.xpose.msra.mxu0 0
        %1796 = vmatprep.subr.bf16.mxu0 0
        %1797 = vmatpush1.bf16.xpose.msra.mxu0 0
        %1798 = vmatprep.subr.bf16.mxu0 0
        %1799 = vmatpush1.bf16.xpose.msra.mxu0 0
        %1800 = vmatprep.subr.bf16.mxu0 0
        %1801 = vmatpush1.bf16.xpose.msra.mxu0 0
        %1802 = vmatprep.subr.bf16.mxu0 0
        %1803 = vmatpush1.bf16.xpose.msra.mxu0 0
        %1804 = vmatprep.subr.bf16.mxu0 0
        %1805 = vmatpush1.bf16.xpose.msra.mxu0 0
        %1806 = vmatprep.subr.bf16.mxu0 0
        %1807 = vmatpush1.bf16.xpose.msra.mxu0 0
        %1808 = vmatprep.subr.bf16.mxu0 0
        %1809 = vmatpush1.bf16.xpose.msra.mxu0 0
        %1810 = vmatprep.mubr.bf16.mxu0 0
        %1811 = vmatmul.mubr.bf16.gmra.mrb[0].mxu0 %v1773
        %v1812 = vpop.f32.mrb[0].mxu0
        %v1813 = vadd.f32 0.0, %v1812
        %v1814 = vpop.f32.mrb[0].mxu0
        %v1815 = vpop.f32.mrb[0].mxu0
        %v1816 = vpop.f32.mrb[0].mxu0
        %1817 = vdwg.mxu0
        %v1818 = vsel %vm748, %v1813, -inf
        %1819 = vmax.xlane.f32.xlu0 %v1818
        %v1820 = vpop.xlane.xlu0 %1819
        %v1821 = vsub.f32 %v1813, %v1820
        %v1822 = vmul.f32 %v1821, 1.442695
        %v1823 = vpow.pop %v1822
        %v1824 = vsel %vm748, %v1823, 0.0
        %1825 = vadd.xlane.f32.xlu0 %v1824
        %v1826 = vpop.xlane.xlu0 %1825
        %v1827 = vrcp.pop %v1826
        %v1828 = vmul.f32 %v1823, %v1827
        %v1829 = vpack.c.bf16 %v1828, %v1828
        %1830 = vrot.lane.b32.xlu0 %v1658, 56
        %v1831 = vpop.permute.xlu0 %1830
        %v1833 = vsel %vm748, %v1829, 0
        %v1836 = vsel %vm812, %v1831, 0
        %1838 = vmatprep.subr.bf16.mxu0 0
        %1839 = vmatpush1.bf16.msra.mxu0 %v1836
        %1840 = vmatprep.subr.bf16.mxu0 0
        %1841 = vmatpush1.bf16.msra.mxu0 0
        %1842 = vmatprep.subr.bf16.mxu0 0
        %1843 = vmatpush1.bf16.msra.mxu0 0
        %1844 = vmatprep.subr.bf16.mxu0 0
        %1845 = vmatpush1.bf16.msra.mxu0 0
        %1846 = vmatprep.subr.bf16.mxu0 0
        %1847 = vmatpush1.bf16.msra.mxu0 0
        %1848 = vmatprep.subr.bf16.mxu0 0
        %1849 = vmatpush1.bf16.msra.mxu0 0
        %1850 = vmatprep.subr.bf16.mxu0 0
        %1851 = vmatpush1.bf16.msra.mxu0 0
        %1852 = vmatprep.subr.bf16.mxu0 0
        %1853 = vmatpush1.bf16.msra.mxu0 0
        %1854 = vmatprep.subr.bf16.mxu0 0
        %1855 = vmatpush1.bf16.msra.mxu0 0
        %1856 = vmatprep.subr.bf16.mxu0 0
        %1857 = vmatpush1.bf16.msra.mxu0 0
        %1858 = vmatprep.subr.bf16.mxu0 0
        %1859 = vmatpush1.bf16.msra.mxu0 0
        %1860 = vmatprep.subr.bf16.mxu0 0
        %1861 = vmatpush1.bf16.msra.mxu0 0
        %1862 = vmatprep.subr.bf16.mxu0 0
        %1863 = vmatpush1.bf16.msra.mxu0 0
        %1864 = vmatprep.subr.bf16.mxu0 0
        %1865 = vmatpush1.bf16.msra.mxu0 0
        %1866 = vmatprep.subr.bf16.mxu0 0
        %1867 = vmatpush1.bf16.msra.mxu0 0
        %1868 = vmatprep.subr.bf16.mxu0 0
        %1869 = vmatpush1.bf16.msra.mxu0 0
        %1870 = vmatprep.mubr.bf16.mxu0 0
        %1871 = vmatmul.mubr.bf16.gmra.mrb[0].mxu0 %v1833
        %v1872 = vpop.f32.mrb[0].mxu0
        %v1873 = vadd.f32 0.0, %v1872
        %v1874 = vpop.f32.mrb[0].mxu0
        %v1875 = vpop.f32.mrb[0].mxu0
        %v1876 = vpop.f32.mrb[0].mxu0
        %1877 = vdwg.mxu0
        %1878 = vrot.lane.b32.xlu0 %v1658, 112
        %v1879 = vpop.permute.xlu0 %1878
        %1880 = vrot.lane.b32.xlu0 %v1658, 80
        %v1881 = vpop.permute.xlu0 %1880
        %v1883 = vsel %vm748, %v1879, 0
        %v1886 = vsel %vm748, %v1881, 0
        %1888 = vmatprep.subr.bf16.mxu0 0
        %1889 = vmatpush1.bf16.xpose.msra.mxu0 %v1886
        %1890 = vmatprep.subr.bf16.mxu0 0
        %1891 = vmatpush1.bf16.xpose.msra.mxu0 0
        %1892 = vmatprep.subr.bf16.mxu0 0
        %1893 = vmatpush1.bf16.xpose.msra.mxu0 0
        %1894 = vmatprep.subr.bf16.mxu0 0
        %1895 = vmatpush1.bf16.xpose.msra.mxu0 0
        %1896 = vmatprep.subr.bf16.mxu0 0
        %1897 = vmatpush1.bf16.xpose.msra.mxu0 0
        %1898 = vmatprep.subr.bf16.mxu0 0
        %1899 = vmatpush1.bf16.xpose.msra.mxu0 0
        %1900 = vmatprep.subr.bf16.mxu0 0
        %1901 = vmatpush1.bf16.xpose.msra.mxu0 0
        %1902 = vmatprep.subr.bf16.mxu0 0
        %1903 = vmatpush1.bf16.xpose.msra.mxu0 0
        %1904 = vmatprep.subr.bf16.mxu0 0
        %1905 = vmatpush1.bf16.xpose.msra.mxu0 0
        %1906 = vmatprep.subr.bf16.mxu0 0
        %1907 = vmatpush1.bf16.xpose.msra.mxu0 0
        %1908 = vmatprep.subr.bf16.mxu0 0
        %1909 = vmatpush1.bf16.xpose.msra.mxu0 0
        %1910 = vmatprep.subr.bf16.mxu0 0
        %1911 = vmatpush1.bf16.xpose.msra.mxu0 0
        %1912 = vmatprep.subr.bf16.mxu0 0
        %1913 = vmatpush1.bf16.xpose.msra.mxu0 0
        %1914 = vmatprep.subr.bf16.mxu0 0
        %1915 = vmatpush1.bf16.xpose.msra.mxu0 0
        %1916 = vmatprep.subr.bf16.mxu0 0
        %1917 = vmatpush1.bf16.xpose.msra.mxu0 0
        %1918 = vmatprep.subr.bf16.mxu0 0
        %1919 = vmatpush1.bf16.xpose.msra.mxu0 0
        %1920 = vmatprep.mubr.bf16.mxu0 0
        %1921 = vmatmul.mubr.bf16.gmra.mrb[0].mxu0 %v1883
        %v1922 = vpop.f32.mrb[0].mxu0
        %v1923 = vadd.f32 0.0, %v1922
        %v1924 = vpop.f32.mrb[0].mxu0
        %v1925 = vpop.f32.mrb[0].mxu0
        %v1926 = vpop.f32.mrb[0].mxu0
        %1927 = vdwg.mxu0
        %v1928 = vsel %vm748, %v1923, -inf
        %1929 = vmax.xlane.f32.xlu0 %v1928
        %v1930 = vpop.xlane.xlu0 %1929
        %v1931 = vsub.f32 %v1923, %v1930
        %v1932 = vmul.f32 %v1931, 1.442695
        %v1933 = vpow.pop %v1932
        %v1934 = vsel %vm748, %v1933, 0.0
        %1935 = vadd.xlane.f32.xlu0 %v1934
        %v1936 = vpop.xlane.xlu0 %1935
        %v1937 = vrcp.pop %v1936
        %v1938 = vmul.f32 %v1933, %v1937
        %v1939 = vpack.c.bf16 %v1938, %v1938
        %1940 = vrot.lane.b32.xlu0 %v1658, 48
        %v1941 = vpop.permute.xlu0 %1940
        %v1943 = vsel %vm748, %v1939, 0
        %v1946 = vsel %vm812, %v1941, 0
        %1948 = vmatprep.subr.bf16.mxu0 0
        %1949 = vmatpush1.bf16.msra.mxu0 %v1946
        %1950 = vmatprep.subr.bf16.mxu0 0
        %1951 = vmatpush1.bf16.msra.mxu0 0
        %1952 = vmatprep.subr.bf16.mxu0 0
        %1953 = vmatpush1.bf16.msra.mxu0 0
        %1954 = vmatprep.subr.bf16.mxu0 0
        %1955 = vmatpush1.bf16.msra.mxu0 0
        %1956 = vmatprep.subr.bf16.mxu0 0
        %1957 = vmatpush1.bf16.msra.mxu0 0
        %1958 = vmatprep.subr.bf16.mxu0 0
        %1959 = vmatpush1.bf16.msra.mxu0 0
        %1960 = vmatprep.subr.bf16.mxu0 0
        %1961 = vmatpush1.bf16.msra.mxu0 0
        %1962 = vmatprep.subr.bf16.mxu0 0
        %1963 = vmatpush1.bf16.msra.mxu0 0
        %1964 = vmatprep.subr.bf16.mxu0 0
        %1965 = vmatpush1.bf16.msra.mxu0 0
        %1966 = vmatprep.subr.bf16.mxu0 0
        %1967 = vmatpush1.bf16.msra.mxu0 0
        %1968 = vmatprep.subr.bf16.mxu0 0
        %1969 = vmatpush1.bf16.msra.mxu0 0
        %1970 = vmatprep.subr.bf16.mxu0 0
        %1971 = vmatpush1.bf16.msra.mxu0 0
        %1972 = vmatprep.subr.bf16.mxu0 0
        %1973 = vmatpush1.bf16.msra.mxu0 0
        %1974 = vmatprep.subr.bf16.mxu0 0
        %1975 = vmatpush1.bf16.msra.mxu0 0
        %1976 = vmatprep.subr.bf16.mxu0 0
        %1977 = vmatpush1.bf16.msra.mxu0 0
        %1978 = vmatprep.subr.bf16.mxu0 0
        %1979 = vmatpush1.bf16.msra.mxu0 0
        %1980 = vmatprep.mubr.bf16.mxu0 0
        %1981 = vmatmul.mubr.bf16.gmra.mrb[0].mxu0 %v1943
        %v1982 = vpop.f32.mrb[0].mxu0
        %v1983 = vadd.f32 0.0, %v1982
        %v1984 = vpop.f32.mrb[0].mxu0
        %v1985 = vpop.f32.mrb[0].mxu0
        %v1986 = vpop.f32.mrb[0].mxu0
        %1987 = vdwg.mxu0
        %1988 = vrot.lane.b32.xlu0 %v1658, 104
        %v1989 = vpop.permute.xlu0 %1988
        %1990 = vrot.lane.b32.xlu0 %v1658, 72
        %v1991 = vpop.permute.xlu0 %1990
        %v1993 = vsel %vm748, %v1989, 0
        %v1996 = vsel %vm748, %v1991, 0
        %1998 = vmatprep.subr.bf16.mxu0 0
        %1999 = vmatpush1.bf16.xpose.msra.mxu0 %v1996
        %2000 = vmatprep.subr.bf16.mxu0 0
        %2001 = vmatpush1.bf16.xpose.msra.mxu0 0
        %2002 = vmatprep.subr.bf16.mxu0 0
        %2003 = vmatpush1.bf16.xpose.msra.mxu0 0
        %2004 = vmatprep.subr.bf16.mxu0 0
        %2005 = vmatpush1.bf16.xpose.msra.mxu0 0
        %2006 = vmatprep.subr.bf16.mxu0 0
        %2007 = vmatpush1.bf16.xpose.msra.mxu0 0
        %2008 = vmatprep.subr.bf16.mxu0 0
        %2009 = vmatpush1.bf16.xpose.msra.mxu0 0
        %2010 = vmatprep.subr.bf16.mxu0 0
        %2011 = vmatpush1.bf16.xpose.msra.mxu0 0
        %2012 = vmatprep.subr.bf16.mxu0 0
        %2013 = vmatpush1.bf16.xpose.msra.mxu0 0
        %2014 = vmatprep.subr.bf16.mxu0 0
        %2015 = vmatpush1.bf16.xpose.msra.mxu0 0
        %2016 = vmatprep.subr.bf16.mxu0 0
        %2017 = vmatpush1.bf16.xpose.msra.mxu0 0
        %2018 = vmatprep.subr.bf16.mxu0 0
        %2019 = vmatpush1.bf16.xpose.msra.mxu0 0
        %2020 = vmatprep.subr.bf16.mxu0 0
        %2021 = vmatpush1.bf16.xpose.msra.mxu0 0
        %2022 = vmatprep.subr.bf16.mxu0 0
        %2023 = vmatpush1.bf16.xpose.msra.mxu0 0
        %2024 = vmatprep.subr.bf16.mxu0 0
        %2025 = vmatpush1.bf16.xpose.msra.mxu0 0
        %2026 = vmatprep.subr.bf16.mxu0 0
        %2027 = vmatpush1.bf16.xpose.msra.mxu0 0
        %2028 = vmatprep.subr.bf16.mxu0 0
        %2029 = vmatpush1.bf16.xpose.msra.mxu0 0
        %2030 = vmatprep.mubr.bf16.mxu0 0
        %2031 = vmatmul.mubr.bf16.gmra.mrb[0].mxu0 %v1993
        %v2032 = vpop.f32.mrb[0].mxu0
        %v2033 = vadd.f32 0.0, %v2032
        %v2034 = vpop.f32.mrb[0].mxu0
        %v2035 = vpop.f32.mrb[0].mxu0
        %v2036 = vpop.f32.mrb[0].mxu0
        %2037 = vdwg.mxu0
        %v2038 = vsel %vm748, %v2033, -inf
        %2039 = vmax.xlane.f32.xlu0 %v2038
        %v2040 = vpop.xlane.xlu0 %2039
        %v2041 = vsub.f32 %v2033, %v2040
        %v2042 = vmul.f32 %v2041, 1.442695
        %v2043 = vpow.pop %v2042
        %v2044 = vsel %vm748, %v2043, 0.0
        %2045 = vadd.xlane.f32.xlu0 %v2044
        %v2046 = vpop.xlane.xlu0 %2045
        %v2047 = vrcp.pop %v2046
        %v2048 = vmul.f32 %v2043, %v2047
        %v2049 = vpack.c.bf16 %v2048, %v2048
        %2050 = vrot.lane.b32.xlu0 %v1658, 40
        %v2051 = vpop.permute.xlu0 %2050
        %v2053 = vsel %vm748, %v2049, 0
        %v2056 = vsel %vm812, %v2051, 0
        %2058 = vmatprep.subr.bf16.mxu0 0
        %2059 = vmatpush1.bf16.msra.mxu0 %v2056
        %2060 = vmatprep.subr.bf16.mxu0 0
        %2061 = vmatpush1.bf16.msra.mxu0 0
        %2062 = vmatprep.subr.bf16.mxu0 0
        %2063 = vmatpush1.bf16.msra.mxu0 0
        %2064 = vmatprep.subr.bf16.mxu0 0
        %2065 = vmatpush1.bf16.msra.mxu0 0
        %2066 = vmatprep.subr.bf16.mxu0 0
        %2067 = vmatpush1.bf16.msra.mxu0 0
        %2068 = vmatprep.subr.bf16.mxu0 0
        %2069 = vmatpush1.bf16.msra.mxu0 0
        %2070 = vmatprep.subr.bf16.mxu0 0
        %2071 = vmatpush1.bf16.msra.mxu0 0
        %2072 = vmatprep.subr.bf16.mxu0 0
        %2073 = vmatpush1.bf16.msra.mxu0 0
        %2074 = vmatprep.subr.bf16.mxu0 0
        %2075 = vmatpush1.bf16.msra.mxu0 0
        %2076 = vmatprep.subr.bf16.mxu0 0
        %2077 = vmatpush1.bf16.msra.mxu0 0
        %2078 = vmatprep.subr.bf16.mxu0 0
        %2079 = vmatpush1.bf16.msra.mxu0 0
        %2080 = vmatprep.subr.bf16.mxu0 0
        %2081 = vmatpush1.bf16.msra.mxu0 0
        %2082 = vmatprep.subr.bf16.mxu0 0
        %2083 = vmatpush1.bf16.msra.mxu0 0
        %2084 = vmatprep.subr.bf16.mxu0 0
        %2085 = vmatpush1.bf16.msra.mxu0 0
        %2086 = vmatprep.subr.bf16.mxu0 0
        %2087 = vmatpush1.bf16.msra.mxu0 0
        %2088 = vmatprep.subr.bf16.mxu0 0
        %2089 = vmatpush1.bf16.msra.mxu0 0
        %2090 = vmatprep.mubr.bf16.mxu0 0
        %2091 = vmatmul.mubr.bf16.gmra.mrb[0].mxu0 %v2053
        %v2092 = vpop.f32.mrb[0].mxu0
        %v2093 = vadd.f32 0.0, %v2092
        %v2094 = vpop.f32.mrb[0].mxu0
        %v2095 = vpop.f32.mrb[0].mxu0
        %v2096 = vpop.f32.mrb[0].mxu0
        %2097 = vdwg.mxu0
        %2099 = vrot.lane.b32.xlu0 %v1873, 8
        %v2100 = vpop.permute.xlu0 %2099
        %2103 = vrot.lane.b32.xlu0 %v1983, 16
        %v2104 = vpop.permute.xlu0 %2103
        %2107 = vrot.lane.b32.xlu0 %v2093, 24
        %v2108 = vpop.permute.xlu0 %2107
        %v2110 = vsel %vm748, %v1763, %v2100
        %v2111 = vsel %vm1199, %v2110, %v2104
        %v2112 = vsel %vm1201, %v2111, %v2108
        %v2113 = vpack.c.bf16 %v741, %v741
        %2115 = vrot.lane.b32.xlu0 %v2113, 96
        %v2116 = vpop.permute.xlu0 %2115
        %v2118 = vsel %vm748, %v2113, 0
        %v2121 = vsel %vm748, %v2116, 0
        %2123 = vmatprep.subr.bf16.mxu0 0
        %2124 = vmatpush1.bf16.xpose.msra.mxu0 %v2121
        %2125 = vmatprep.subr.bf16.mxu0 0
        %2126 = vmatpush1.bf16.xpose.msra.mxu0 0
        %2127 = vmatprep.subr.bf16.mxu0 0
        %2128 = vmatpush1.bf16.xpose.msra.mxu0 0
        %2129 = vmatprep.subr.bf16.mxu0 0
        %2130 = vmatpush1.bf16.xpose.msra.mxu0 0
        %2131 = vmatprep.subr.bf16.mxu0 0
        %2132 = vmatpush1.bf16.xpose.msra.mxu0 0
        %2133 = vmatprep.subr.bf16.mxu0 0
        %2134 = vmatpush1.bf16.xpose.msra.mxu0 0
        %2135 = vmatprep.subr.bf16.mxu0 0
        %2136 = vmatpush1.bf16.xpose.msra.mxu0 0
        %2137 = vmatprep.subr.bf16.mxu0 0
        %2138 = vmatpush1.bf16.xpose.msra.mxu0 0
        %2139 = vmatprep.subr.bf16.mxu0 0
        %2140 = vmatpush1.bf16.xpose.msra.mxu0 0
        %2141 = vmatprep.subr.bf16.mxu0 0
        %2142 = vmatpush1.bf16.xpose.msra.mxu0 0
        %2143 = vmatprep.subr.bf16.mxu0 0
        %2144 = vmatpush1.bf16.xpose.msra.mxu0 0
        %2145 = vmatprep.subr.bf16.mxu0 0
        %2146 = vmatpush1.bf16.xpose.msra.mxu0 0
        %2147 = vmatprep.subr.bf16.mxu0 0
        %2148 = vmatpush1.bf16.xpose.msra.mxu0 0
        %2149 = vmatprep.subr.bf16.mxu0 0
        %2150 = vmatpush1.bf16.xpose.msra.mxu0 0
        %2151 = vmatprep.subr.bf16.mxu0 0
        %2152 = vmatpush1.bf16.xpose.msra.mxu0 0
        %2153 = vmatprep.subr.bf16.mxu0 0
        %2154 = vmatpush1.bf16.xpose.msra.mxu0 0
        %2155 = vmatprep.mubr.bf16.mxu0 0
        %2156 = vmatmul.mubr.bf16.gmra.mrb[0].mxu0 %v2118
        %v2157 = vpop.f32.mrb[0].mxu0
        %v2158 = vadd.f32 0.0, %v2157
        %v2159 = vpop.f32.mrb[0].mxu0
        %v2160 = vpop.f32.mrb[0].mxu0
        %v2161 = vpop.f32.mrb[0].mxu0
        %2162 = vdwg.mxu0
        %v2163 = vsel %vm748, %v2158, -inf
        %2164 = vmax.xlane.f32.xlu0 %v2163
        %v2165 = vpop.xlane.xlu0 %2164
        %v2166 = vsub.f32 %v2158, %v2165
        %v2167 = vmul.f32 %v2166, 1.442695
        %v2168 = vpow.pop %v2167
        %v2169 = vsel %vm748, %v2168, 0.0
        %2170 = vadd.xlane.f32.xlu0 %v2169
        %v2171 = vpop.xlane.xlu0 %2170
        %v2172 = vrcp.pop %v2171
        %v2173 = vmul.f32 %v2168, %v2172
        %v2174 = vpack.c.bf16 %v2173, %v2173
        %2175 = vrot.lane.b32.xlu0 %v2113, 64
        %v2176 = vpop.permute.xlu0 %2175
        %v2178 = vsel %vm748, %v2174, 0
        %v2181 = vsel %vm812, %v2176, 0
        %2183 = vmatprep.subr.bf16.mxu0 0
        %2184 = vmatpush1.bf16.msra.mxu0 %v2181
        %2185 = vmatprep.subr.bf16.mxu0 0
        %2186 = vmatpush1.bf16.msra.mxu0 0
        %2187 = vmatprep.subr.bf16.mxu0 0
        %2188 = vmatpush1.bf16.msra.mxu0 0
        %2189 = vmatprep.subr.bf16.mxu0 0
        %2190 = vmatpush1.bf16.msra.mxu0 0
        %2191 = vmatprep.subr.bf16.mxu0 0
        %2192 = vmatpush1.bf16.msra.mxu0 0
        %2193 = vmatprep.subr.bf16.mxu0 0
        %2194 = vmatpush1.bf16.msra.mxu0 0
        %2195 = vmatprep.subr.bf16.mxu0 0
        %2196 = vmatpush1.bf16.msra.mxu0 0
        %2197 = vmatprep.subr.bf16.mxu0 0
        %2198 = vmatpush1.bf16.msra.mxu0 0
        %2199 = vmatprep.subr.bf16.mxu0 0
        %2200 = vmatpush1.bf16.msra.mxu0 0
        %2201 = vmatprep.subr.bf16.mxu0 0
        %2202 = vmatpush1.bf16.msra.mxu0 0
        %2203 = vmatprep.subr.bf16.mxu0 0
        %2204 = vmatpush1.bf16.msra.mxu0 0
        %2205 = vmatprep.subr.bf16.mxu0 0
        %2206 = vmatpush1.bf16.msra.mxu0 0
        %2207 = vmatprep.subr.bf16.mxu0 0
        %2208 = vmatpush1.bf16.msra.mxu0 0
        %2209 = vmatprep.subr.bf16.mxu0 0
        %2210 = vmatpush1.bf16.msra.mxu0 0
        %2211 = vmatprep.subr.bf16.mxu0 0
        %2212 = vmatpush1.bf16.msra.mxu0 0
        %2213 = vmatprep.subr.bf16.mxu0 0
        %2214 = vmatpush1.bf16.msra.mxu0 0
        %2215 = vmatprep.mubr.bf16.mxu0 0
        %2216 = vmatmul.mubr.bf16.gmra.mrb[0].mxu0 %v2178
        %v2217 = vpop.f32.mrb[0].mxu0
        %v2218 = vadd.f32 0.0, %v2217
        %v2219 = vpop.f32.mrb[0].mxu0
        %v2220 = vpop.f32.mrb[0].mxu0
        %v2221 = vpop.f32.mrb[0].mxu0
        %2222 = vdwg.mxu0
        %2223 = vrot.lane.b32.xlu0 %v2113, 120
        %v2224 = vpop.permute.xlu0 %2223
        %2225 = vrot.lane.b32.xlu0 %v2113, 88
        %v2226 = vpop.permute.xlu0 %2225
        %v2228 = vsel %vm748, %v2224, 0
        %v2231 = vsel %vm748, %v2226, 0
        %2233 = vmatprep.subr.bf16.mxu0 0
        %2234 = vmatpush1.bf16.xpose.msra.mxu0 %v2231
        %2235 = vmatprep.subr.bf16.mxu0 0
        %2236 = vmatpush1.bf16.xpose.msra.mxu0 0
        %2237 = vmatprep.subr.bf16.mxu0 0
        %2238 = vmatpush1.bf16.xpose.msra.mxu0 0
        %2239 = vmatprep.subr.bf16.mxu0 0
        %2240 = vmatpush1.bf16.xpose.msra.mxu0 0
        %2241 = vmatprep.subr.bf16.mxu0 0
        %2242 = vmatpush1.bf16.xpose.msra.mxu0 0
        %2243 = vmatprep.subr.bf16.mxu0 0
        %2244 = vmatpush1.bf16.xpose.msra.mxu0 0
        %2245 = vmatprep.subr.bf16.mxu0 0
        %2246 = vmatpush1.bf16.xpose.msra.mxu0 0
        %2247 = vmatprep.subr.bf16.mxu0 0
        %2248 = vmatpush1.bf16.xpose.msra.mxu0 0
        %2249 = vmatprep.subr.bf16.mxu0 0
        %2250 = vmatpush1.bf16.xpose.msra.mxu0 0
        %2251 = vmatprep.subr.bf16.mxu0 0
        %2252 = vmatpush1.bf16.xpose.msra.mxu0 0
        %2253 = vmatprep.subr.bf16.mxu0 0
        %2254 = vmatpush1.bf16.xpose.msra.mxu0 0
        %2255 = vmatprep.subr.bf16.mxu0 0
        %2256 = vmatpush1.bf16.xpose.msra.mxu0 0
        %2257 = vmatprep.subr.bf16.mxu0 0
        %2258 = vmatpush1.bf16.xpose.msra.mxu0 0
        %2259 = vmatprep.subr.bf16.mxu0 0
        %2260 = vmatpush1.bf16.xpose.msra.mxu0 0
        %2261 = vmatprep.subr.bf16.mxu0 0
        %2262 = vmatpush1.bf16.xpose.msra.mxu0 0
        %2263 = vmatprep.subr.bf16.mxu0 0
        %2264 = vmatpush1.bf16.xpose.msra.mxu0 0
        %2265 = vmatprep.mubr.bf16.mxu0 0
        %2266 = vmatmul.mubr.bf16.gmra.mrb[0].mxu0 %v2228
        %v2267 = vpop.f32.mrb[0].mxu0
        %v2268 = vadd.f32 0.0, %v2267
        %v2269 = vpop.f32.mrb[0].mxu0
        %v2270 = vpop.f32.mrb[0].mxu0
        %v2271 = vpop.f32.mrb[0].mxu0
        %2272 = vdwg.mxu0
        %v2273 = vsel %vm748, %v2268, -inf
        %2274 = vmax.xlane.f32.xlu0 %v2273
        %v2275 = vpop.xlane.xlu0 %2274
        %v2276 = vsub.f32 %v2268, %v2275
        %v2277 = vmul.f32 %v2276, 1.442695
        %v2278 = vpow.pop %v2277
        %v2279 = vsel %vm748, %v2278, 0.0
        %2280 = vadd.xlane.f32.xlu0 %v2279
        %v2281 = vpop.xlane.xlu0 %2280
        %v2282 = vrcp.pop %v2281
        %v2283 = vmul.f32 %v2278, %v2282
        %v2284 = vpack.c.bf16 %v2283, %v2283
        %2285 = vrot.lane.b32.xlu0 %v2113, 56
        %v2286 = vpop.permute.xlu0 %2285
        %v2288 = vsel %vm748, %v2284, 0
        %v2291 = vsel %vm812, %v2286, 0
        %2293 = vmatprep.subr.bf16.mxu0 0
        %2294 = vmatpush1.bf16.msra.mxu0 %v2291
        %2295 = vmatprep.subr.bf16.mxu0 0
        %2296 = vmatpush1.bf16.msra.mxu0 0
        %2297 = vmatprep.subr.bf16.mxu0 0
        %2298 = vmatpush1.bf16.msra.mxu0 0
        %2299 = vmatprep.subr.bf16.mxu0 0
        %2300 = vmatpush1.bf16.msra.mxu0 0
        %2301 = vmatprep.subr.bf16.mxu0 0
        %2302 = vmatpush1.bf16.msra.mxu0 0
        %2303 = vmatprep.subr.bf16.mxu0 0
        %2304 = vmatpush1.bf16.msra.mxu0 0
        %2305 = vmatprep.subr.bf16.mxu0 0
        %2306 = vmatpush1.bf16.msra.mxu0 0
        %2307 = vmatprep.subr.bf16.mxu0 0
        %2308 = vmatpush1.bf16.msra.mxu0 0
        %2309 = vmatprep.subr.bf16.mxu0 0
        %2310 = vmatpush1.bf16.msra.mxu0 0
        %2311 = vmatprep.subr.bf16.mxu0 0
        %2312 = vmatpush1.bf16.msra.mxu0 0
        %2313 = vmatprep.subr.bf16.mxu0 0
        %2314 = vmatpush1.bf16.msra.mxu0 0
        %2315 = vmatprep.subr.bf16.mxu0 0
        %2316 = vmatpush1.bf16.msra.mxu0 0
        %2317 = vmatprep.subr.bf16.mxu0 0
        %2318 = vmatpush1.bf16.msra.mxu0 0
        %2319 = vmatprep.subr.bf16.mxu0 0
        %2320 = vmatpush1.bf16.msra.mxu0 0
        %2321 = vmatprep.subr.bf16.mxu0 0
        %2322 = vmatpush1.bf16.msra.mxu0 0
        %2323 = vmatprep.subr.bf16.mxu0 0
        %2324 = vmatpush1.bf16.msra.mxu0 0
        %2325 = vmatprep.mubr.bf16.mxu0 0
        %2326 = vmatmul.mubr.bf16.gmra.mrb[0].mxu0 %v2288
        %v2327 = vpop.f32.mrb[0].mxu0
        %v2328 = vadd.f32 0.0, %v2327
        %v2329 = vpop.f32.mrb[0].mxu0
        %v2330 = vpop.f32.mrb[0].mxu0
        %v2331 = vpop.f32.mrb[0].mxu0
        %2332 = vdwg.mxu0
        %2333 = vrot.lane.b32.xlu0 %v2113, 112
        %v2334 = vpop.permute.xlu0 %2333
        %2335 = vrot.lane.b32.xlu0 %v2113, 80
        %v2336 = vpop.permute.xlu0 %2335
        %v2338 = vsel %vm748, %v2334, 0
        %v2341 = vsel %vm748, %v2336, 0
        %2343 = vmatprep.subr.bf16.mxu0 0
        %2344 = vmatpush1.bf16.xpose.msra.mxu0 %v2341
        %2345 = vmatprep.subr.bf16.mxu0 0
        %2346 = vmatpush1.bf16.xpose.msra.mxu0 0
        %2347 = vmatprep.subr.bf16.mxu0 0
        %2348 = vmatpush1.bf16.xpose.msra.mxu0 0
        %2349 = vmatprep.subr.bf16.mxu0 0
        %2350 = vmatpush1.bf16.xpose.msra.mxu0 0
        %2351 = vmatprep.subr.bf16.mxu0 0
        %2352 = vmatpush1.bf16.xpose.msra.mxu0 0
        %2353 = vmatprep.subr.bf16.mxu0 0
        %2354 = vmatpush1.bf16.xpose.msra.mxu0 0
        %2355 = vmatprep.subr.bf16.mxu0 0
        %2356 = vmatpush1.bf16.xpose.msra.mxu0 0
        %2357 = vmatprep.subr.bf16.mxu0 0
        %2358 = vmatpush1.bf16.xpose.msra.mxu0 0
        %2359 = vmatprep.subr.bf16.mxu0 0
        %2360 = vmatpush1.bf16.xpose.msra.mxu0 0
        %2361 = vmatprep.subr.bf16.mxu0 0
        %2362 = vmatpush1.bf16.xpose.msra.mxu0 0
        %2363 = vmatprep.subr.bf16.mxu0 0
        %2364 = vmatpush1.bf16.xpose.msra.mxu0 0
        %2365 = vmatprep.subr.bf16.mxu0 0
        %2366 = vmatpush1.bf16.xpose.msra.mxu0 0
        %2367 = vmatprep.subr.bf16.mxu0 0
        %2368 = vmatpush1.bf16.xpose.msra.mxu0 0
        %2369 = vmatprep.subr.bf16.mxu0 0
        %2370 = vmatpush1.bf16.xpose.msra.mxu0 0
        %2371 = vmatprep.subr.bf16.mxu0 0
        %2372 = vmatpush1.bf16.xpose.msra.mxu0 0
        %2373 = vmatprep.subr.bf16.mxu0 0
        %2374 = vmatpush1.bf16.xpose.msra.mxu0 0
        %2375 = vmatprep.mubr.bf16.mxu0 0
        %2376 = vmatmul.mubr.bf16.gmra.mrb[0].mxu0 %v2338
        %v2377 = vpop.f32.mrb[0].mxu0
        %v2378 = vadd.f32 0.0, %v2377
        %v2379 = vpop.f32.mrb[0].mxu0
        %v2380 = vpop.f32.mrb[0].mxu0
        %v2381 = vpop.f32.mrb[0].mxu0
        %2382 = vdwg.mxu0
        %v2383 = vsel %vm748, %v2378, -inf
        %2384 = vmax.xlane.f32.xlu0 %v2383
        %v2385 = vpop.xlane.xlu0 %2384
        %v2386 = vsub.f32 %v2378, %v2385
        %v2387 = vmul.f32 %v2386, 1.442695
        %v2388 = vpow.pop %v2387
        %v2389 = vsel %vm748, %v2388, 0.0
        %2390 = vadd.xlane.f32.xlu0 %v2389
        %v2391 = vpop.xlane.xlu0 %2390
        %v2392 = vrcp.pop %v2391
        %v2393 = vmul.f32 %v2388, %v2392
        %v2394 = vpack.c.bf16 %v2393, %v2393
        %2395 = vrot.lane.b32.xlu0 %v2113, 48
        %v2396 = vpop.permute.xlu0 %2395
        %v2398 = vsel %vm748, %v2394, 0
        %v2401 = vsel %vm812, %v2396, 0
        %2403 = vmatprep.subr.bf16.mxu0 0
        %2404 = vmatpush1.bf16.msra.mxu0 %v2401
        %2405 = vmatprep.subr.bf16.mxu0 0
        %2406 = vmatpush1.bf16.msra.mxu0 0
        %2407 = vmatprep.subr.bf16.mxu0 0
        %2408 = vmatpush1.bf16.msra.mxu0 0
        %2409 = vmatprep.subr.bf16.mxu0 0
        %2410 = vmatpush1.bf16.msra.mxu0 0
        %2411 = vmatprep.subr.bf16.mxu0 0
        %2412 = vmatpush1.bf16.msra.mxu0 0
        %2413 = vmatprep.subr.bf16.mxu0 0
        %2414 = vmatpush1.bf16.msra.mxu0 0
        %2415 = vmatprep.subr.bf16.mxu0 0
        %2416 = vmatpush1.bf16.msra.mxu0 0
        %2417 = vmatprep.subr.bf16.mxu0 0
        %2418 = vmatpush1.bf16.msra.mxu0 0
        %2419 = vmatprep.subr.bf16.mxu0 0
        %2420 = vmatpush1.bf16.msra.mxu0 0
        %2421 = vmatprep.subr.bf16.mxu0 0
        %2422 = vmatpush1.bf16.msra.mxu0 0
        %2423 = vmatprep.subr.bf16.mxu0 0
        %2424 = vmatpush1.bf16.msra.mxu0 0
        %2425 = vmatprep.subr.bf16.mxu0 0
        %2426 = vmatpush1.bf16.msra.mxu0 0
        %2427 = vmatprep.subr.bf16.mxu0 0
        %2428 = vmatpush1.bf16.msra.mxu0 0
        %2429 = vmatprep.subr.bf16.mxu0 0
        %2430 = vmatpush1.bf16.msra.mxu0 0
        %2431 = vmatprep.subr.bf16.mxu0 0
        %2432 = vmatpush1.bf16.msra.mxu0 0
        %2433 = vmatprep.subr.bf16.mxu0 0
        %2434 = vmatpush1.bf16.msra.mxu0 0
        %2435 = vmatprep.mubr.bf16.mxu0 0
        %2436 = vmatmul.mubr.bf16.gmra.mrb[0].mxu0 %v2398
        %v2437 = vpop.f32.mrb[0].mxu0
        %v2438 = vadd.f32 0.0, %v2437
        %v2439 = vpop.f32.mrb[0].mxu0
        %v2440 = vpop.f32.mrb[0].mxu0
        %v2441 = vpop.f32.mrb[0].mxu0
        %2442 = vdwg.mxu0
        %2443 = vrot.lane.b32.xlu0 %v2113, 104
        %v2444 = vpop.permute.xlu0 %2443
        %2445 = vrot.lane.b32.xlu0 %v2113, 72
        %v2446 = vpop.permute.xlu0 %2445
        %v2448 = vsel %vm748, %v2444, 0
        %v2451 = vsel %vm748, %v2446, 0
        %2453 = vmatprep.subr.bf16.mxu0 0
        %2454 = vmatpush1.bf16.xpose.msra.mxu0 %v2451
        %2455 = vmatprep.subr.bf16.mxu0 0
        %2456 = vmatpush1.bf16.xpose.msra.mxu0 0
        %2457 = vmatprep.subr.bf16.mxu0 0
        %2458 = vmatpush1.bf16.xpose.msra.mxu0 0
        %2459 = vmatprep.subr.bf16.mxu0 0
        %2460 = vmatpush1.bf16.xpose.msra.mxu0 0
        %2461 = vmatprep.subr.bf16.mxu0 0
        %2462 = vmatpush1.bf16.xpose.msra.mxu0 0
        %2463 = vmatprep.subr.bf16.mxu0 0
        %2464 = vmatpush1.bf16.xpose.msra.mxu0 0
        %2465 = vmatprep.subr.bf16.mxu0 0
        %2466 = vmatpush1.bf16.xpose.msra.mxu0 0
        %2467 = vmatprep.subr.bf16.mxu0 0
        %2468 = vmatpush1.bf16.xpose.msra.mxu0 0
        %2469 = vmatprep.subr.bf16.mxu0 0
        %2470 = vmatpush1.bf16.xpose.msra.mxu0 0
        %2471 = vmatprep.subr.bf16.mxu0 0
        %2472 = vmatpush1.bf16.xpose.msra.mxu0 0
        %2473 = vmatprep.subr.bf16.mxu0 0
        %2474 = vmatpush1.bf16.xpose.msra.mxu0 0
        %2475 = vmatprep.subr.bf16.mxu0 0
        %2476 = vmatpush1.bf16.xpose.msra.mxu0 0
        %2477 = vmatprep.subr.bf16.mxu0 0
        %2478 = vmatpush1.bf16.xpose.msra.mxu0 0
        %2479 = vmatprep.subr.bf16.mxu0 0
        %2480 = vmatpush1.bf16.xpose.msra.mxu0 0
        %2481 = vmatprep.subr.bf16.mxu0 0
        %2482 = vmatpush1.bf16.xpose.msra.mxu0 0
        %2483 = vmatprep.subr.bf16.mxu0 0
        %2484 = vmatpush1.bf16.xpose.msra.mxu0 0
        %2485 = vmatprep.mubr.bf16.mxu0 0
        %2486 = vmatmul.mubr.bf16.gmra.mrb[0].mxu0 %v2448
        %v2487 = vpop.f32.mrb[0].mxu0
        %v2488 = vadd.f32 0.0, %v2487
        %v2489 = vpop.f32.mrb[0].mxu0
        %v2490 = vpop.f32.mrb[0].mxu0
        %v2491 = vpop.f32.mrb[0].mxu0
        %2492 = vdwg.mxu0
        %v2493 = vsel %vm748, %v2488, -inf
        %2494 = vmax.xlane.f32.xlu0 %v2493
        %v2495 = vpop.xlane.xlu0 %2494
        %v2496 = vsub.f32 %v2488, %v2495
        %v2497 = vmul.f32 %v2496, 1.442695
        %v2498 = vpow.pop %v2497
        %v2499 = vsel %vm748, %v2498, 0.0
        %2500 = vadd.xlane.f32.xlu0 %v2499
        %v2501 = vpop.xlane.xlu0 %2500
        %v2502 = vrcp.pop %v2501
        %v2503 = vmul.f32 %v2498, %v2502
        %v2504 = vpack.c.bf16 %v2503, %v2503
        %2505 = vrot.lane.b32.xlu0 %v2113, 40
        %v2506 = vpop.permute.xlu0 %2505
        %v2508 = vsel %vm748, %v2504, 0
        %v2511 = vsel %vm812, %v2506, 0
        %2513 = vmatprep.subr.bf16.mxu0 0
        %2514 = vmatpush1.bf16.msra.mxu0 %v2511
        %2515 = vmatprep.subr.bf16.mxu0 0
        %2516 = vmatpush1.bf16.msra.mxu0 0
        %2517 = vmatprep.subr.bf16.mxu0 0
        %2518 = vmatpush1.bf16.msra.mxu0 0
        %2519 = vmatprep.subr.bf16.mxu0 0
        %2520 = vmatpush1.bf16.msra.mxu0 0
        %2521 = vmatprep.subr.bf16.mxu0 0
        %2522 = vmatpush1.bf16.msra.mxu0 0
        %2523 = vmatprep.subr.bf16.mxu0 0
        %2524 = vmatpush1.bf16.msra.mxu0 0
        %2525 = vmatprep.subr.bf16.mxu0 0
        %2526 = vmatpush1.bf16.msra.mxu0 0
        %2527 = vmatprep.subr.bf16.mxu0 0
        %2528 = vmatpush1.bf16.msra.mxu0 0
        %2529 = vmatprep.subr.bf16.mxu0 0
        %2530 = vmatpush1.bf16.msra.mxu0 0
        %2531 = vmatprep.subr.bf16.mxu0 0
        %2532 = vmatpush1.bf16.msra.mxu0 0
        %2533 = vmatprep.subr.bf16.mxu0 0
        %2534 = vmatpush1.bf16.msra.mxu0 0
        %2535 = vmatprep.subr.bf16.mxu0 0
        %2536 = vmatpush1.bf16.msra.mxu0 0
        %2537 = vmatprep.subr.bf16.mxu0 0
        %2538 = vmatpush1.bf16.msra.mxu0 0
        %2539 = vmatprep.subr.bf16.mxu0 0
        %2540 = vmatpush1.bf16.msra.mxu0 0
        %2541 = vmatprep.subr.bf16.mxu0 0
        %2542 = vmatpush1.bf16.msra.mxu0 0
        %2543 = vmatprep.subr.bf16.mxu0 0
        %2544 = vmatpush1.bf16.msra.mxu0 0
        %2545 = vmatprep.mubr.bf16.mxu0 0
        %2546 = vmatmul.mubr.bf16.gmra.mrb[0].mxu0 %v2508
        %v2547 = vpop.f32.mrb[0].mxu0
        %v2548 = vadd.f32 0.0, %v2547
        %v2549 = vpop.f32.mrb[0].mxu0
        %v2550 = vpop.f32.mrb[0].mxu0
        %v2551 = vpop.f32.mrb[0].mxu0
        %2552 = vdwg.mxu0
        %2554 = vrot.lane.b32.xlu0 %v2328, 8
        %v2555 = vpop.permute.xlu0 %2554
        %2558 = vrot.lane.b32.xlu0 %v2438, 16
        %v2559 = vpop.permute.xlu0 %2558
        %2562 = vrot.lane.b32.xlu0 %v2548, 24
        %v2563 = vpop.permute.xlu0 %2562
        %v2565 = vsel %vm748, %v2218, %v2555
        %v2566 = vsel %vm1199, %v2565, %v2559
        %v2567 = vsel %vm1201, %v2566, %v2563
        %v2568 = vpack.c.bf16 %v1657, %v1202
        %v2569 = vpack.c.bf16 %v2567, %v2112
        %v2570 = vld [vmem:[%s613] sm:$0xf]
        %v2571 = vld [vmem:[%s613 + $0x4] sm:$0xf]
        %v2572 = vld [vmem:[%s613 + $0x8] sm:$0xf]
        %v2573 = vld [vmem:[%s613 + $0xc] sm:$0xf]
        %v2574 = vld [vmem:[%s616] sm:$0x1]
        %v2576 = vlaneseq
        %v2577 = vshrl.u32 %v2576, 7
        %v2578 = vsub.s32 0, %v2577
        %v2579 = vrot.slane %v2574, %v2578
        %v2585 = vunpack.c.l.b16 %v2570
        %v2586 = vunpack.c.l.b16 %v2571
        %v2587 = vunpack.c.l.b16 %v2572
        %v2588 = vunpack.c.l.b16 %v2573
        %v2589 = vpack.c.b16 %v2586, %v2585
        %v2590 = vpack.c.b16 %v2588, %v2587
        %v2594 = vsel %vm688, %v2568, 0
        %v2597 = vsel %vm688, %v2569, 0
        %2599 = vmatprep.subr.bf16.mxu0 0
        %2600 = vmatpush1.bf16.msra.mxu0 %v2589
        %2601 = vmatprep.subr.bf16.mxu0 0
        %2602 = vmatpush1.bf16.msra.mxu0 %v2590
        %2603 = vmatprep.subr.bf16.mxu0 0
        %2604 = vmatpush1.bf16.msra.mxu0 0
        %2605 = vmatprep.subr.bf16.mxu0 0
        %2606 = vmatpush1.bf16.msra.mxu0 0
        %2607 = vmatprep.subr.bf16.mxu0 0
        %2608 = vmatpush1.bf16.msra.mxu0 0
        %2609 = vmatprep.subr.bf16.mxu0 0
        %2610 = vmatpush1.bf16.msra.mxu0 0
        %2611 = vmatprep.subr.bf16.mxu0 0
        %2612 = vmatpush1.bf16.msra.mxu0 0
        %2613 = vmatprep.subr.bf16.mxu0 0
        %2614 = vmatpush1.bf16.msra.mxu0 0
        %2615 = vmatprep.subr.bf16.mxu0 0
        %2616 = vmatpush1.bf16.msra.mxu0 0
        %2617 = vmatprep.subr.bf16.mxu0 0
        %2618 = vmatpush1.bf16.msra.mxu0 0
        %2619 = vmatprep.subr.bf16.mxu0 0
        %2620 = vmatpush1.bf16.msra.mxu0 0
        %2621 = vmatprep.subr.bf16.mxu0 0
        %2622 = vmatpush1.bf16.msra.mxu0 0
        %2623 = vmatprep.subr.bf16.mxu0 0
        %2624 = vmatpush1.bf16.msra.mxu0 0
        %2625 = vmatprep.subr.bf16.mxu0 0
        %2626 = vmatpush1.bf16.msra.mxu0 0
        %2627 = vmatprep.subr.bf16.mxu0 0
        %2628 = vmatpush1.bf16.msra.mxu0 0
        %2629 = vmatprep.subr.bf16.mxu0 0
        %2630 = vmatpush1.bf16.msra.mxu0 0
        %2631 = vmatprep.mubr.bf16.mxu0 0
        %2632 = vmatmul.mubr.bf16.gmra.mrb[0].mxu0 %v2594
        %v2633 = vpop.f32.mrb[0].mxu0
        %v2634 = vadd.f32 %v2579, %v2633
        %v2635 = vpop.f32.mrb[0].mxu0
        %v2636 = vpop.f32.mrb[0].mxu0
        %v2637 = vadd.f32 %v2579, %v2636
        %v2638 = vpop.f32.mrb[0].mxu0
        %2639 = vmatprep.mubr.bf16.mxu0 0
        %2640 = vmatmul.mubr.bf16.gmra.mrb[0].mxu0 %v2597
        %v2641 = vpop.f32.mrb[0].mxu0
        %v2642 = vadd.f32 %v2579, %v2641
        %v2643 = vpop.f32.mrb[0].mxu0
        %v2644 = vpop.f32.mrb[0].mxu0
        %v2645 = vadd.f32 %v2579, %v2644
        %v2646 = vpop.f32.mrb[0].mxu0
        %2647 = vdwg.mxu0
        %v2648 = vadd.f32 %v659, %v2634
        %v2649 = vadd.f32 %v660, %v2637
        %v2650 = vadd.f32 %v661, %v2642
        %v2651 = vadd.f32 %v662, %v2645
        %v2652 = vld [vmem:[%s635] sm:$0x1]
        %v2653 = vld [vmem:[%s638] sm:$0x1]
        %v2654 = vsel %vm688, %v2648, 0.0
        %2655 = vadd.xlane.f32.xlu0 %v2654
        %v2656 = vpop.xlane.xlu0 %2655
        %v2657 = vsel %vm688, %v2649, 0.0
        %2658 = vadd.xlane.f32.xlu0 %v2657
        %v2659 = vpop.xlane.xlu0 %2658
        %v2660 = vsel %vm688, %v2650, 0.0
        %2661 = vadd.xlane.f32.xlu0 %v2660
        %v2662 = vpop.xlane.xlu0 %2661
        %v2663 = vsel %vm688, %v2651, 0.0
        %2664 = vadd.xlane.f32.xlu0 %v2663
        %v2665 = vpop.xlane.xlu0 %2664
        %v2666 = vrcp.pop 32.0
        %v2667 = vmul.f32 %v2656, %v2666
        %v2668 = vmul.f32 %v2659, %v2666
        %v2669 = vmul.f32 %v2662, %v2666
        %v2670 = vmul.f32 %v2665, %v2666
        %v2671 = vmul.f32 %v2648, %v2648
        %v2672 = vmul.f32 %v2649, %v2649
        %v2673 = vmul.f32 %v2650, %v2650
        %v2674 = vmul.f32 %v2651, %v2651
        %v2675 = vsel %vm688, %v2671, 0.0
        %2676 = vadd.xlane.f32.xlu0 %v2675
        %v2677 = vpop.xlane.xlu0 %2676
        %v2678 = vsel %vm688, %v2672, 0.0
        %2679 = vadd.xlane.f32.xlu0 %v2678
        %v2680 = vpop.xlane.xlu0 %2679
        %v2681 = vsel %vm688, %v2673, 0.0
        %2682 = vadd.xlane.f32.xlu0 %v2681
        %v2683 = vpop.xlane.xlu0 %2682
        %v2684 = vsel %vm688, %v2674, 0.0
        %2685 = vadd.xlane.f32.xlu0 %v2684
        %v2686 = vpop.xlane.xlu0 %2685
        %v2687 = vmul.f32 %v2677, %v2666
        %v2688 = vmul.f32 %v2680, %v2666
        %v2689 = vmul.f32 %v2683, %v2666
        %v2690 = vmul.f32 %v2686, %v2666
        %v2691 = vmul.f32 %v2667, %v2667
        %v2692 = vmul.f32 %v2668, %v2668
        %v2693 = vmul.f32 %v2669, %v2669
        %v2694 = vmul.f32 %v2670, %v2670
        %v2695 = vsub.f32 %v2687, %v2691
        %v2696 = vsub.f32 %v2688, %v2692
        %v2697 = vsub.f32 %v2689, %v2693
        %v2698 = vsub.f32 %v2690, %v2694
        %v2699 = vsub.f32 %v2648, %v2667
        %v2700 = vsub.f32 %v2649, %v2668
        %v2701 = vsub.f32 %v2650, %v2669
        %v2702 = vsub.f32 %v2651, %v2670
        %v2703 = vadd.f32 %v2695, 1e-05
        %v2704 = vadd.f32 %v2696, 1e-05
        %v2705 = vadd.f32 %v2697, 1e-05
        %v2706 = vadd.f32 %v2698, 1e-05
        %v2707 = vrsqrt.pop %v2703
        %v2708 = vrsqrt.pop %v2704
        %v2709 = vrsqrt.pop %v2705
        %v2710 = vrsqrt.pop %v2706
        %v2711 = vmul.f32 %v2699, %v2707
        %v2712 = vmul.f32 %v2700, %v2708
        %v2713 = vmul.f32 %v2701, %v2709
        %v2714 = vmul.f32 %v2702, %v2710
        %v2716 = vlaneseq
        %v2717 = vshrl.u32 %v2716, 7
        %v2718 = vsub.s32 0, %v2717
        %v2719 = vrot.slane %v2652, %v2718
        %v2721 = vmul.f32 %v2711, %v2719
        %v2722 = vmul.f32 %v2712, %v2719
        %v2723 = vmul.f32 %v2713, %v2719
        %v2724 = vmul.f32 %v2714, %v2719
        %v2726 = vlaneseq
        %v2727 = vshrl.u32 %v2726, 7
        %v2728 = vsub.s32 0, %v2727
        %v2729 = vrot.slane %v2653, %v2728
        %v2731 = vadd.f32 %v2721, %v2729
        %v2732 = vadd.f32 %v2722, %v2729
        %v2733 = vadd.f32 %v2723, %v2729
        %v2734 = vadd.f32 %v2724, %v2729
        %v2735 = vpack.c.bf16 %v2732, %v2731
        %v2736 = vpack.c.bf16 %v2734, %v2733
        %v2737 = vld [vmem:[%s621] sm:$0xf]
        %v2738 = vld [vmem:[%s621 + $0x4] sm:$0xf]
        %v2739 = vld [vmem:[%s621 + $0x8] sm:$0xf]
        %v2740 = vld [vmem:[%s621 + $0xc] sm:$0xf]
        %v2741 = vld [vmem:[%s624] sm:$0x1]
        %v2743 = vlaneseq
        %v2744 = vshrl.u32 %v2743, 7
        %v2745 = vsub.s32 0, %v2744
        %v2746 = vrot.slane %v2741, %v2745
        %v2752 = vunpack.c.l.b16 %v2737
        %v2753 = vunpack.c.l.b16 %v2738
        %v2754 = vunpack.c.l.b16 %v2739
        %v2755 = vunpack.c.l.b16 %v2740
        %v2756 = vpack.c.b16 %v2753, %v2752
        %v2757 = vpack.c.b16 %v2755, %v2754
        %v2761 = vsel %vm688, %v2735, 0
        %v2764 = vsel %vm688, %v2736, 0
        %2766 = vmatprep.subr.bf16.mxu0 0
        %2767 = vmatpush1.bf16.msra.mxu0 %v2756
        %2768 = vmatprep.subr.bf16.mxu0 0
        %2769 = vmatpush1.bf16.msra.mxu0 %v2757
        %2770 = vmatprep.subr.bf16.mxu0 0
        %2771 = vmatpush1.bf16.msra.mxu0 0
        %2772 = vmatprep.subr.bf16.mxu0 0
        %2773 = vmatpush1.bf16.msra.mxu0 0
        %2774 = vmatprep.subr.bf16.mxu0 0
        %2775 = vmatpush1.bf16.msra.mxu0 0
        %2776 = vmatprep.subr.bf16.mxu0 0
        %2777 = vmatpush1.bf16.msra.mxu0 0
        %2778 = vmatprep.subr.bf16.mxu0 0
        %2779 = vmatpush1.bf16.msra.mxu0 0
        %2780 = vmatprep.subr.bf16.mxu0 0
        %2781 = vmatpush1.bf16.msra.mxu0 0
        %2782 = vmatprep.subr.bf16.mxu0 0
        %2783 = vmatpush1.bf16.msra.mxu0 0
        %2784 = vmatprep.subr.bf16.mxu0 0
        %2785 = vmatpush1.bf16.msra.mxu0 0
        %2786 = vmatprep.subr.bf16.mxu0 0
        %2787 = vmatpush1.bf16.msra.mxu0 0
        %2788 = vmatprep.subr.bf16.mxu0 0
        %2789 = vmatpush1.bf16.msra.mxu0 0
        %2790 = vmatprep.subr.bf16.mxu0 0
        %2791 = vmatpush1.bf16.msra.mxu0 0
        %2792 = vmatprep.subr.bf16.mxu0 0
        %2793 = vmatpush1.bf16.msra.mxu0 0
        %2794 = vmatprep.subr.bf16.mxu0 0
        %2795 = vmatpush1.bf16.msra.mxu0 0
        %2796 = vmatprep.subr.bf16.mxu0 0
        %2797 = vmatpush1.bf16.msra.mxu0 0
        %2798 = vmatprep.mubr.bf16.mxu0 0
        %2799 = vmatmul.mubr.bf16.gmra.mrb[0].mxu0 %v2761
        %v2800 = vpop.f32.mrb[0].mxu0
        %v2801 = vadd.f32 %v2746, %v2800
        %v2802 = vpop.f32.mrb[0].mxu0
        %v2803 = vpop.f32.mrb[0].mxu0
        %v2804 = vadd.f32 %v2746, %v2803
        %v2805 = vpop.f32.mrb[0].mxu0
        %2806 = vmatprep.mubr.bf16.mxu0 0
        %2807 = vmatmul.mubr.bf16.gmra.mrb[0].mxu0 %v2764
        %v2808 = vpop.f32.mrb[0].mxu0
        %v2809 = vadd.f32 %v2746, %v2808
        %v2810 = vpop.f32.mrb[0].mxu0
        %v2811 = vpop.f32.mrb[0].mxu0
        %v2812 = vadd.f32 %v2746, %v2811
        %v2813 = vpop.f32.mrb[0].mxu0
        %2814 = vdwg.mxu0
        %v2815 = vmax.f32 %v2801, 0.0
        %v2816 = vmax.f32 %v2804, 0.0
        %v2817 = vmax.f32 %v2809, 0.0
        %v2818 = vmax.f32 %v2812, 0.0
        %v2819 = vpack.c.bf16 %v2816, %v2815
        %v2820 = vpack.c.bf16 %v2818, %v2817
        %v2821 = vld [vmem:[%s629] sm:$0xf]
        %v2822 = vld [vmem:[%s629 + $0x4] sm:$0xf]
        %v2823 = vld [vmem:[%s629 + $0x8] sm:$0xf]
        %v2824 = vld [vmem:[%s629 + $0xc] sm:$0xf]
        %v2825 = vld [vmem:[%s629 + $0x10] sm:$0xf]
        %v2826 = vld [vmem:[%s629 + $0x14] sm:$0xf]
        %v2827 = vld [vmem:[%s629 + $0x18] sm:$0xf]
        %v2828 = vld [vmem:[%s629 + $0x1c] sm:$0xf]
        %v2829 = vld [vmem:[%s629 + $0x20] sm:$0xf]
        %v2830 = vld [vmem:[%s629 + $0x24] sm:$0xf]
        %v2831 = vld [vmem:[%s629 + $0x28] sm:$0xf]
        %v2832 = vld [vmem:[%s629 + $0x2c] sm:$0xf]
        %v2833 = vld [vmem:[%s629 + $0x30] sm:$0xf]
        %v2834 = vld [vmem:[%s629 + $0x34] sm:$0xf]
        %v2835 = vld [vmem:[%s629 + $0x38] sm:$0xf]
        %v2836 = vld [vmem:[%s629 + $0x3c] sm:$0xf]
        %v2837 = vld [vmem:[%s632] sm:$0x1]
        %v2839 = vlaneseq
        %v2840 = vshrl.u32 %v2839, 7
        %v2841 = vsub.s32 0, %v2840
        %v2842 = vrot.slane %v2837, %v2841
        %v2860 = vunpack.c.l.b16 %v2821
        %v2861 = vunpack.c.l.b16 %v2822
        %v2862 = vunpack.c.l.b16 %v2823
        %v2863 = vunpack.c.l.b16 %v2824
        %v2864 = vunpack.c.l.b16 %v2825
        %v2865 = vunpack.c.l.b16 %v2826
        %v2866 = vunpack.c.l.b16 %v2827
        %v2867 = vunpack.c.l.b16 %v2828
        %v2868 = vunpack.c.l.b16 %v2829
        %v2869 = vunpack.c.l.b16 %v2830
        %v2870 = vunpack.c.l.b16 %v2831
        %v2871 = vunpack.c.l.b16 %v2832
        %v2872 = vunpack.c.l.b16 %v2833
        %v2873 = vunpack.c.l.b16 %v2834
        %v2874 = vunpack.c.l.b16 %v2835
        %v2875 = vunpack.c.l.b16 %v2836
        %v2876 = vpack.c.b16 %v2861, %v2860
        %v2877 = vpack.c.b16 %v2863, %v2862
        %v2878 = vpack.c.b16 %v2865, %v2864
        %v2879 = vpack.c.b16 %v2867, %v2866
        %v2880 = vpack.c.b16 %v2869, %v2868
        %v2881 = vpack.c.b16 %v2871, %v2870
        %v2882 = vpack.c.b16 %v2873, %v2872
        %v2883 = vpack.c.b16 %v2875, %v2874
        %2892 = vmatprep.subr.bf16.mxu0 0
        %2893 = vmatpush1.bf16.msra.mxu0 %v2876
        %2894 = vmatprep.subr.bf16.mxu0 0
        %2895 = vmatpush1.bf16.msra.mxu0 %v2877
        %2896 = vmatprep.subr.bf16.mxu0 0
        %2897 = vmatpush1.bf16.msra.mxu0 %v2878
        %2898 = vmatprep.subr.bf16.mxu0 0
        %2899 = vmatpush1.bf16.msra.mxu0 %v2879
        %2900 = vmatprep.subr.bf16.mxu0 0
        %2901 = vmatpush1.bf16.msra.mxu0 %v2880
        %2902 = vmatprep.subr.bf16.mxu0 0
        %2903 = vmatpush1.bf16.msra.mxu0 %v2881
        %2904 = vmatprep.subr.bf16.mxu0 0
        %2905 = vmatpush1.bf16.msra.mxu0 %v2882
        %2906 = vmatprep.subr.bf16.mxu0 0
        %2907 = vmatpush1.bf16.msra.mxu0 %v2883
        %2908 = vmatprep.subr.bf16.mxu0 0
        %2909 = vmatpush1.bf16.msra.mxu0 0
        %2910 = vmatprep.subr.bf16.mxu0 0
        %2911 = vmatpush1.bf16.msra.mxu0 0
        %2912 = vmatprep.subr.bf16.mxu0 0
        %2913 = vmatpush1.bf16.msra.mxu0 0
        %2914 = vmatprep.subr.bf16.mxu0 0
        %2915 = vmatpush1.bf16.msra.mxu0 0
        %2916 = vmatprep.subr.bf16.mxu0 0
        %2917 = vmatpush1.bf16.msra.mxu0 0
        %2918 = vmatprep.subr.bf16.mxu0 0
        %2919 = vmatpush1.bf16.msra.mxu0 0
        %2920 = vmatprep.subr.bf16.mxu0 0
        %2921 = vmatpush1.bf16.msra.mxu0 0
        %2922 = vmatprep.subr.bf16.mxu0 0
        %2923 = vmatpush1.bf16.msra.mxu0 0
        %2924 = vmatprep.mubr.bf16.mxu0 0
        %2925 = vmatmul.mubr.bf16.gmra.mrb[0].mxu0 %v2819
        %v2926 = vpop.f32.mrb[0].mxu0
        %v2927 = vadd.f32 %v2842, %v2926
        %v2928 = vpop.f32.mrb[0].mxu0
        %v2929 = vpop.f32.mrb[0].mxu0
        %v2930 = vadd.f32 %v2842, %v2929
        %v2931 = vpop.f32.mrb[0].mxu0
        %2932 = vmatprep.mubr.bf16.mxu0 0
        %2933 = vmatmul.mubr.bf16.gmra.mrb[0].mxu0 %v2820
        %v2934 = vpop.f32.mrb[0].mxu0
        %v2935 = vadd.f32 %v2842, %v2934
        %v2936 = vpop.f32.mrb[0].mxu0
        %v2937 = vpop.f32.mrb[0].mxu0
        %v2938 = vadd.f32 %v2842, %v2937
        %v2939 = vpop.f32.mrb[0].mxu0
        %2940 = vdwg.mxu0
        %v2941 = vadd.f32 %v2731, %v2927
        %v2942 = vadd.f32 %v2732, %v2930
        %v2943 = vadd.f32 %v2733, %v2935
        %v2944 = vadd.f32 %v2734, %v2938
        %v2945 = vld [vmem:[%s641] sm:$0x1]
        %v2946 = vld [vmem:[%s644] sm:$0x1]
        %v2947 = vsel %vm688, %v2941, 0.0
        %2948 = vadd.xlane.f32.xlu0 %v2947
        %v2949 = vpop.xlane.xlu0 %2948
        %v2950 = vsel %vm688, %v2942, 0.0
        %2951 = vadd.xlane.f32.xlu0 %v2950
        %v2952 = vpop.xlane.xlu0 %2951
        %v2953 = vsel %vm688, %v2943, 0.0
        %2954 = vadd.xlane.f32.xlu0 %v2953
        %v2955 = vpop.xlane.xlu0 %2954
        %v2956 = vsel %vm688, %v2944, 0.0
        %2957 = vadd.xlane.f32.xlu0 %v2956
        %v2958 = vpop.xlane.xlu0 %2957
        %v2959 = vmul.f32 %v2949, %v2666
        %v2960 = vmul.f32 %v2952, %v2666
        %v2961 = vmul.f32 %v2955, %v2666
        %v2962 = vmul.f32 %v2958, %v2666
        %v2963 = vmul.f32 %v2941, %v2941
        %v2964 = vmul.f32 %v2942, %v2942
        %v2965 = vmul.f32 %v2943, %v2943
        %v2966 = vmul.f32 %v2944, %v2944
        %v2967 = vsel %vm688, %v2963, 0.0
        %2968 = vadd.xlane.f32.xlu0 %v2967
        %v2969 = vpop.xlane.xlu0 %2968
        %v2970 = vsel %vm688, %v2964, 0.0
        %2971 = vadd.xlane.f32.xlu0 %v2970
        %v2972 = vpop.xlane.xlu0 %2971
        %v2973 = vsel %vm688, %v2965, 0.0
        %2974 = vadd.xlane.f32.xlu0 %v2973
        %v2975 = vpop.xlane.xlu0 %2974
        %v2976 = vsel %vm688, %v2966, 0.0
        %2977 = vadd.xlane.f32.xlu0 %v2976
        %v2978 = vpop.xlane.xlu0 %2977
        %v2979 = vmul.f32 %v2969, %v2666
        %v2980 = vmul.f32 %v2972, %v2666
        %v2981 = vmul.f32 %v2975, %v2666
        %v2982 = vmul.f32 %v2978, %v2666
        %v2983 = vmul.f32 %v2959, %v2959
        %v2984 = vmul.f32 %v2960, %v2960
        %v2985 = vmul.f32 %v2961, %v2961
        %v2986 = vmul.f32 %v2962, %v2962
        %v2987 = vsub.f32 %v2979, %v2983
        %v2988 = vsub.f32 %v2980, %v2984
        %v2989 = vsub.f32 %v2981, %v2985
        %v2990 = vsub.f32 %v2982, %v2986
        %v2991 = vsub.f32 %v2941, %v2959
        %v2992 = vsub.f32 %v2942, %v2960
        %v2993 = vsub.f32 %v2943, %v2961
        %v2994 = vsub.f32 %v2944, %v2962
        %v2995 = vadd.f32 %v2987, 1e-05
        %v2996 = vadd.f32 %v2988, 1e-05
        %v2997 = vadd.f32 %v2989, 1e-05
        %v2998 = vadd.f32 %v2990, 1e-05
        %v2999 = vrsqrt.pop %v2995
        %v3000 = vrsqrt.pop %v2996
        %v3001 = vrsqrt.pop %v2997
        %v3002 = vrsqrt.pop %v2998
        %v3003 = vmul.f32 %v2991, %v2999
        %v3004 = vmul.f32 %v2992, %v3000
        %v3005 = vmul.f32 %v2993, %v3001
        %v3006 = vmul.f32 %v2994, %v3002
        %v3008 = vlaneseq
        %v3009 = vshrl.u32 %v3008, 7
        %v3010 = vsub.s32 0, %v3009
        %v3011 = vrot.slane %v2945, %v3010
        %v3013 = vmul.f32 %v3003, %v3011
        %v3014 = vmul.f32 %v3004, %v3011
        %v3015 = vmul.f32 %v3005, %v3011
        %v3016 = vmul.f32 %v3006, %v3011
        %v3018 = vlaneseq
        %v3019 = vshrl.u32 %v3018, 7
        %v3020 = vsub.s32 0, %v3019
        %v3021 = vrot.slane %v2946, %v3020
        %v3023 = vadd.f32 %v3013, %v3021
        %v3024 = vadd.f32 %v3014, %v3021
        %v3025 = vadd.f32 %v3015, %v3021
        %v3026 = vadd.f32 %v3016, %v3021
        %3027 = vst.msk [vmem:[#allocation2] sm:$0xff] %vm688, %v3023
        %3028 = vst.msk [vmem:[#allocation2 + $0x8] sm:$0xff] %vm688, %v3024
        %3029 = vst.msk [vmem:[#allocation2 + $0x10] sm:$0xff] %vm688, %v3025
        %3030 = vst.msk [vmem:[#allocation2 + $0x18] sm:$0xff] %vm688, %v3026
        %p3031 = scmp.eq.s32.totalorder %s32, 1
        // Predicated region
        $region77: #{base_encoder_forward.3} parent=71 // pred_check
          %p3032 = pneg %p3031
        $region78: #{base_encoder_forward.3} parent=71 // pred_check_branch
          %3034 = sbr.rel (%p3032) target = $region80
        $region79: #{base_encoder_forward.3} parent=71 // pred_region
          %v3036 = vrot.slane %v3024, 7
          %v3039 = vrot.slane %v3025, 6
          %v3042 = vrot.slane %v3026, 5
          %vm3044 = vcmask 1040384
          %v3045 = vsel %vm3044, %v3023, %v3036
          %vm3046 = vcmask 1041408
          %v3047 = vsel %vm3046, %v3045, %v3039
          %vm3048 = vcmask 1042432
          %v3049 = vsel %vm3048, %v3047, %v3042
          %vm3050 = vcmask 257024
          %3051 = vst.msk [vmem:[%s594] sm:$0xf] %vm3050, %v3049
        $region80: #{base_encoder_forward.3} parent=71 // pred_fallthru
          _
        %s3052 = sand.u32 %s385, 1
        %s3053 = scalar_lea.sflag [#allocation4], %s3052
        %s3054 = sand.u32 %s385, 1
        %s3055 = smul.addr %s3054, 4
        %s3056 = scalar_lea.vmem [#allocation3], %s3055
        // Predicated region
        $region81: #{base_encoder_forward.3} parent=71 // pred_check
          %p3057 = pneg %p395
        $region82: #{base_encoder_forward.3} parent=71 // pred_check_branch
          %3059 = sbr.rel (%p3057) target = $region84
        $region83: #{base_encoder_forward.3} parent=71 // pred_region
          %s3061 = ssub.s32 64, 64
          %3062 = vsyncadd %s3053, %s3061
          %s3063 = smul.addr %s31, 64
          %s3064 = scalar_lea.hbm %s13, %s3063
          %s3066 = sshll.u32 %s3056, 4
          %s3067 = int_to_ptr.vmem [resolvable:$true] %s3066
          %3069 = dma.vmem_to_hbm [thread:$0]  %s3067, 64, %s3064, %s3053
        $region84: #{base_encoder_forward.3} parent=71 // pred_fallthru
          _
      $region72: #{base_encoder_forward.3} parent=5 // pred_fallthru
        _
      %p3070 = scmp.le.s32.totalorder 2, %s22
      // Predicated region
      $region85: #{base_encoder_forward.3} parent=5 // pred_check
        %p3071 = pneg %p3070
      $region86: #{base_encoder_forward.3} parent=5 // pred_check_branch
        %3073 = sbr.rel (%p3071) target = $region88
      $region87: #{base_encoder_forward.3} parent=5 // pred_region
        %s3074 = ssub.s32 %s22, 2
        // Predicated region
        $region89: #{base_encoder_forward.3} parent=87 // pred_check
          %p3075 = pneg %p401
        $region90: #{base_encoder_forward.3} parent=87 // pred_check_branch
          %3077 = sbr.rel (%p3075) target = $region92
        $region91: #{base_encoder_forward.3} parent=87 // pred_region
          %s3078 = sand.u32 %s386, 1
          %s3079 = scalar_lea.sflag [#allocation4], %s3078
          %s3080 = sand.u32 %s386, 1
          %s3081 = smul.addr %s3080, 4
          %s3082 = scalar_lea.vmem [#allocation3], %s3081
          %3083 = dma.done %s3079, 64
        $region92: #{base_encoder_forward.3} parent=87 // pred_fallthru
          _
      $region88: #{base_encoder_forward.3} parent=5 // pred_fallthru
        _
    $region6: #{base_encoder_forward.3} parent=1 // loop_footer
      %s26 = sadd.s32 1, %s22
    $region7: #{base_encoder_forward.3} parent=1 // loop_footer_branch
      %21 = sbr.rel target = $region3
    $region8: #{base_encoder_forward.3} parent=1 // loop_exit
      _
    %3084 = vsyncpa [#allocation4], 1
    %s3085 = scalar_lea.sflag [#allocation4], 1
    %3086 = vsyncpa %s3085, 1

</llo_original>
